<compile_context>
chip_gen: v6e
topology: v6e:2x2x1
jax: 0.10.0
libtpu: 0.0.40
codegen_flags: <defaults>
</compile_context>

<pallas_src>
import functools

import jax
import jax.numpy as jnp
from jax.experimental import pallas as pl
from jax.experimental.pallas import tpu as pltpu


_VMEM_LIMIT = 48 * 1024 * 1024  # above the 32 MiB scoped default, below v7x's 64 MiB


# ---------------------------------------------------------------------------
# elementwise helpers (identical formulas used in kernels and reference)
# ---------------------------------------------------------------------------
def _sigmoid(x):
    return 1.0 / (1.0 + jnp.exp(-x))


def _silu(x):
    return x * _sigmoid(x)


def _softplus(x):
    return jnp.where(x > 20.0, x, jnp.log(1.0 + jnp.exp(jnp.minimum(x, 20.0))))


def _pick_row_tile(rows, target=256):
    """Biggest row tile (multiple of 8 dividing rows) <= target, preferring >= 2
    grid steps so both v7x TensorCores get work."""
    target = min(target, max(8, rows // 2)) if rows >= 16 else rows
    t = min(target, rows)
    t -= t % 8
    while t >= 8:
        if rows % t == 0:
            return t
        t -= 8
    return rows


# ---------------------------------------------------------------------------
# Kernel 1: LayerNorm1 + in_proj  (row-tiled over B*T)
# ---------------------------------------------------------------------------
def ln_matmul_kernel(x_ref, g_ref, b_ref, w_ref, o_ref):
    x = x_ref[...].astype(jnp.float32)
    mu = jnp.mean(x, axis=-1, keepdims=True)
    xc = x - mu
    var = jnp.mean(xc * xc, axis=-1, keepdims=True)
    xn = xc * jax.lax.rsqrt(var + 1e-5)
    xn = xn * g_ref[...].astype(jnp.float32) + b_ref[...].astype(jnp.float32)
    o_ref[...] = jnp.dot(xn.astype(w_ref.dtype), w_ref[...],
                         preferred_element_type=jnp.float32).astype(o_ref.dtype)


def layernorm_matmul(x2, gamma, beta, w, *, tm):
    rows, e = x2.shape
    n = w.shape[1]
    return pl.pallas_call(
        ln_matmul_kernel,
        out_shape=jax.ShapeDtypeStruct((rows, n), x2.dtype),
        grid_spec=pltpu.PrefetchScalarGridSpec(
            num_scalar_prefetch=0,
            grid=(rows // tm,),
            in_specs=[
                pl.BlockSpec((tm, e), lambda i: (i, 0)),
                pl.BlockSpec((1, e), lambda i: (0, 0)),
                pl.BlockSpec((1, e), lambda i: (0, 0)),
                # TODO(synk): for large E*N (v7x 64 MiB VMEM), tile the weight
                # over N instead of holding it resident.
                pl.BlockSpec((e, n), lambda i: (0, 0)),
            ],
            out_specs=pl.BlockSpec((tm, n), lambda i: (i, 0)),
        ),
        compiler_params=pltpu.CompilerParams(
            dimension_semantics=("parallel",),
            vmem_limit_bytes=_VMEM_LIMIT),
    )(x2, gamma.reshape(1, e), beta.reshape(1, e), w)


# ---------------------------------------------------------------------------
# Kernel 2: Mamba inner (conv1d + SiLU + x_proj + dt_proj + selective scan +
#           gate + out_proj), one batch element per grid step
# ---------------------------------------------------------------------------
def mamba_inner_kernel(xz_ref, convw_ref, convb_ref, xpw_ref, dtw_ref, dtb_ref,
                       alogT_ref, dvec_ref, outw_ref, o_ref,
                       *, seq_len, d_inner, d_state, d_conv, dt_rank):
    T, Di, S, R = seq_len, d_inner, d_state, dt_rank
    f32 = jnp.float32

    xz = xz_ref[...].astype(f32)                       # (T, 2*Di)
    x_in = xz[:, :Di]                                  # conv / SSM branch
    z = xz[:, Di:]                                     # gate branch

    # --- causal depthwise conv1d (+bias) then SiLU ---
    if d_conv > 1:
        x_pad = jnp.concatenate(
            [jnp.zeros((d_conv - 1, Di), f32), x_in], axis=0)   # (T+K-1, Di)
    else:
        x_pad = x_in
    u = jnp.zeros((T, Di), f32)
    for k in range(d_conv):                            # static unroll (K small)
        u = u + x_pad[k:k + T, :] * convw_ref[k:k + 1, :].astype(f32)
    u = u + convb_ref[...].astype(f32)
    u = _silu(u)

    # --- x_proj -> (dt, B, C) ---
    xdbl = jnp.dot(u.astype(xpw_ref.dtype), xpw_ref[...],
                   preferred_element_type=f32)         # (T, R + 2S)
    dt_in = xdbl[:, :R]                                # (T, R)
    BmT = jnp.transpose(xdbl[:, R:R + S])              # (S, T)
    CmT = jnp.transpose(xdbl[:, R + S:R + 2 * S])      # (S, T)

    # --- dt_proj (+bias) -> softplus ---
    delta = jnp.dot(dt_in.astype(dtw_ref.dtype), dtw_ref[...],
                    preferred_element_type=f32) + dtb_ref[...].astype(f32)
    delta = _softplus(delta)                           # (T, Di)
    du = delta * u                                     # (T, Di)

    A_T = -jnp.exp(alogT_ref[...].astype(f32))         # (S, Di)

    # --- sequential selective scan over time ---
    row_ids = jax.lax.broadcasted_iota(jnp.int32, (T, 1), 0)   # (T, 1)
    col_ids = jax.lax.broadcasted_iota(jnp.int32, (1, T), 1)   # (1, T)

    def scan_step(t, carry):
        h, y_acc = carry                               # (S, Di), (T, Di)
        oh_row = (row_ids == t).astype(f32)            # selects time-row t
        oh_col = (col_ids == t).astype(f32)            # selects time-column t
        d_t = jnp.sum(delta * oh_row, axis=0, keepdims=True)   # (1, Di)
        du_t = jnp.sum(du * oh_row, axis=0, keepdims=True)     # (1, Di)
        b_t = jnp.sum(BmT * oh_col, axis=1, keepdims=True)     # (S, 1)
        c_t = jnp.sum(CmT * oh_col, axis=1, keepdims=True)     # (S, 1)
        h = jnp.exp(d_t * A_T) * h + b_t * du_t                # (S, Di)
        y_t = jnp.sum(c_t * h, axis=0, keepdims=True)          # (1, Di)
        y_acc = y_acc + oh_row * y_t                           # (T, Di)
        return (h, y_acc)

    _, y = jax.lax.fori_loop(
        0, T, scan_step,
        (jnp.zeros((S, Di), f32), jnp.zeros((T, Di), f32)),
        unroll=(T <= 32))
    # TODO(synk): for long sequences, chunk the scan over a sequential time grid
    # axis carrying the (S, Di) state in VMEM scratch instead of one fori_loop.

    y = y + u * dvec_ref[...].astype(f32)              # + D * u
    y = y * _silu(z)                                   # gate

    o_ref[...] = jnp.dot(y.astype(outw_ref.dtype), outw_ref[...],
                         preferred_element_type=f32).astype(o_ref.dtype)


def mamba_inner(xz, conv_w, conv_b, xp_w, dt_w, dt_b, a_log, d_vec, out_w,
                *, d_state, d_conv, dt_rank):
    b, t, two_di = xz.shape
    di = two_di // 2
    e = out_w.shape[1]
    kernel = functools.partial(
        mamba_inner_kernel, seq_len=t, d_inner=di, d_state=d_state,
        d_conv=d_conv, dt_rank=dt_rank)
    return pl.pallas_call(
        kernel,
        out_shape=jax.ShapeDtypeStruct((b, t, e), xz.dtype),
        grid_spec=pltpu.PrefetchScalarGridSpec(
            num_scalar_prefetch=0,
            grid=(b,),
            in_specs=[
                pl.BlockSpec((None, t, two_di), lambda i: (i, 0, 0)),
                pl.BlockSpec((d_conv, di), lambda i: (0, 0)),
                pl.BlockSpec((1, di), lambda i: (0, 0)),
                pl.BlockSpec((di, dt_rank + 2 * d_state), lambda i: (0, 0)),
                pl.BlockSpec((dt_rank, di), lambda i: (0, 0)),
                pl.BlockSpec((1, di), lambda i: (0, 0)),
                pl.BlockSpec((d_state, di), lambda i: (0, 0)),
                pl.BlockSpec((1, di), lambda i: (0, 0)),
                pl.BlockSpec((di, e), lambda i: (0, 0)),
            ],
            out_specs=pl.BlockSpec((None, t, e), lambda i: (i, 0, 0)),
        ),
        compiler_params=pltpu.CompilerParams(
            dimension_semantics=("parallel",),
            vmem_limit_bytes=_VMEM_LIMIT),
    )(xz, conv_w, conv_b.reshape(1, di), xp_w, dt_w, dt_b.reshape(1, di),
      a_log.T, d_vec.reshape(1, di), out_w)


# ---------------------------------------------------------------------------
# Kernel 3: residual + LayerNorm2 + FFN (Linear->ReLU->Linear, p=0.0) + residual
# ---------------------------------------------------------------------------
def residual_ln_ffn_kernel(x_ref, m_ref, g_ref, b_ref, w1_ref, w2_ref, o_ref):
    x1 = x_ref[...].astype(jnp.float32) + m_ref[...].astype(jnp.float32)
    mu = jnp.mean(x1, axis=-1, keepdims=True)
    xc = x1 - mu
    var = jnp.mean(xc * xc, axis=-1, keepdims=True)
    xn = xc * jax.lax.rsqrt(var + 1e-5)
    xn = xn * g_ref[...].astype(jnp.float32) + b_ref[...].astype(jnp.float32)
    h = jnp.dot(xn.astype(w1_ref.dtype), w1_ref[...],
                preferred_element_type=jnp.float32)
    h = jnp.maximum(h, 0.0)
    ffn = jnp.dot(h.astype(w2_ref.dtype), w2_ref[...],
                  preferred_element_type=jnp.float32)
    # MambaBlock builds FeedForward(dropout_rate=0.0, ...) -> dropout is identity.
    o_ref[...] = (x1 + ffn).astype(o_ref.dtype)


def residual_ln_ffn(x2, m2, gamma, beta, w1, w2, *, tm):
    rows, e = x2.shape
    hidden = w1.shape[1]
    return pl.pallas_call(
        residual_ln_ffn_kernel,
        out_shape=jax.ShapeDtypeStruct((rows, e), x2.dtype),
        grid_spec=pltpu.PrefetchScalarGridSpec(
            num_scalar_prefetch=0,
            grid=(rows // tm,),
            in_specs=[
                pl.BlockSpec((tm, e), lambda i: (i, 0)),
                pl.BlockSpec((tm, e), lambda i: (i, 0)),
                pl.BlockSpec((1, e), lambda i: (0, 0)),
                pl.BlockSpec((1, e), lambda i: (0, 0)),
                # TODO(synk): at large E, tile the hidden dim (grid axis over H
                # with an f32 accumulator) to bound VMEM on v7x.
                pl.BlockSpec((e, hidden), lambda i: (0, 0)),
                pl.BlockSpec((hidden, e), lambda i: (0, 0)),
            ],
            out_specs=pl.BlockSpec((tm, e), lambda i: (i, 0)),
        ),
        compiler_params=pltpu.CompilerParams(
            dimension_semantics=("parallel",),
            vmem_limit_bytes=_VMEM_LIMIT),
    )(x2, m2, gamma.reshape(1, e), beta.reshape(1, e), w1, w2)


# ---------------------------------------------------------------------------
# Full MambaBlock forward
# ---------------------------------------------------------------------------
def mamba_block_forward(x, p, *, d_state, d_conv):
    b, t, e = x.shape
    dt_rank = (e + 15) // 16
    rows = b * t
    tm = _pick_row_tile(rows)

    x2 = x.reshape(rows, e)

    # x = x + mamba(LN1(x))
    xz = layernorm_matmul(x2, p["ln1_g"], p["ln1_b"], p["in_w"], tm=tm)
    xz = xz.reshape(b, t, 4 * e)                       # 2 * d_inner = 4 * e
    m_out = mamba_inner(xz, p["conv_w"], p["conv_b"], p["xp_w"], p["dt_w"],
                        p["dt_b"], p["a_log"], p["d_vec"], p["out_w"],
                        d_state=d_state, d_conv=d_conv, dt_rank=dt_rank)

    # x = x + FFN(LN2(x))
    out2 = residual_ln_ffn(x2, m_out.reshape(rows, e),
                           p["ln2_g"], p["ln2_b"], p["ffn_w1"], p["ffn_w2"],
                           tm=tm)
    return out2.reshape(b, t, e)


# ---------------------------------------------------------------------------
# Parameter init (layouts documented above) and pure-JAX reference
# ---------------------------------------------------------------------------
def init_params(key, e, d_state, d_conv):
    di = 2 * e
    dt_rank = (e + 15) // 16
    hidden = 4 * e
    ks = jax.random.split(key, 13)

    def lin(k, fan_in, shape):
        bound = float(fan_in) ** -0.5
        return jax.random.uniform(k, shape, jnp.float32, -bound, bound)

    return {
        "ln1_g": 1.0 + 0.1 * jax.random.normal(ks[0], (e,), jnp.float32),
        "ln1_b": 0.1 * jax.random.normal(ks[1], (e,), jnp.float32),
        "ln2_g": 1.0 + 0.1 * jax.random.normal(ks[2], (e,), jnp.float32),
        "ln2_b": 0.1 * jax.random.normal(ks[3], (e,), jnp.float32),
        "in_w": lin(ks[4], e, (e, 2 * di)),                     # in_proj (no bias)
        "conv_w": lin(ks[5], d_conv, (d_conv, di)),             # depthwise (k, ch)
        "conv_b": lin(ks[6], d_conv, (di,)),
        "xp_w": lin(ks[7], di, (di, dt_rank + 2 * d_state)),    # x_proj (no bias)
        "dt_w": lin(ks[8], dt_rank, (dt_rank, di)),             # dt_proj
        "dt_b": lin(ks[9], dt_rank, (di,)),
        "a_log": jnp.log(jnp.tile(
            jnp.arange(1, d_state + 1, dtype=jnp.float32)[None, :], (di, 1))),
        "d_vec": jnp.ones((di,), jnp.float32),
        "out_w": lin(ks[10], di, (di, e)),                      # out_proj (no bias)
        "ffn_w1": lin(ks[11], e, (e, hidden)),                  # FFN (no bias)
        "ffn_w2": lin(ks[12], hidden, (hidden, e)),
    }


def _layernorm_ref(v, g, b, eps=1e-5):
    mu = jnp.mean(v, axis=-1, keepdims=True)
    xc = v - mu
    var = jnp.mean(xc * xc, axis=-1, keepdims=True)
    return xc * jax.lax.rsqrt(var + eps) * g + b


def mamba_block_ref(x, p, *, d_state, d_conv):
    b, t, e = x.shape
    di = 2 * e
    r = (e + 15) // 16

    xn = _layernorm_ref(x, p["ln1_g"], p["ln1_b"])
    xz = xn @ p["in_w"]
    x_in, z = xz[..., :di], xz[..., di:]

    x_pad = jnp.pad(x_in, ((0, 0), (d_conv - 1, 0), (0, 0)))
    u = jnp.zeros_like(x_in)
    for k in range(d_conv):
        u = u + x_pad[:, k:k + t, :] * p["conv_w"][k]
    u = _silu(u + p["conv_b"])

    xdbl = u @ p["xp_w"]
    dt_in = xdbl[..., :r]
    bm = xdbl[..., r:r + d_state]
    cm = xdbl[..., r + d_state:]
    delta = _softplus(dt_in @ p["dt_w"] + p["dt_b"])   # (b, t, di)
    a = -jnp.exp(p["a_log"])                           # (di, s)

    def step(h, ins):
        d_t, u_t, b_t, c_t = ins
        h = jnp.exp(d_t[..., None] * a) * h + (d_t * u_t)[..., None] * b_t[:, None, :]
        return h, jnp.einsum("bds,bs->bd", h, c_t)

    h0 = jnp.zeros((b, di, d_state), jnp.float32)
    _, ys = jax.lax.scan(step, h0,
                         (jnp.swapaxes(delta, 0, 1), jnp.swapaxes(u, 0, 1),
                          jnp.swapaxes(bm, 0, 1), jnp.swapaxes(cm, 0, 1)))
    y = jnp.swapaxes(ys, 0, 1)
    y = (y + u * p["d_vec"]) * _silu(z)
    x1 = x + y @ p["out_w"]

    xn2 = _layernorm_ref(x1, p["ln2_g"], p["ln2_b"])
    ffn = jnp.maximum(xn2 @ p["ffn_w1"], 0.0) @ p["ffn_w2"]
    return x1 + ffn


if __name__ == "__main__":
    B, T, E = 2, 8, 128             # d_inner = 256, FFN hidden = 512 (lane-dense)
    D_STATE, D_CONV = 16, 4

    key = jax.random.PRNGKey(0)
    kx, kp = jax.random.split(key)
    x = jax.random.normal(kx, (B, T, E), jnp.float32)
    params = init_params(kp, E, D_STATE, D_CONV)

    fwd = jax.jit(functools.partial(mamba_block_forward,
                                    d_state=D_STATE, d_conv=D_CONV))
    y = jax.block_until_ready(fwd(x, params))

    ref = mamba_block_ref(x, params, d_state=D_STATE, d_conv=D_CONV)
    assert y.shape == x.shape
    assert jnp.allclose(y, ref, atol=1e-2, rtol=1e-2), \
        f"max abs err {float(jnp.max(jnp.abs(y - ref)))}"
    print("KERNEL_OK")
</pallas_src>

<mosaic_0001>
module attributes {stable_mosaic.version = 11 : i64} {
  func.func @residual_ln_ffn_kernel(%arg0: i32, %arg1: memref<8x128xf32, #tpu.memory_space<vmem>>, %arg2: memref<8x128xf32, #tpu.memory_space<vmem>>, %arg3: memref<1x128xf32, #tpu.memory_space<vmem>>, %arg4: memref<1x128xf32, #tpu.memory_space<vmem>>, %arg5: memref<128x512xf32, #tpu.memory_space<vmem>>, %arg6: memref<512x128xf32, #tpu.memory_space<vmem>>, %arg7: memref<8x128xf32, #tpu.memory_space<vmem>>) attributes {dimension_semantics = [#tpu.dimension_semantics<parallel>], iteration_bounds = array<i64: 2>, scalar_prefetch = 0 : i64, scratch_operands = 0 : i64, tpu.core_type = #tpu.core_type<tc>, window_params = [{transform_indices = @transform_0, window_bounds = array<i64: 8, 128>}, {transform_indices = @transform_1, window_bounds = array<i64: 8, 128>}, {pipeline_mode = #tpu.pipeline_mode<synchronous>, transform_indices = @transform_2, window_bounds = array<i64: 1, 128>}, {pipeline_mode = #tpu.pipeline_mode<synchronous>, transform_indices = @transform_3, window_bounds = array<i64: 1, 128>}, {pipeline_mode = #tpu.pipeline_mode<synchronous>, transform_indices = @transform_4, window_bounds = array<i64: 128, 512>}, {pipeline_mode = #tpu.pipeline_mode<synchronous>, transform_indices = @transform_5, window_bounds = array<i64: 512, 128>}, {transform_indices = @transform_6, window_bounds = array<i64: 8, 128>}]} {
    %c0 = arith.constant 0 : index
    %c0_0 = arith.constant 0 : index
    %0 = vector.load %arg1[%c0, %c0_0] : memref<8x128xf32, #tpu.memory_space<vmem>>, vector<8x128xf32>
    %c0_1 = arith.constant 0 : index
    %c0_2 = arith.constant 0 : index
    %1 = vector.load %arg2[%c0_1, %c0_2] : memref<8x128xf32, #tpu.memory_space<vmem>>, vector<8x128xf32>
    %2 = arith.addf %0, %1 : vector<8x128xf32>
    %cst = arith.constant dense<0.000000e+00> : vector<8xf32>
    %3 = vector.multi_reduction <add>, %2, %cst [1] : vector<8x128xf32> to vector<8xf32>
    %4 = vector.shape_cast %3 : vector<8xf32> to vector<8x1xf32>
    %cst_3 = arith.constant 1.280000e+02 : f32
    %5 = vector.broadcast %cst_3 : f32 to vector<8x1xf32>
    %6 = arith.divf %4, %5 : vector<8x1xf32>
    %7 = vector.broadcast %6 : vector<8x1xf32> to vector<8x128xf32>
    %8 = arith.subf %2, %7 : vector<8x128xf32>
    %9 = arith.mulf %8, %8 : vector<8x128xf32>
    %cst_4 = arith.constant dense<0.000000e+00> : vector<8xf32>
    %10 = vector.multi_reduction <add>, %9, %cst_4 [1] : vector<8x128xf32> to vector<8xf32>
    %11 = vector.shape_cast %10 : vector<8xf32> to vector<8x1xf32>
    %cst_5 = arith.constant 1.280000e+02 : f32
    %12 = vector.broadcast %cst_5 : f32 to vector<8x1xf32>
    %13 = arith.divf %11, %12 : vector<8x1xf32>
    %cst_6 = arith.constant 9.99999974E-6 : f32
    %14 = vector.broadcast %cst_6 : f32 to vector<8x1xf32>
    %15 = arith.addf %13, %14 : vector<8x1xf32>
    %16 = math.rsqrt %15 : vector<8x1xf32>
    %17 = vector.broadcast %16 : vector<8x1xf32> to vector<8x128xf32>
    %18 = arith.mulf %8, %17 : vector<8x128xf32>
    %c0_7 = arith.constant 0 : index
    %c0_8 = arith.constant 0 : index
    %19 = vector.load %arg3[%c0_7, %c0_8] : memref<1x128xf32, #tpu.memory_space<vmem>>, vector<1x128xf32>
    %20 = vector.broadcast %19 : vector<1x128xf32> to vector<8x128xf32>
    %21 = arith.mulf %18, %20 : vector<8x128xf32>
    %c0_9 = arith.constant 0 : index
    %c0_10 = arith.constant 0 : index
    %22 = vector.load %arg4[%c0_9, %c0_10] : memref<1x128xf32, #tpu.memory_space<vmem>>, vector<1x128xf32>
    %23 = vector.broadcast %22 : vector<1x128xf32> to vector<8x128xf32>
    %24 = arith.addf %21, %23 : vector<8x128xf32>
    %c0_11 = arith.constant 0 : index
    %c0_12 = arith.constant 0 : index
    %25 = vector.load %arg5[%c0_11, %c0_12] : memref<128x512xf32, #tpu.memory_space<vmem>>, vector<128x512xf32>
    %cst_13 = arith.constant dense<0.000000e+00> : vector<8x512xf32>
    %26 = tpu.matmul %24, %25, %cst_13 {dimension_numbers = #tpu.dot_dimension_numbers<[1], [0], [0], [1], [0, 0, 1, 1], [], []>} : vector<8x128xf32>, vector<128x512xf32>, vector<8x512xf32> -> vector<8x512xf32>
    %cst_14 = arith.constant 0.000000e+00 : f32
    %27 = vector.broadcast %cst_14 : f32 to vector<8x512xf32>
    %28 = arith.maximumf %26, %27 : vector<8x512xf32>
    %c0_15 = arith.constant 0 : index
    %c0_16 = arith.constant 0 : index
    %29 = vector.load %arg6[%c0_15, %c0_16] : memref<512x128xf32, #tpu.memory_space<vmem>>, vector<512x128xf32>
    %cst_17 = arith.constant dense<0.000000e+00> : vector<8x128xf32>
    %30 = tpu.matmul %28, %29, %cst_17 {dimension_numbers = #tpu.dot_dimension_numbers<[1], [0], [0], [1], [0, 0, 1, 1], [], []>} : vector<8x512xf32>, vector<512x128xf32>, vector<8x128xf32> -> vector<8x128xf32>
    %31 = arith.addf %2, %30 : vector<8x128xf32>
    %c0_18 = arith.constant 0 : index
    %c0_19 = arith.constant 0 : index
    %32 = vector.load %arg7[%c0_18, %c0_19] : memref<8x128xf32, #tpu.memory_space<vmem>>, vector<8x128xf32>
    tpu.vector_store %arg7[%c0_18, %c0_19], %31 {strides = array<i32>} : memref<8x128xf32, #tpu.memory_space<vmem>>, vector<8x128xf32>,
    return
  }
  func.func @transform_0(%arg0: i32) -> (i32, i32) {
    %c0_i32 = arith.constant 0 : i32
    %c0_i32_0 = arith.constant 0 : i32
    return %arg0, %c0_i32 : i32, i32
  }
  func.func @transform_1(%arg0: i32) -> (i32, i32) {
    %c0_i32 = arith.constant 0 : i32
    %c0_i32_0 = arith.constant 0 : i32
    return %arg0, %c0_i32 : i32, i32
  }
  func.func @transform_2(%arg0: i32) -> (i32, i32) {
    %c0_i32 = arith.constant 0 : i32
    %c0_i32_0 = arith.constant 0 : i32
    %c0_i32_1 = arith.constant 0 : i32
    return %c0_i32, %c0_i32_0 : i32, i32
  }
  func.func @transform_3(%arg0: i32) -> (i32, i32) {
    %c0_i32 = arith.constant 0 : i32
    %c0_i32_0 = arith.constant 0 : i32
    %c0_i32_1 = arith.constant 0 : i32
    return %c0_i32, %c0_i32_0 : i32, i32
  }
  func.func @transform_4(%arg0: i32) -> (i32, i32) {
    %c0_i32 = arith.constant 0 : i32
    %c0_i32_0 = arith.constant 0 : i32
    %c0_i32_1 = arith.constant 0 : i32
    return %c0_i32, %c0_i32_0 : i32, i32
  }
  func.func @transform_5(%arg0: i32) -> (i32, i32) {
    %c0_i32 = arith.constant 0 : i32
    %c0_i32_0 = arith.constant 0 : i32
    %c0_i32_1 = arith.constant 0 : i32
    return %c0_i32, %c0_i32_0 : i32, i32
  }
  func.func @transform_6(%arg0: i32) -> (i32, i32) {
    %c0_i32 = arith.constant 0 : i32
    %c0_i32_0 = arith.constant 0 : i32
    return %arg0, %c0_i32 : i32, i32
  }
}

module attributes {stable_mosaic.version = 11 : i64} {
  func.func @ln_matmul_kernel(%arg0: i32, %arg1: memref<8x128xf32, #tpu.memory_space<vmem>>, %arg2: memref<1x128xf32, #tpu.memory_space<vmem>>, %arg3: memref<1x128xf32, #tpu.memory_space<vmem>>, %arg4: memref<128x512xf32, #tpu.memory_space<vmem>>, %arg5: memref<8x512xf32, #tpu.memory_space<vmem>>) attributes {dimension_semantics = [#tpu.dimension_semantics<parallel>], iteration_bounds = array<i64: 2>, scalar_prefetch = 0 : i64, scratch_operands = 0 : i64, tpu.core_type = #tpu.core_type<tc>, window_params = [{transform_indices = @transform_0, window_bounds = array<i64: 8, 128>}, {pipeline_mode = #tpu.pipeline_mode<synchronous>, transform_indices = @transform_1, window_bounds = array<i64: 1, 128>}, {pipeline_mode = #tpu.pipeline_mode<synchronous>, transform_indices = @transform_2, window_bounds = array<i64: 1, 128>}, {pipeline_mode = #tpu.pipeline_mode<synchronous>, transform_indices = @transform_3, window_bounds = array<i64: 128, 512>}, {transform_indices = @transform_4, window_bounds = array<i64: 8, 512>}]} {
    %c0 = arith.constant 0 : index
    %c0_0 = arith.constant 0 : index
    %0 = vector.load %arg1[%c0, %c0_0] : memref<8x128xf32, #tpu.memory_space<vmem>>, vector<8x128xf32>
    %cst = arith.constant dense<0.000000e+00> : vector<8xf32>
    %1 = vector.multi_reduction <add>, %0, %cst [1] : vector<8x128xf32> to vector<8xf32>
    %2 = vector.shape_cast %1 : vector<8xf32> to vector<8x1xf32>
    %cst_1 = arith.constant 1.280000e+02 : f32
    %3 = vector.broadcast %cst_1 : f32 to vector<8x1xf32>
    %4 = arith.divf %2, %3 : vector<8x1xf32>
    %5 = vector.broadcast %4 : vector<8x1xf32> to vector<8x128xf32>
    %6 = arith.subf %0, %5 : vector<8x128xf32>
    %7 = arith.mulf %6, %6 : vector<8x128xf32>
    %cst_2 = arith.constant dense<0.000000e+00> : vector<8xf32>
    %8 = vector.multi_reduction <add>, %7, %cst_2 [1] : vector<8x128xf32> to vector<8xf32>
    %9 = vector.shape_cast %8 : vector<8xf32> to vector<8x1xf32>
    %cst_3 = arith.constant 1.280000e+02 : f32
    %10 = vector.broadcast %cst_3 : f32 to vector<8x1xf32>
    %11 = arith.divf %9, %10 : vector<8x1xf32>
    %cst_4 = arith.constant 9.99999974E-6 : f32
    %12 = vector.broadcast %cst_4 : f32 to vector<8x1xf32>
    %13 = arith.addf %11, %12 : vector<8x1xf32>
    %14 = math.rsqrt %13 : vector<8x1xf32>
    %15 = vector.broadcast %14 : vector<8x1xf32> to vector<8x128xf32>
    %16 = arith.mulf %6, %15 : vector<8x128xf32>
    %c0_5 = arith.constant 0 : index
    %c0_6 = arith.constant 0 : index
    %17 = vector.load %arg2[%c0_5, %c0_6] : memref<1x128xf32, #tpu.memory_space<vmem>>, vector<1x128xf32>
    %18 = vector.broadcast %17 : vector<1x128xf32> to vector<8x128xf32>
    %19 = arith.mulf %16, %18 : vector<8x128xf32>
    %c0_7 = arith.constant 0 : index
    %c0_8 = arith.constant 0 : index
    %20 = vector.load %arg3[%c0_7, %c0_8] : memref<1x128xf32, #tpu.memory_space<vmem>>, vector<1x128xf32>
    %21 = vector.broadcast %20 : vector<1x128xf32> to vector<8x128xf32>
    %22 = arith.addf %19, %21 : vector<8x128xf32>
    %c0_9 = arith.constant 0 : index
    %c0_10 = arith.constant 0 : index
    %23 = vector.load %arg4[%c0_9, %c0_10] : memref<128x512xf32, #tpu.memory_space<vmem>>, vector<128x512xf32>
    %cst_11 = arith.constant dense<0.000000e+00> : vector<8x512xf32>
    %24 = tpu.matmul %22, %23, %cst_11 {dimension_numbers = #tpu.dot_dimension_numbers<[1], [0], [0], [1], [0, 0, 1, 1], [], []>} : vector<8x128xf32>, vector<128x512xf32>, vector<8x512xf32> -> vector<8x512xf32>
    %c0_12 = arith.constant 0 : index
    %c0_13 = arith.constant 0 : index
    %25 = vector.load %arg5[%c0_12, %c0_13] : memref<8x512xf32, #tpu.memory_space<vmem>>, vector<8x512xf32>
    tpu.vector_store %arg5[%c0_12, %c0_13], %24 {strides = array<i32>} : memref<8x512xf32, #tpu.memory_space<vmem>>, vector<8x512xf32>,
    return
  }
  func.func @transform_0(%arg0: i32) -> (i32, i32) {
    %c0_i32 = arith.constant 0 : i32
    %c0_i32_0 = arith.constant 0 : i32
    return %arg0, %c0_i32 : i32, i32
  }
  func.func @transform_1(%arg0: i32) -> (i32, i32) {
    %c0_i32 = arith.constant 0 : i32
    %c0_i32_0 = arith.constant 0 : i32
    %c0_i32_1 = arith.constant 0 : i32
    return %c0_i32, %c0_i32_0 : i32, i32
  }
  func.func @transform_2(%arg0: i32) -> (i32, i32) {
    %c0_i32 = arith.constant 0 : i32
    %c0_i32_0 = arith.constant 0 : i32
    %c0_i32_1 = arith.constant 0 : i32
    return %c0_i32, %c0_i32_0 : i32, i32
  }
  func.func @transform_3(%arg0: i32) -> (i32, i32) {
    %c0_i32 = arith.constant 0 : i32
    %c0_i32_0 = arith.constant 0 : i32
    %c0_i32_1 = arith.constant 0 : i32
    return %c0_i32, %c0_i32_0 : i32, i32
  }
  func.func @transform_4(%arg0: i32) -> (i32, i32) {
    %c0_i32 = arith.constant 0 : i32
    %c0_i32_0 = arith.constant 0 : i32
    return %arg0, %c0_i32 : i32, i32
  }
}

module attributes {stable_mosaic.version = 11 : i64} {
  func.func @mamba_inner_kernel(%arg0: i32, %arg1: memref<1x8x512xf32, #tpu.memory_space<vmem>>, %arg2: memref<4x256xf32, #tpu.memory_space<vmem>>, %arg3: memref<1x256xf32, #tpu.memory_space<vmem>>, %arg4: memref<256x40xf32, #tpu.memory_space<vmem>>, %arg5: memref<8x256xf32, #tpu.memory_space<vmem>>, %arg6: memref<1x256xf32, #tpu.memory_space<vmem>>, %arg7: memref<16x256xf32, #tpu.memory_space<vmem>>, %arg8: memref<1x256xf32, #tpu.memory_space<vmem>>, %arg9: memref<256x128xf32, #tpu.memory_space<vmem>>, %arg10: memref<1x8x128xf32, #tpu.memory_space<vmem>>) attributes {dimension_semantics = [#tpu.dimension_semantics<parallel>], iteration_bounds = array<i64: 2>, scalar_prefetch = 0 : i64, scratch_operands = 0 : i64, tpu.core_type = #tpu.core_type<tc>, window_params = [{transform_indices = @transform_0, window_bounds = array<i64: 1, 8, 512>}, {pipeline_mode = #tpu.pipeline_mode<synchronous>, transform_indices = @transform_1, window_bounds = array<i64: 4, 256>}, {pipeline_mode = #tpu.pipeline_mode<synchronous>, transform_indices = @transform_2, window_bounds = array<i64: 1, 256>}, {pipeline_mode = #tpu.pipeline_mode<synchronous>, transform_indices = @transform_3, window_bounds = array<i64: 256, 40>}, {pipeline_mode = #tpu.pipeline_mode<synchronous>, transform_indices = @transform_4, window_bounds = array<i64: 8, 256>}, {pipeline_mode = #tpu.pipeline_mode<synchronous>, transform_indices = @transform_5, window_bounds = array<i64: 1, 256>}, {pipeline_mode = #tpu.pipeline_mode<synchronous>, transform_indices = @transform_6, window_bounds = array<i64: 16, 256>}, {pipeline_mode = #tpu.pipeline_mode<synchronous>, transform_indices = @transform_7, window_bounds = array<i64: 1, 256>}, {pipeline_mode = #tpu.pipeline_mode<synchronous>, transform_indices = @transform_8, window_bounds = array<i64: 256, 128>}, {transform_indices = @transform_9, window_bounds = array<i64: 1, 8, 128>}]} {
    %c0 = arith.constant 0 : index
    %c0_0 = arith.constant 0 : index
    %c0_1 = arith.constant 0 : index
    %0 = vector.load %arg1[%c0, %c0_0, %c0_1] : memref<1x8x512xf32, #tpu.memory_space<vmem>>, vector<1x8x512xf32>
    %1 = vector.shape_cast %0 : vector<1x8x512xf32> to vector<8x512xf32>
    %2 = vector.extract_strided_slice %1 {offsets = [0, 0], sizes = [8, 256], strides = [1, 1]} : vector<8x512xf32> to vector<8x256xf32>
    %3 = vector.extract_strided_slice %1 {offsets = [0, 256], sizes = [8, 256], strides = [1, 1]} : vector<8x512xf32> to vector<8x256xf32>
    %cst = arith.constant 0.000000e+00 : f32
    %4 = vector.broadcast %cst : f32 to vector<3x256xf32>
    %5 = tpu.concatenate %4, %2 in 0 : vector<3x256xf32>, vector<8x256xf32> -> vector<11x256xf32>
    %cst_2 = arith.constant 0.000000e+00 : f32
    %6 = vector.broadcast %cst_2 : f32 to vector<8x256xf32>
    %7 = vector.extract_strided_slice %5 {offsets = [0, 0], sizes = [8, 256], strides = [1, 1]} : vector<11x256xf32> to vector<8x256xf32>
    %c0_3 = arith.constant 0 : index
    %c0_4 = arith.constant 0 : index
    %8 = vector.load %arg2[%c0_3, %c0_4] : memref<4x256xf32, #tpu.memory_space<vmem>>, vector<1x256xf32>
    %9 = vector.broadcast %8 : vector<1x256xf32> to vector<8x256xf32>
    %10 = arith.mulf %7, %9 : vector<8x256xf32>
    %11 = arith.addf %6, %10 : vector<8x256xf32>
    %12 = vector.extract_strided_slice %5 {offsets = [1, 0], sizes = [8, 256], strides = [1, 1]} : vector<11x256xf32> to vector<8x256xf32>
    %c1 = arith.constant 1 : index
    %c0_5 = arith.constant 0 : index
    %13 = vector.load %arg2[%c1, %c0_5] : memref<4x256xf32, #tpu.memory_space<vmem>>, vector<1x256xf32>
    %14 = vector.broadcast %13 : vector<1x256xf32> to vector<8x256xf32>
    %15 = arith.mulf %12, %14 : vector<8x256xf32>
    %16 = arith.addf %11, %15 : vector<8x256xf32>
    %17 = vector.extract_strided_slice %5 {offsets = [2, 0], sizes = [8, 256], strides = [1, 1]} : vector<11x256xf32> to vector<8x256xf32>
    %c2 = arith.constant 2 : index
    %c0_6 = arith.constant 0 : index
    %18 = vector.load %arg2[%c2, %c0_6] : memref<4x256xf32, #tpu.memory_space<vmem>>, vector<1x256xf32>
    %19 = vector.broadcast %18 : vector<1x256xf32> to vector<8x256xf32>
    %20 = arith.mulf %17, %19 : vector<8x256xf32>
    %21 = arith.addf %16, %20 : vector<8x256xf32>
    %22 = vector.extract_strided_slice %5 {offsets = [3, 0], sizes = [8, 256], strides = [1, 1]} : vector<11x256xf32> to vector<8x256xf32>
    %c3 = arith.constant 3 : index
    %c0_7 = arith.constant 0 : index
    %23 = vector.load %arg2[%c3, %c0_7] : memref<4x256xf32, #tpu.memory_space<vmem>>, vector<1x256xf32>
    %24 = vector.broadcast %23 : vector<1x256xf32> to vector<8x256xf32>
    %25 = arith.mulf %22, %24 : vector<8x256xf32>
    %26 = arith.addf %21, %25 : vector<8x256xf32>
    %c0_8 = arith.constant 0 : index
    %c0_9 = arith.constant 0 : index
    %27 = vector.load %arg3[%c0_8, %c0_9] : memref<1x256xf32, #tpu.memory_space<vmem>>, vector<1x256xf32>
    %28 = vector.broadcast %27 : vector<1x256xf32> to vector<8x256xf32>
    %29 = arith.addf %26, %28 : vector<8x256xf32>
    %cst_10 = arith.constant 0.000000e+00 : f32
    %30 = vector.broadcast %cst_10 : f32 to vector<8x256xf32>
    %31 = arith.subf %30, %29 : vector<8x256xf32>
    %32 = math.exp %31 : vector<8x256xf32>
    %cst_11 = arith.constant 1.000000e+00 : f32
    %33 = vector.broadcast %cst_11 : f32 to vector<8x256xf32>
    %34 = arith.addf %33, %32 : vector<8x256xf32>
    %cst_12 = arith.constant 1.000000e+00 : f32
    %35 = vector.broadcast %cst_12 : f32 to vector<8x256xf32>
    %36 = arith.divf %35, %34 : vector<8x256xf32>
    %37 = arith.mulf %29, %36 : vector<8x256xf32>
    %c0_13 = arith.constant 0 : index
    %c0_14 = arith.constant 0 : index
    %38 = vector.load %arg4[%c0_13, %c0_14] : memref<256x40xf32, #tpu.memory_space<vmem>>, vector<256x40xf32>
    %cst_15 = arith.constant dense<0.000000e+00> : vector<8x40xf32>
    %39 = tpu.matmul %37, %38, %cst_15 {dimension_numbers = #tpu.dot_dimension_numbers<[1], [0], [0], [1], [0, 0, 1, 1], [], []>} : vector<8x256xf32>, vector<256x40xf32>, vector<8x40xf32> -> vector<8x40xf32>
    %40 = vector.extract_strided_slice %39 {offsets = [0, 0], sizes = [8, 8], strides = [1, 1]} : vector<8x40xf32> to vector<8x8xf32>
    %41 = vector.extract_strided_slice %39 {offsets = [0, 8], sizes = [8, 16], strides = [1, 1]} : vector<8x40xf32> to vector<8x16xf32>
    %42 = tpu.transpose %41, [1, 0] : vector<8x16xf32> -> vector<16x8xf32>
    %43 = vector.extract_strided_slice %39 {offsets = [0, 24], sizes = [8, 16], strides = [1, 1]} : vector<8x40xf32> to vector<8x16xf32>
    %44 = tpu.transpose %43, [1, 0] : vector<8x16xf32> -> vector<16x8xf32>
    %c0_16 = arith.constant 0 : index
    %c0_17 = arith.constant 0 : index
    %45 = vector.load %arg5[%c0_16, %c0_17] : memref<8x256xf32, #tpu.memory_space<vmem>>, vector<8x256xf32>
    %cst_18 = arith.constant dense<0.000000e+00> : vector<8x256xf32>
    %46 = tpu.matmul %40, %45, %cst_18 {dimension_numbers = #tpu.dot_dimension_numbers<[1], [0], [0], [1], [0, 0, 1, 1], [], []>} : vector<8x8xf32>, vector<8x256xf32>, vector<8x256xf32> -> vector<8x256xf32>
    %c0_19 = arith.constant 0 : index
    %c0_20 = arith.constant 0 : index
    %47 = vector.load %arg6[%c0_19, %c0_20] : memref<1x256xf32, #tpu.memory_space<vmem>>, vector<1x256xf32>
    %48 = vector.broadcast %47 : vector<1x256xf32> to vector<8x256xf32>
    %49 = arith.addf %46, %48 : vector<8x256xf32>
    %cst_21 = arith.constant 2.000000e+01 : f32
    %50 = vector.broadcast %cst_21 : f32 to vector<8x256xf32>
    %51 = arith.cmpf ogt, %49, %50 : vector<8x256xf32>
    %cst_22 = arith.constant 2.000000e+01 : f32
    %52 = vector.broadcast %cst_22 : f32 to vector<8x256xf32>
    %53 = arith.minimumf %49, %52 : vector<8x256xf32>
    %54 = math.exp %53 : vector<8x256xf32>
    %cst_23 = arith.constant 1.000000e+00 : f32
    %55 = vector.broadcast %cst_23 : f32 to vector<8x256xf32>
    %56 = arith.addf %55, %54 : vector<8x256xf32>
    %57 = math.log %56 : vector<8x256xf32>
    %58 = arith.select %51, %49, %57 : vector<8x256xi1>, vector<8x256xf32>
    %59 = arith.mulf %58, %37 : vector<8x256xf32>
    %c0_24 = arith.constant 0 : index
    %c0_25 = arith.constant 0 : index
    %60 = vector.load %arg7[%c0_24, %c0_25] : memref<16x256xf32, #tpu.memory_space<vmem>>, vector<16x256xf32>
    %61 = math.exp %60 : vector<16x256xf32>
    %cst_26 = arith.constant 0.000000e+00 : f32
    %62 = vector.broadcast %cst_26 : f32 to vector<16x256xf32>
    %63 = arith.subf %62, %61 : vector<16x256xf32>
    %64 = tpu.iota {dimensions = array<i32: 0>} : vector<8x1xi32>
    %65 = tpu.iota {dimensions = array<i32: 1>} : vector<1x8xi32>
    %cst_27 = arith.constant 0.000000e+00 : f32
    %66 = vector.broadcast %cst_27 : f32 to vector<16x256xf32>
    %cst_28 = arith.constant 0.000000e+00 : f32
    %67 = vector.broadcast %cst_28 : f32 to vector<8x256xf32>
    %c0_i32 = arith.constant 0 : i32
    %68 = vector.broadcast %c0_i32 : i32 to vector<8x1xi32>
    %69 = arith.cmpi eq, %64, %68 : vector<8x1xi32>
    %70 = arith.extui %69 : vector<8x1xi1> to vector<8x1xi32>
    %71 = arith.sitofp %70 : vector<8x1xi32> to vector<8x1xf32>
    %72 = vector.broadcast %c0_i32 : i32 to vector<1x8xi32>
    %73 = arith.cmpi eq, %65, %72 : vector<1x8xi32>
    %74 = arith.extui %73 : vector<1x8xi1> to vector<1x8xi32>
    %75 = arith.sitofp %74 : vector<1x8xi32> to vector<1x8xf32>
    %76 = vector.broadcast %71 : vector<8x1xf32> to vector<8x256xf32>
    %77 = arith.mulf %58, %76 : vector<8x256xf32>
    %cst_29 = arith.constant dense<0.000000e+00> : vector<256xf32>
    %78 = vector.multi_reduction <add>, %77, %cst_29 [0] : vector<8x256xf32> to vector<256xf32>
    %79 = vector.shape_cast %78 : vector<256xf32> to vector<1x256xf32>
    %80 = vector.broadcast %71 : vector<8x1xf32> to vector<8x256xf32>
    %81 = arith.mulf %59, %80 : vector<8x256xf32>
    %cst_30 = arith.constant dense<0.000000e+00> : vector<256xf32>
    %82 = vector.multi_reduction <add>, %81, %cst_30 [0] : vector<8x256xf32> to vector<256xf32>
    %83 = vector.shape_cast %82 : vector<256xf32> to vector<1x256xf32>
    %84 = vector.broadcast %75 : vector<1x8xf32> to vector<16x8xf32>
    %85 = arith.mulf %42, %84 : vector<16x8xf32>
    %cst_31 = arith.constant dense<0.000000e+00> : vector<16xf32>
    %86 = vector.multi_reduction <add>, %85, %cst_31 [1] : vector<16x8xf32> to vector<16xf32>
    %87 = vector.shape_cast %86 : vector<16xf32> to vector<16x1xf32>
    %88 = vector.broadcast %75 : vector<1x8xf32> to vector<16x8xf32>
    %89 = arith.mulf %44, %88 : vector<16x8xf32>
    %cst_32 = arith.constant dense<0.000000e+00> : vector<16xf32>
    %90 = vector.multi_reduction <add>, %89, %cst_32 [1] : vector<16x8xf32> to vector<16xf32>
    %91 = vector.shape_cast %90 : vector<16xf32> to vector<16x1xf32>
    %92 = vector.broadcast %79 : vector<1x256xf32> to vector<16x256xf32>
    %93 = arith.mulf %92, %63 : vector<16x256xf32>
    %94 = math.exp %93 : vector<16x256xf32>
    %95 = arith.mulf %94, %66 : vector<16x256xf32>
    %96 = vector.broadcast %87 : vector<16x1xf32> to vector<16x256xf32>
    %97 = vector.broadcast %83 : vector<1x256xf32> to vector<16x256xf32>
    %98 = arith.mulf %96, %97 : vector<16x256xf32>
    %99 = arith.addf %95, %98 : vector<16x256xf32>
    %100 = vector.broadcast %91 : vector<16x1xf32> to vector<16x256xf32>
    %101 = arith.mulf %100, %99 : vector<16x256xf32>
    %cst_33 = arith.constant dense<0.000000e+00> : vector<256xf32>
    %102 = vector.multi_reduction <add>, %101, %cst_33 [0] : vector<16x256xf32> to vector<256xf32>
    %103 = vector.shape_cast %102 : vector<256xf32> to vector<1x256xf32>
    %104 = vector.broadcast %71 : vector<8x1xf32> to vector<8x256xf32>
    %105 = vector.broadcast %103 : vector<1x256xf32> to vector<8x256xf32>
    %106 = arith.mulf %104, %105 : vector<8x256xf32>
    %107 = arith.addf %67, %106 : vector<8x256xf32>
    %c1_i32 = arith.constant 1 : i32
    %108 = vector.broadcast %c1_i32 : i32 to vector<8x1xi32>
    %109 = arith.cmpi eq, %64, %108 : vector<8x1xi32>
    %110 = arith.extui %109 : vector<8x1xi1> to vector<8x1xi32>
    %111 = arith.sitofp %110 : vector<8x1xi32> to vector<8x1xf32>
    %112 = vector.broadcast %c1_i32 : i32 to vector<1x8xi32>
    %113 = arith.cmpi eq, %65, %112 : vector<1x8xi32>
    %114 = arith.extui %113 : vector<1x8xi1> to vector<1x8xi32>
    %115 = arith.sitofp %114 : vector<1x8xi32> to vector<1x8xf32>
    %116 = vector.broadcast %111 : vector<8x1xf32> to vector<8x256xf32>
    %117 = arith.mulf %58, %116 : vector<8x256xf32>
    %cst_34 = arith.constant dense<0.000000e+00> : vector<256xf32>
    %118 = vector.multi_reduction <add>, %117, %cst_34 [0] : vector<8x256xf32> to vector<256xf32>
    %119 = vector.shape_cast %118 : vector<256xf32> to vector<1x256xf32>
    %120 = vector.broadcast %111 : vector<8x1xf32> to vector<8x256xf32>
    %121 = arith.mulf %59, %120 : vector<8x256xf32>
    %cst_35 = arith.constant dense<0.000000e+00> : vector<256xf32>
    %122 = vector.multi_reduction <add>, %121, %cst_35 [0] : vector<8x256xf32> to vector<256xf32>
    %123 = vector.shape_cast %122 : vector<256xf32> to vector<1x256xf32>
    %124 = vector.broadcast %115 : vector<1x8xf32> to vector<16x8xf32>
    %125 = arith.mulf %42, %124 : vector<16x8xf32>
    %cst_36 = arith.constant dense<0.000000e+00> : vector<16xf32>
    %126 = vector.multi_reduction <add>, %125, %cst_36 [1] : vector<16x8xf32> to vector<16xf32>
    %127 = vector.shape_cast %126 : vector<16xf32> to vector<16x1xf32>
    %128 = vector.broadcast %115 : vector<1x8xf32> to vector<16x8xf32>
    %129 = arith.mulf %44, %128 : vector<16x8xf32>
    %cst_37 = arith.constant dense<0.000000e+00> : vector<16xf32>
    %130 = vector.multi_reduction <add>, %129, %cst_37 [1] : vector<16x8xf32> to vector<16xf32>
    %131 = vector.shape_cast %130 : vector<16xf32> to vector<16x1xf32>
    %132 = vector.broadcast %119 : vector<1x256xf32> to vector<16x256xf32>
    %133 = arith.mulf %132, %63 : vector<16x256xf32>
    %134 = math.exp %133 : vector<16x256xf32>
    %135 = arith.mulf %134, %99 : vector<16x256xf32>
    %136 = vector.broadcast %127 : vector<16x1xf32> to vector<16x256xf32>
    %137 = vector.broadcast %123 : vector<1x256xf32> to vector<16x256xf32>
    %138 = arith.mulf %136, %137 : vector<16x256xf32>
    %139 = arith.addf %135, %138 : vector<16x256xf32>
    %140 = vector.broadcast %131 : vector<16x1xf32> to vector<16x256xf32>
    %141 = arith.mulf %140, %139 : vector<16x256xf32>
    %cst_38 = arith.constant dense<0.000000e+00> : vector<256xf32>
    %142 = vector.multi_reduction <add>, %141, %cst_38 [0] : vector<16x256xf32> to vector<256xf32>
    %143 = vector.shape_cast %142 : vector<256xf32> to vector<1x256xf32>
    %144 = vector.broadcast %111 : vector<8x1xf32> to vector<8x256xf32>
    %145 = vector.broadcast %143 : vector<1x256xf32> to vector<8x256xf32>
    %146 = arith.mulf %144, %145 : vector<8x256xf32>
    %147 = arith.addf %107, %146 : vector<8x256xf32>
    %c2_i32 = arith.constant 2 : i32
    %148 = vector.broadcast %c2_i32 : i32 to vector<8x1xi32>
    %149 = arith.cmpi eq, %64, %148 : vector<8x1xi32>
    %150 = arith.extui %149 : vector<8x1xi1> to vector<8x1xi32>
    %151 = arith.sitofp %150 : vector<8x1xi32> to vector<8x1xf32>
    %152 = vector.broadcast %c2_i32 : i32 to vector<1x8xi32>
    %153 = arith.cmpi eq, %65, %152 : vector<1x8xi32>
    %154 = arith.extui %153 : vector<1x8xi1> to vector<1x8xi32>
    %155 = arith.sitofp %154 : vector<1x8xi32> to vector<1x8xf32>
    %156 = vector.broadcast %151 : vector<8x1xf32> to vector<8x256xf32>
    %157 = arith.mulf %58, %156 : vector<8x256xf32>
    %cst_39 = arith.constant dense<0.000000e+00> : vector<256xf32>
    %158 = vector.multi_reduction <add>, %157, %cst_39 [0] : vector<8x256xf32> to vector<256xf32>
    %159 = vector.shape_cast %158 : vector<256xf32> to vector<1x256xf32>
    %160 = vector.broadcast %151 : vector<8x1xf32> to vector<8x256xf32>
    %161 = arith.mulf %59, %160 : vector<8x256xf32>
    %cst_40 = arith.constant dense<0.000000e+00> : vector<256xf32>
    %162 = vector.multi_reduction <add>, %161, %cst_40 [0] : vector<8x256xf32> to vector<256xf32>
    %163 = vector.shape_cast %162 : vector<256xf32> to vector<1x256xf32>
    %164 = vector.broadcast %155 : vector<1x8xf32> to vector<16x8xf32>
    %165 = arith.mulf %42, %164 : vector<16x8xf32>
    %cst_41 = arith.constant dense<0.000000e+00> : vector<16xf32>
    %166 = vector.multi_reduction <add>, %165, %cst_41 [1] : vector<16x8xf32> to vector<16xf32>
    %167 = vector.shape_cast %166 : vector<16xf32> to vector<16x1xf32>
    %168 = vector.broadcast %155 : vector<1x8xf32> to vector<16x8xf32>
    %169 = arith.mulf %44, %168 : vector<16x8xf32>
    %cst_42 = arith.constant dense<0.000000e+00> : vector<16xf32>
    %170 = vector.multi_reduction <add>, %169, %cst_42 [1] : vector<16x8xf32> to vector<16xf32>
    %171 = vector.shape_cast %170 : vector<16xf32> to vector<16x1xf32>
    %172 = vector.broadcast %159 : vector<1x256xf32> to vector<16x256xf32>
    %173 = arith.mulf %172, %63 : vector<16x256xf32>
    %174 = math.exp %173 : vector<16x256xf32>
    %175 = arith.mulf %174, %139 : vector<16x256xf32>
    %176 = vector.broadcast %167 : vector<16x1xf32> to vector<16x256xf32>
    %177 = vector.broadcast %163 : vector<1x256xf32> to vector<16x256xf32>
    %178 = arith.mulf %176, %177 : vector<16x256xf32>
    %179 = arith.addf %175, %178 : vector<16x256xf32>
    %180 = vector.broadcast %171 : vector<16x1xf32> to vector<16x256xf32>
    %181 = arith.mulf %180, %179 : vector<16x256xf32>
    %cst_43 = arith.constant dense<0.000000e+00> : vector<256xf32>
    %182 = vector.multi_reduction <add>, %181, %cst_43 [0] : vector<16x256xf32> to vector<256xf32>
    %183 = vector.shape_cast %182 : vector<256xf32> to vector<1x256xf32>
    %184 = vector.broadcast %151 : vector<8x1xf32> to vector<8x256xf32>
    %185 = vector.broadcast %183 : vector<1x256xf32> to vector<8x256xf32>
    %186 = arith.mulf %184, %185 : vector<8x256xf32>
    %187 = arith.addf %147, %186 : vector<8x256xf32>
    %c3_i32 = arith.constant 3 : i32
    %188 = vector.broadcast %c3_i32 : i32 to vector<8x1xi32>
    %189 = arith.cmpi eq, %64, %188 : vector<8x1xi32>
    %190 = arith.extui %189 : vector<8x1xi1> to vector<8x1xi32>
    %191 = arith.sitofp %190 : vector<8x1xi32> to vector<8x1xf32>
    %192 = vector.broadcast %c3_i32 : i32 to vector<1x8xi32>
    %193 = arith.cmpi eq, %65, %192 : vector<1x8xi32>
    %194 = arith.extui %193 : vector<1x8xi1> to vector<1x8xi32>
    %195 = arith.sitofp %194 : vector<1x8xi32> to vector<1x8xf32>
    %196 = vector.broadcast %191 : vector<8x1xf32> to vector<8x256xf32>
    %197 = arith.mulf %58, %196 : vector<8x256xf32>
    %cst_44 = arith.constant dense<0.000000e+00> : vector<256xf32>
    %198 = vector.multi_reduction <add>, %197, %cst_44 [0] : vector<8x256xf32> to vector<256xf32>
    %199 = vector.shape_cast %198 : vector<256xf32> to vector<1x256xf32>
    %200 = vector.broadcast %191 : vector<8x1xf32> to vector<8x256xf32>
    %201 = arith.mulf %59, %200 : vector<8x256xf32>
    %cst_45 = arith.constant dense<0.000000e+00> : vector<256xf32>
    %202 = vector.multi_reduction <add>, %201, %cst_45 [0] : vector<8x256xf32> to vector<256xf32>
    %203 = vector.shape_cast %202 : vector<256xf32> to vector<1x256xf32>
    %204 = vector.broadcast %195 : vector<1x8xf32> to vector<16x8xf32>
    %205 = arith.mulf %42, %204 : vector<16x8xf32>
    %cst_46 = arith.constant dense<0.000000e+00> : vector<16xf32>
    %206 = vector.multi_reduction <add>, %205, %cst_46 [1] : vector<16x8xf32> to vector<16xf32>
    %207 = vector.shape_cast %206 : vector<16xf32> to vector<16x1xf32>
    %208 = vector.broadcast %195 : vector<1x8xf32> to vector<16x8xf32>
    %209 = arith.mulf %44, %208 : vector<16x8xf32>
    %cst_47 = arith.constant dense<0.000000e+00> : vector<16xf32>
    %210 = vector.multi_reduction <add>, %209, %cst_47 [1] : vector<16x8xf32> to vector<16xf32>
    %211 = vector.shape_cast %210 : vector<16xf32> to vector<16x1xf32>
    %212 = vector.broadcast %199 : vector<1x256xf32> to vector<16x256xf32>
    %213 = arith.mulf %212, %63 : vector<16x256xf32>
    %214 = math.exp %213 : vector<16x256xf32>
    %215 = arith.mulf %214, %179 : vector<16x256xf32>
    %216 = vector.broadcast %207 : vector<16x1xf32> to vector<16x256xf32>
    %217 = vector.broadcast %203 : vector<1x256xf32> to vector<16x256xf32>
    %218 = arith.mulf %216, %217 : vector<16x256xf32>
    %219 = arith.addf %215, %218 : vector<16x256xf32>
    %220 = vector.broadcast %211 : vector<16x1xf32> to vector<16x256xf32>
    %221 = arith.mulf %220, %219 : vector<16x256xf32>
    %cst_48 = arith.constant dense<0.000000e+00> : vector<256xf32>
    %222 = vector.multi_reduction <add>, %221, %cst_48 [0] : vector<16x256xf32> to vector<256xf32>
    %223 = vector.shape_cast %222 : vector<256xf32> to vector<1x256xf32>
    %224 = vector.broadcast %191 : vector<8x1xf32> to vector<8x256xf32>
    %225 = vector.broadcast %223 : vector<1x256xf32> to vector<8x256xf32>
    %226 = arith.mulf %224, %225 : vector<8x256xf32>
    %227 = arith.addf %187, %226 : vector<8x256xf32>
    %c4_i32 = arith.constant 4 : i32
    %228 = vector.broadcast %c4_i32 : i32 to vector<8x1xi32>
    %229 = arith.cmpi eq, %64, %228 : vector<8x1xi32>
    %230 = arith.extui %229 : vector<8x1xi1> to vector<8x1xi32>
    %231 = arith.sitofp %230 : vector<8x1xi32> to vector<8x1xf32>
    %232 = vector.broadcast %c4_i32 : i32 to vector<1x8xi32>
    %233 = arith.cmpi eq, %65, %232 : vector<1x8xi32>
    %234 = arith.extui %233 : vector<1x8xi1> to vector<1x8xi32>
    %235 = arith.sitofp %234 : vector<1x8xi32> to vector<1x8xf32>
    %236 = vector.broadcast %231 : vector<8x1xf32> to vector<8x256xf32>
    %237 = arith.mulf %58, %236 : vector<8x256xf32>
    %cst_49 = arith.constant dense<0.000000e+00> : vector<256xf32>
    %238 = vector.multi_reduction <add>, %237, %cst_49 [0] : vector<8x256xf32> to vector<256xf32>
    %239 = vector.shape_cast %238 : vector<256xf32> to vector<1x256xf32>
    %240 = vector.broadcast %231 : vector<8x1xf32> to vector<8x256xf32>
    %241 = arith.mulf %59, %240 : vector<8x256xf32>
    %cst_50 = arith.constant dense<0.000000e+00> : vector<256xf32>
    %242 = vector.multi_reduction <add>, %241, %cst_50 [0] : vector<8x256xf32> to vector<256xf32>
    %243 = vector.shape_cast %242 : vector<256xf32> to vector<1x256xf32>
    %244 = vector.broadcast %235 : vector<1x8xf32> to vector<16x8xf32>
    %245 = arith.mulf %42, %244 : vector<16x8xf32>
    %cst_51 = arith.constant dense<0.000000e+00> : vector<16xf32>
    %246 = vector.multi_reduction <add>, %245, %cst_51 [1] : vector<16x8xf32> to vector<16xf32>
    %247 = vector.shape_cast %246 : vector<16xf32> to vector<16x1xf32>
    %248 = vector.broadcast %235 : vector<1x8xf32> to vector<16x8xf32>
    %249 = arith.mulf %44, %248 : vector<16x8xf32>
    %cst_52 = arith.constant dense<0.000000e+00> : vector<16xf32>
    %250 = vector.multi_reduction <add>, %249, %cst_52 [1] : vector<16x8xf32> to vector<16xf32>
    %251 = vector.shape_cast %250 : vector<16xf32> to vector<16x1xf32>
    %252 = vector.broadcast %239 : vector<1x256xf32> to vector<16x256xf32>
    %253 = arith.mulf %252, %63 : vector<16x256xf32>
    %254 = math.exp %253 : vector<16x256xf32>
    %255 = arith.mulf %254, %219 : vector<16x256xf32>
    %256 = vector.broadcast %247 : vector<16x1xf32> to vector<16x256xf32>
    %257 = vector.broadcast %243 : vector<1x256xf32> to vector<16x256xf32>
    %258 = arith.mulf %256, %257 : vector<16x256xf32>
    %259 = arith.addf %255, %258 : vector<16x256xf32>
    %260 = vector.broadcast %251 : vector<16x1xf32> to vector<16x256xf32>
    %261 = arith.mulf %260, %259 : vector<16x256xf32>
    %cst_53 = arith.constant dense<0.000000e+00> : vector<256xf32>
    %262 = vector.multi_reduction <add>, %261, %cst_53 [0] : vector<16x256xf32> to vector<256xf32>
    %263 = vector.shape_cast %262 : vector<256xf32> to vector<1x256xf32>
    %264 = vector.broadcast %231 : vector<8x1xf32> to vector<8x256xf32>
    %265 = vector.broadcast %263 : vector<1x256xf32> to vector<8x256xf32>
    %266 = arith.mulf %264, %265 : vector<8x256xf32>
    %267 = arith.addf %227, %266 : vector<8x256xf32>
    %c5_i32 = arith.constant 5 : i32
    %268 = vector.broadcast %c5_i32 : i32 to vector<8x1xi32>
    %269 = arith.cmpi eq, %64, %268 : vector<8x1xi32>
    %270 = arith.extui %269 : vector<8x1xi1> to vector<8x1xi32>
    %271 = arith.sitofp %270 : vector<8x1xi32> to vector<8x1xf32>
    %272 = vector.broadcast %c5_i32 : i32 to vector<1x8xi32>
    %273 = arith.cmpi eq, %65, %272 : vector<1x8xi32>
    %274 = arith.extui %273 : vector<1x8xi1> to vector<1x8xi32>
    %275 = arith.sitofp %274 : vector<1x8xi32> to vector<1x8xf32>
    %276 = vector.broadcast %271 : vector<8x1xf32> to vector<8x256xf32>
    %277 = arith.mulf %58, %276 : vector<8x256xf32>
    %cst_54 = arith.constant dense<0.000000e+00> : vector<256xf32>
    %278 = vector.multi_reduction <add>, %277, %cst_54 [0] : vector<8x256xf32> to vector<256xf32>
    %279 = vector.shape_cast %278 : vector<256xf32> to vector<1x256xf32>
    %280 = vector.broadcast %271 : vector<8x1xf32> to vector<8x256xf32>
    %281 = arith.mulf %59, %280 : vector<8x256xf32>
    %cst_55 = arith.constant dense<0.000000e+00> : vector<256xf32>
    %282 = vector.multi_reduction <add>, %281, %cst_55 [0] : vector<8x256xf32> to vector<256xf32>
    %283 = vector.shape_cast %282 : vector<256xf32> to vector<1x256xf32>
    %284 = vector.broadcast %275 : vector<1x8xf32> to vector<16x8xf32>
    %285 = arith.mulf %42, %284 : vector<16x8xf32>
    %cst_56 = arith.constant dense<0.000000e+00> : vector<16xf32>
    %286 = vector.multi_reduction <add>, %285, %cst_56 [1] : vector<16x8xf32> to vector<16xf32>
    %287 = vector.shape_cast %286 : vector<16xf32> to vector<16x1xf32>
    %288 = vector.broadcast %275 : vector<1x8xf32> to vector<16x8xf32>
    %289 = arith.mulf %44, %288 : vector<16x8xf32>
    %cst_57 = arith.constant dense<0.000000e+00> : vector<16xf32>
    %290 = vector.multi_reduction <add>, %289, %cst_57 [1] : vector<16x8xf32> to vector<16xf32>
    %291 = vector.shape_cast %290 : vector<16xf32> to vector<16x1xf32>
    %292 = vector.broadcast %279 : vector<1x256xf32> to vector<16x256xf32>
    %293 = arith.mulf %292, %63 : vector<16x256xf32>
    %294 = math.exp %293 : vector<16x256xf32>
    %295 = arith.mulf %294, %259 : vector<16x256xf32>
    %296 = vector.broadcast %287 : vector<16x1xf32> to vector<16x256xf32>
    %297 = vector.broadcast %283 : vector<1x256xf32> to vector<16x256xf32>
    %298 = arith.mulf %296, %297 : vector<16x256xf32>
    %299 = arith.addf %295, %298 : vector<16x256xf32>
    %300 = vector.broadcast %291 : vector<16x1xf32> to vector<16x256xf32>
    %301 = arith.mulf %300, %299 : vector<16x256xf32>
    %cst_58 = arith.constant dense<0.000000e+00> : vector<256xf32>
    %302 = vector.multi_reduction <add>, %301, %cst_58 [0] : vector<16x256xf32> to vector<256xf32>
    %303 = vector.shape_cast %302 : vector<256xf32> to vector<1x256xf32>
    %304 = vector.broadcast %271 : vector<8x1xf32> to vector<8x256xf32>
    %305 = vector.broadcast %303 : vector<1x256xf32> to vector<8x256xf32>
    %306 = arith.mulf %304, %305 : vector<8x256xf32>
    %307 = arith.addf %267, %306 : vector<8x256xf32>
    %c6_i32 = arith.constant 6 : i32
    %308 = vector.broadcast %c6_i32 : i32 to vector<8x1xi32>
    %309 = arith.cmpi eq, %64, %308 : vector<8x1xi32>
    %310 = arith.extui %309 : vector<8x1xi1> to vector<8x1xi32>
    %311 = arith.sitofp %310 : vector<8x1xi32> to vector<8x1xf32>
    %312 = vector.broadcast %c6_i32 : i32 to vector<1x8xi32>
    %313 = arith.cmpi eq, %65, %312 : vector<1x8xi32>
    %314 = arith.extui %313 : vector<1x8xi1> to vector<1x8xi32>
    %315 = arith.sitofp %314 : vector<1x8xi32> to vector<1x8xf32>
    %316 = vector.broadcast %311 : vector<8x1xf32> to vector<8x256xf32>
    %317 = arith.mulf %58, %316 : vector<8x256xf32>
    %cst_59 = arith.constant dense<0.000000e+00> : vector<256xf32>
    %318 = vector.multi_reduction <add>, %317, %cst_59 [0] : vector<8x256xf32> to vector<256xf32>
    %319 = vector.shape_cast %318 : vector<256xf32> to vector<1x256xf32>
    %320 = vector.broadcast %311 : vector<8x1xf32> to vector<8x256xf32>
    %321 = arith.mulf %59, %320 : vector<8x256xf32>
    %cst_60 = arith.constant dense<0.000000e+00> : vector<256xf32>
    %322 = vector.multi_reduction <add>, %321, %cst_60 [0] : vector<8x256xf32> to vector<256xf32>
    %323 = vector.shape_cast %322 : vector<256xf32> to vector<1x256xf32>
    %324 = vector.broadcast %315 : vector<1x8xf32> to vector<16x8xf32>
    %325 = arith.mulf %42, %324 : vector<16x8xf32>
    %cst_61 = arith.constant dense<0.000000e+00> : vector<16xf32>
    %326 = vector.multi_reduction <add>, %325, %cst_61 [1] : vector<16x8xf32> to vector<16xf32>
    %327 = vector.shape_cast %326 : vector<16xf32> to vector<16x1xf32>
    %328 = vector.broadcast %315 : vector<1x8xf32> to vector<16x8xf32>
    %329 = arith.mulf %44, %328 : vector<16x8xf32>
    %cst_62 = arith.constant dense<0.000000e+00> : vector<16xf32>
    %330 = vector.multi_reduction <add>, %329, %cst_62 [1] : vector<16x8xf32> to vector<16xf32>
    %331 = vector.shape_cast %330 : vector<16xf32> to vector<16x1xf32>
    %332 = vector.broadcast %319 : vector<1x256xf32> to vector<16x256xf32>
    %333 = arith.mulf %332, %63 : vector<16x256xf32>
    %334 = math.exp %333 : vector<16x256xf32>
    %335 = arith.mulf %334, %299 : vector<16x256xf32>
    %336 = vector.broadcast %327 : vector<16x1xf32> to vector<16x256xf32>
    %337 = vector.broadcast %323 : vector<1x256xf32> to vector<16x256xf32>
    %338 = arith.mulf %336, %337 : vector<16x256xf32>
    %339 = arith.addf %335, %338 : vector<16x256xf32>
    %340 = vector.broadcast %331 : vector<16x1xf32> to vector<16x256xf32>
    %341 = arith.mulf %340, %339 : vector<16x256xf32>
    %cst_63 = arith.constant dense<0.000000e+00> : vector<256xf32>
    %342 = vector.multi_reduction <add>, %341, %cst_63 [0] : vector<16x256xf32> to vector<256xf32>
    %343 = vector.shape_cast %342 : vector<256xf32> to vector<1x256xf32>
    %344 = vector.broadcast %311 : vector<8x1xf32> to vector<8x256xf32>
    %345 = vector.broadcast %343 : vector<1x256xf32> to vector<8x256xf32>
    %346 = arith.mulf %344, %345 : vector<8x256xf32>
    %347 = arith.addf %307, %346 : vector<8x256xf32>
    %c7_i32 = arith.constant 7 : i32
    %348 = vector.broadcast %c7_i32 : i32 to vector<8x1xi32>
    %349 = arith.cmpi eq, %64, %348 : vector<8x1xi32>
    %350 = arith.extui %349 : vector<8x1xi1> to vector<8x1xi32>
    %351 = arith.sitofp %350 : vector<8x1xi32> to vector<8x1xf32>
    %352 = vector.broadcast %c7_i32 : i32 to vector<1x8xi32>
    %353 = arith.cmpi eq, %65, %352 : vector<1x8xi32>
    %354 = arith.extui %353 : vector<1x8xi1> to vector<1x8xi32>
    %355 = arith.sitofp %354 : vector<1x8xi32> to vector<1x8xf32>
    %356 = vector.broadcast %351 : vector<8x1xf32> to vector<8x256xf32>
    %357 = arith.mulf %58, %356 : vector<8x256xf32>
    %cst_64 = arith.constant dense<0.000000e+00> : vector<256xf32>
    %358 = vector.multi_reduction <add>, %357, %cst_64 [0] : vector<8x256xf32> to vector<256xf32>
    %359 = vector.shape_cast %358 : vector<256xf32> to vector<1x256xf32>
    %360 = vector.broadcast %351 : vector<8x1xf32> to vector<8x256xf32>
    %361 = arith.mulf %59, %360 : vector<8x256xf32>
    %cst_65 = arith.constant dense<0.000000e+00> : vector<256xf32>
    %362 = vector.multi_reduction <add>, %361, %cst_65 [0] : vector<8x256xf32> to vector<256xf32>
    %363 = vector.shape_cast %362 : vector<256xf32> to vector<1x256xf32>
    %364 = vector.broadcast %355 : vector<1x8xf32> to vector<16x8xf32>
    %365 = arith.mulf %42, %364 : vector<16x8xf32>
    %cst_66 = arith.constant dense<0.000000e+00> : vector<16xf32>
    %366 = vector.multi_reduction <add>, %365, %cst_66 [1] : vector<16x8xf32> to vector<16xf32>
    %367 = vector.shape_cast %366 : vector<16xf32> to vector<16x1xf32>
    %368 = vector.broadcast %355 : vector<1x8xf32> to vector<16x8xf32>
    %369 = arith.mulf %44, %368 : vector<16x8xf32>
    %cst_67 = arith.constant dense<0.000000e+00> : vector<16xf32>
    %370 = vector.multi_reduction <add>, %369, %cst_67 [1] : vector<16x8xf32> to vector<16xf32>
    %371 = vector.shape_cast %370 : vector<16xf32> to vector<16x1xf32>
    %372 = vector.broadcast %359 : vector<1x256xf32> to vector<16x256xf32>
    %373 = arith.mulf %372, %63 : vector<16x256xf32>
    %374 = math.exp %373 : vector<16x256xf32>
    %375 = arith.mulf %374, %339 : vector<16x256xf32>
    %376 = vector.broadcast %367 : vector<16x1xf32> to vector<16x256xf32>
    %377 = vector.broadcast %363 : vector<1x256xf32> to vector<16x256xf32>
    %378 = arith.mulf %376, %377 : vector<16x256xf32>
    %379 = arith.addf %375, %378 : vector<16x256xf32>
    %380 = vector.broadcast %371 : vector<16x1xf32> to vector<16x256xf32>
    %381 = arith.mulf %380, %379 : vector<16x256xf32>
    %cst_68 = arith.constant dense<0.000000e+00> : vector<256xf32>
    %382 = vector.multi_reduction <add>, %381, %cst_68 [0] : vector<16x256xf32> to vector<256xf32>
    %383 = vector.shape_cast %382 : vector<256xf32> to vector<1x256xf32>
    %384 = vector.broadcast %351 : vector<8x1xf32> to vector<8x256xf32>
    %385 = vector.broadcast %383 : vector<1x256xf32> to vector<8x256xf32>
    %386 = arith.mulf %384, %385 : vector<8x256xf32>
    %387 = arith.addf %347, %386 : vector<8x256xf32>
    %c8_i32 = arith.constant 8 : i32
    %c0_69 = arith.constant 0 : index
    %c0_70 = arith.constant 0 : index
    %388 = vector.load %arg8[%c0_69, %c0_70] : memref<1x256xf32, #tpu.memory_space<vmem>>, vector<1x256xf32>
    %389 = vector.broadcast %388 : vector<1x256xf32> to vector<8x256xf32>
    %390 = arith.mulf %37, %389 : vector<8x256xf32>
    %391 = arith.addf %387, %390 : vector<8x256xf32>
    %cst_71 = arith.constant 0.000000e+00 : f32
    %392 = vector.broadcast %cst_71 : f32 to vector<8x256xf32>
    %393 = arith.subf %392, %3 : vector<8x256xf32>
    %394 = math.exp %393 : vector<8x256xf32>
    %cst_72 = arith.constant 1.000000e+00 : f32
    %395 = vector.broadcast %cst_72 : f32 to vector<8x256xf32>
    %396 = arith.addf %395, %394 : vector<8x256xf32>
    %cst_73 = arith.constant 1.000000e+00 : f32
    %397 = vector.broadcast %cst_73 : f32 to vector<8x256xf32>
    %398 = arith.divf %397, %396 : vector<8x256xf32>
    %399 = arith.mulf %3, %398 : vector<8x256xf32>
    %400 = arith.mulf %391, %399 : vector<8x256xf32>
    %c0_74 = arith.constant 0 : index
    %c0_75 = arith.constant 0 : index
    %401 = vector.load %arg9[%c0_74, %c0_75] : memref<256x128xf32, #tpu.memory_space<vmem>>, vector<256x128xf32>
    %cst_76 = arith.constant dense<0.000000e+00> : vector<8x128xf32>
    %402 = tpu.matmul %400, %401, %cst_76 {dimension_numbers = #tpu.dot_dimension_numbers<[1], [0], [0], [1], [0, 0, 1, 1], [], []>} : vector<8x256xf32>, vector<256x128xf32>, vector<8x128xf32> -> vector<8x128xf32>
    %c0_77 = arith.constant 0 : index
    %c0_78 = arith.constant 0 : index
    %c0_79 = arith.constant 0 : index
    %403 = vector.load %arg10[%c0_77, %c0_78, %c0_79] : memref<1x8x128xf32, #tpu.memory_space<vmem>>, vector<1x8x128xf32>
    %404 = vector.shape_cast %403 : vector<1x8x128xf32> to vector<8x128xf32>
    %405 = vector.shape_cast %402 : vector<8x128xf32> to vector<1x8x128xf32>
    tpu.vector_store %arg10[%c0_77, %c0_78, %c0_79], %405 {strides = array<i32>} : memref<1x8x128xf32, #tpu.memory_space<vmem>>, vector<1x8x128xf32>,
    return
  }
  func.func @transform_0(%arg0: i32) -> (i32, i32, i32) {
    %c0_i32 = arith.constant 0 : i32
    %c0_i32_0 = arith.constant 0 : i32
    %c0_i32_1 = arith.constant 0 : i32
    return %arg0, %c0_i32, %c0_i32_0 : i32, i32, i32
  }
  func.func @transform_1(%arg0: i32) -> (i32, i32) {
    %c0_i32 = arith.constant 0 : i32
    %c0_i32_0 = arith.constant 0 : i32
    %c0_i32_1 = arith.constant 0 : i32
    return %c0_i32, %c0_i32_0 : i32, i32
  }
  func.func @transform_2(%arg0: i32) -> (i32, i32) {
    %c0_i32 = arith.constant 0 : i32
    %c0_i32_0 = arith.constant 0 : i32
    %c0_i32_1 = arith.constant 0 : i32
    return %c0_i32, %c0_i32_0 : i32, i32
  }
  func.func @transform_3(%arg0: i32) -> (i32, i32) {
    %c0_i32 = arith.constant 0 : i32
    %c0_i32_0 = arith.constant 0 : i32
    %c0_i32_1 = arith.constant 0 : i32
    return %c0_i32, %c0_i32_0 : i32, i32
  }
  func.func @transform_4(%arg0: i32) -> (i32, i32) {
    %c0_i32 = arith.constant 0 : i32
    %c0_i32_0 = arith.constant 0 : i32
    %c0_i32_1 = arith.constant 0 : i32
    return %c0_i32, %c0_i32_0 : i32, i32
  }
  func.func @transform_5(%arg0: i32) -> (i32, i32) {
    %c0_i32 = arith.constant 0 : i32
    %c0_i32_0 = arith.constant 0 : i32
    %c0_i32_1 = arith.constant 0 : i32
    return %c0_i32, %c0_i32_0 : i32, i32
  }
  func.func @transform_6(%arg0: i32) -> (i32, i32) {
    %c0_i32 = arith.constant 0 : i32
    %c0_i32_0 = arith.constant 0 : i32
    %c0_i32_1 = arith.constant 0 : i32
    return %c0_i32, %c0_i32_0 : i32, i32
  }
  func.func @transform_7(%arg0: i32) -> (i32, i32) {
    %c0_i32 = arith.constant 0 : i32
    %c0_i32_0 = arith.constant 0 : i32
    %c0_i32_1 = arith.constant 0 : i32
    return %c0_i32, %c0_i32_0 : i32, i32
  }
  func.func @transform_8(%arg0: i32) -> (i32, i32) {
    %c0_i32 = arith.constant 0 : i32
    %c0_i32_0 = arith.constant 0 : i32
    %c0_i32_1 = arith.constant 0 : i32
    return %c0_i32, %c0_i32_0 : i32, i32
  }
  func.func @transform_9(%arg0: i32) -> (i32, i32, i32) {
    %c0_i32 = arith.constant 0 : i32
    %c0_i32_0 = arith.constant 0 : i32
    %c0_i32_1 = arith.constant 0 : i32
    return %arg0, %c0_i32, %c0_i32_0 : i32, i32, i32
  }
}

</mosaic_0001>

<llo_original>
// kernel: mamba_block_forward.3
$region0: #{mamba_block_forward.3}
  #allocation0 [shape = 'u32[]', space=smem, size = 0x4, offset = 0x4, fixed_abs, tag = 'smem constant byte address 0x4 - core index']
  #allocation1 [shape = 'u32[144,128]{1,0:T(1,128)}', space=vmem, size = 0x12000, scoped, tag = 'internal scratch']
  %s0 = inlined_call_operand.vmem [shape: f32[16,128], index: 0, kind: input, shape index: {}]
  %s1 = inlined_call_operand.vmem [shape: f32[1,128], index: 1, kind: input, shape index: {}]
  %s2 = inlined_call_operand.vmem [shape: f32[1,128], index: 2, kind: input, shape index: {}]
  %s3 = inlined_call_operand.hbm [shape: f32[128,512], index: 3, kind: input, shape index: {}]
  %s4 = inlined_call_operand.vmem [shape: f32[16,512], index: 4, kind: output, shape index: {}]
  %s5 = sld [smem:[#allocation0]]
  $region53: #{mamba_block_forward.3} parent=0
    _
  %s7 = ssub.s32 1, %s5
  %s8 = scalar_select 0, %s7, %s5
  $region1: #{mamba_block_forward.3} parent=0
    #allocation2 [shape = 'u8[262144]{0}', space=vmem, size = 0x40000, scoped, tag = 'input window, operand 3, single buffered']
    #allocation3 [shape = 's32[2]{0}', space=sflag, size = 0x8, scoped, tag = 'scoped memory for mamba_block_forward.3']
    %9 = vsyncpa [#allocation3], 0
    loop: start=0, step=1, limit=4
    $region2: #{mamba_block_forward.3} parent=1 // loop_pre_header
      _
    $region3: #{mamba_block_forward.3} parent=1 // loop_header
      %s11 = sphi 0, %s15
      %p12 = scmp.ge.s32.totalorder %s11, 4
      %s21 = sphi 0, %s23
      %s24 = sphi 0, %s21
      %s25 = sphi 0, %s24
      %s41 = sphi 0, %s25
      %s45 = sphi 0, %s45
      %s47 = sphi 0, %s45
      %s48 = sphi 0, %s47
      %s62 = sphi 0, %s48
      %s66 = sphi 0, %s66
      %s68 = sphi 0, %s66
      %s69 = sphi 0, %s68
      %s83 = sphi 0, %s69
      %s87 = sphi 0, %s87
      %s89 = sphi 0, %s87
      %s90 = sphi 0, %s89
      %s104 = sphi 0, %s90
      %s110 = sphi 0, %s112
      %s113 = sphi 0, %s110
      %s114 = sphi 0, %s113
      %s130 = sphi 0, %s114
    $region4: #{mamba_block_forward.3} parent=1 // loop_header_branch
      %14 = sbr.rel (%p12) target = $region8
    $region5: #{mamba_block_forward.3} parent=1 // loop_body
      %s16 = ssub.s32 %s11, 1
      %s17 = ssub.s32 %s11, 2
      %s18 = sadd.s32 %s11, 1
      %s19 = ssub.s32 %s11, %s18
      %p20 = scmp.eq.s32.totalorder %s19, 0
      %s22 = sadd.s32 %s21, 1
      %s23 = scalar_select %p20, %s21, %s22
      %p26 = pneg %p20
      %p27 = scmp.eq.s32.totalorder %s11, 1
      %p28 = por %p26, %p27
      %p29 = scmp.ne.s32.totalorder %s21, %s24
      %p30 = scmp.eq.s32.totalorder %s11, 0
      %p31 = por %p29, %p30
      %p32 = scmp.ne.s32.totalorder %s21, %s24
      %p33 = scmp.eq.s32.totalorder %s16, 1
      %p34 = por %p32, %p33
      %p35 = scmp.ne.s32.totalorder %s24, %s25
      %p36 = scmp.eq.s32.totalorder %s16, 0
      %p37 = por %p35, %p36
      %p38 = scmp.ne.s32.totalorder %s24, %s25
      %p39 = scmp.eq.s32.totalorder %s17, 1
      %p40 = por %p38, %p39
      %p42 = scmp.ne.s32.totalorder %s25, %s41
      %p43 = scmp.eq.s32.totalorder %s17, 0
      %p44 = por %p42, %p43
      %s46 = sadd.s32 %s45, 1
      %p49 = scmp.eq.s32.totalorder %s11, 1
      %p50 = scmp.ne.s32.totalorder %s45, %s47
      %p51 = scmp.eq.s32.totalorder %s11, 0
      %p52 = por %p50, %p51
      %p53 = scmp.ne.s32.totalorder %s45, %s47
      %p54 = scmp.eq.s32.totalorder %s16, 1
      %p55 = por %p53, %p54
      %p56 = scmp.ne.s32.totalorder %s47, %s48
      %p57 = scmp.eq.s32.totalorder %s16, 0
      %p58 = por %p56, %p57
      %p59 = scmp.ne.s32.totalorder %s47, %s48
      %p60 = scmp.eq.s32.totalorder %s17, 1
      %p61 = por %p59, %p60
      %p63 = scmp.ne.s32.totalorder %s48, %s62
      %p64 = scmp.eq.s32.totalorder %s17, 0
      %p65 = por %p63, %p64
      %s67 = sadd.s32 %s66, 1
      %p70 = scmp.eq.s32.totalorder %s11, 1
      %p71 = scmp.ne.s32.totalorder %s66, %s68
      %p72 = scmp.eq.s32.totalorder %s11, 0
      %p73 = por %p71, %p72
      %p74 = scmp.ne.s32.totalorder %s66, %s68
      %p75 = scmp.eq.s32.totalorder %s16, 1
      %p76 = por %p74, %p75
      %p77 = scmp.ne.s32.totalorder %s68, %s69
      %p78 = scmp.eq.s32.totalorder %s16, 0
      %p79 = por %p77, %p78
      %p80 = scmp.ne.s32.totalorder %s68, %s69
      %p81 = scmp.eq.s32.totalorder %s17, 1
      %p82 = por %p80, %p81
      %p84 = scmp.ne.s32.totalorder %s69, %s83
      %p85 = scmp.eq.s32.totalorder %s17, 0
      %p86 = por %p84, %p85
      %s88 = sadd.s32 %s87, 1
      %p91 = scmp.eq.s32.totalorder %s11, 1
      %p92 = scmp.ne.s32.totalorder %s87, %s89
      %p93 = scmp.eq.s32.totalorder %s11, 0
      %p94 = por %p92, %p93
      %p95 = scmp.ne.s32.totalorder %s87, %s89
      %p96 = scmp.eq.s32.totalorder %s16, 1
      %p97 = por %p95, %p96
      %p98 = scmp.ne.s32.totalorder %s89, %s90
      %p99 = scmp.eq.s32.totalorder %s16, 0
      %p100 = por %p98, %p99
      %p101 = scmp.ne.s32.totalorder %s89, %s90
      %p102 = scmp.eq.s32.totalorder %s17, 1
      %p103 = por %p101, %p102
      %p105 = scmp.ne.s32.totalorder %s90, %s104
      %p106 = scmp.eq.s32.totalorder %s17, 0
      %p107 = por %p105, %p106
      %s108 = ssub.s32 %s11, %s18
      %p109 = scmp.eq.s32.totalorder %s108, 0
      %s111 = sadd.s32 %s110, 1
      %s112 = scalar_select %p109, %s110, %s111
      %p115 = pneg %p109
      %p116 = scmp.eq.s32.totalorder %s11, 1
      %p117 = por %p115, %p116
      %p118 = scmp.ne.s32.totalorder %s110, %s113
      %p119 = scmp.eq.s32.totalorder %s11, 0
      %p120 = por %p118, %p119
      %p121 = scmp.ne.s32.totalorder %s110, %s113
      %p122 = scmp.eq.s32.totalorder %s16, 1
      %p123 = por %p121, %p122
      %p124 = scmp.ne.s32.totalorder %s113, %s114
      %p125 = scmp.eq.s32.totalorder %s16, 0
      %p126 = por %p124, %p125
      %p127 = scmp.ne.s32.totalorder %s113, %s114
      %p128 = scmp.eq.s32.totalorder %s17, 1
      %p129 = por %p127, %p128
      %p131 = scmp.ne.s32.totalorder %s114, %s130
      %p132 = scmp.eq.s32.totalorder %s17, 0
      %p133 = por %p131, %p132
      %p134 = scmp.le.s32.totalorder 1, %s11
      %p135 = scmp.lt.s32.totalorder %s11, 3
      %p136 = pnand %p134, %p135
      %p137 = pneg %p136
      // Predicated region
      $region9: #{mamba_block_forward.3} parent=5 // pred_check
        _
      $region10: #{mamba_block_forward.3} parent=5 // pred_check_branch
        %139 = sbr.rel (%p136) target = $region12
      $region11: #{mamba_block_forward.3} parent=5 // pred_region
        %s140 = ssub.s32 %s11, 1
        // Predicated region
        $region13: #{mamba_block_forward.3} parent=11 // pred_check
          %p141 = pneg %p58
        $region14: #{mamba_block_forward.3} parent=11 // pred_check_branch
          %143 = sbr.rel (%p141) target = $region16
        $region15: #{mamba_block_forward.3} parent=11 // pred_region
          _
        $region16: #{mamba_block_forward.3} parent=11 // pred_fallthru
          _
        // Predicated region
        $region17: #{mamba_block_forward.3} parent=11 // pred_check
          %p144 = pneg %p79
        $region18: #{mamba_block_forward.3} parent=11 // pred_check_branch
          %146 = sbr.rel (%p144) target = $region20
        $region19: #{mamba_block_forward.3} parent=11 // pred_region
          _
        $region20: #{mamba_block_forward.3} parent=11 // pred_fallthru
          _
        // Predicated region
        $region21: #{mamba_block_forward.3} parent=11 // pred_check
          %p147 = pneg %p100
        $region22: #{mamba_block_forward.3} parent=11 // pred_check_branch
          %149 = sbr.rel (%p147) target = $region24
        $region23: #{mamba_block_forward.3} parent=11 // pred_region
          %s151 = ssub.s32 8192, 8192
          %152 = vsyncadd [#allocation3], %s151
          %s153 = sshll.u32 [#allocation2], 4
          %s154 = int_to_ptr.vmem [resolvable:$true] %s153
          %159 = dma.hbm_to_vmem [thread:$0]  %s3, 8192, %s154, [#allocation3], 512, 512, 32
        $region24: #{mamba_block_forward.3} parent=11 // pred_fallthru
          _
      $region12: #{mamba_block_forward.3} parent=5 // pred_fallthru
        _
      %p160 = scmp.lt.s32.totalorder %s11, 2
      // Predicated region
      $region25: #{mamba_block_forward.3} parent=5 // pred_check
        %p161 = pneg %p160
      $region26: #{mamba_block_forward.3} parent=5 // pred_check_branch
        %163 = sbr.rel (%p161) target = $region28
      $region27: #{mamba_block_forward.3} parent=5 // pred_region
        // Predicated region
        $region29: #{mamba_block_forward.3} parent=27 // pred_check
          %p164 = pneg %p31
        $region30: #{mamba_block_forward.3} parent=27 // pred_check_branch
          %166 = sbr.rel (%p164) target = $region32
        $region31: #{mamba_block_forward.3} parent=27 // pred_region
          %p167 = scmp.lt.s32.totalorder %s11, 1
          %s168 = scalar_select %p167, %s11, 1
          %s169 = smul.addr %s168, 8
          %s170 = scalar_lea.vmem %s0, %s169
        $region32: #{mamba_block_forward.3} parent=27 // pred_fallthru
          _
      $region28: #{mamba_block_forward.3} parent=5 // pred_fallthru
        _
      %p171 = scmp.le.s32.totalorder 1, %s11
      %p172 = scmp.lt.s32.totalorder %s11, 3
      %p173 = pnand %p171, %p172
      %p174 = pneg %p173
      // Predicated region
      $region33: #{mamba_block_forward.3} parent=5 // pred_check
        _
      $region34: #{mamba_block_forward.3} parent=5 // pred_check_branch
        %176 = sbr.rel (%p173) target = $region36
      $region35: #{mamba_block_forward.3} parent=5 // pred_region
        %s177 = ssub.s32 %s11, 1
        // Predicated region
        $region37: #{mamba_block_forward.3} parent=35 // pred_check
          %p178 = pneg %p100
        $region38: #{mamba_block_forward.3} parent=35 // pred_check_branch
          %180 = sbr.rel (%p178) target = $region40
        $region39: #{mamba_block_forward.3} parent=35 // pred_region
          %181 = dma.done [#allocation3], 8192
        $region40: #{mamba_block_forward.3} parent=35 // pred_fallthru
          _
        %p182 = scmp.lt.s32.totalorder %s16, 1
        %s183 = scalar_select %p182, %s16, 1
        %s184 = smul.addr %s183, 8
        %s185 = scalar_lea.vmem %s0, %s184
        %p186 = pneg %p37
        %p187 = pneg %p34
        %p188 = pneg %p58
        %p189 = pneg %p55
        %p190 = pneg %p79
        %p191 = pneg %p76
        %p192 = pneg %p100
        %p193 = pneg %p97
        %p194 = pneg %p126
        %p195 = pneg %p123
        %p196 = scmp.lt.s32.totalorder %s16, 1
        %s197 = scalar_select %p196, %s16, 1
        %s198 = smul.addr %s197, 4
        %s199 = smul.addr %s198, 8
        %s200 = scalar_lea.vmem %s4, %s199
        %p201 = scmp.lt.s32.totalorder %s16, 1
        %s202 = scalar_select %p201, %s16, 1
        %s203 = smul.addr %s202, 8
        %s204 = scalar_lea.vmem %s0, %s203
        %p205 = scmp.lt.s32.totalorder %s16, 1
        %s206 = scalar_select %p205, %s16, 1
        %s207 = smul.addr %s206, 4
        %s208 = smul.addr %s207, 8
        %s209 = scalar_lea.vmem %s4, %s208
        %v210 = vld [vmem:[%s204] sm:$0xff]
        %211 = vadd.xlane.f32.xlu0 %v210
        %v212 = vpop.xlane.xlu0 %211
        %v213 = vrcp.pop 128.0
        %v214 = vmul.f32 %v212, %v213
        %v215 = vsub.f32 %v210, %v214
        %v216 = vmul.f32 %v215, %v215
        %217 = vadd.xlane.f32.xlu0 %v216
        %v218 = vpop.xlane.xlu0 %217
        %v219 = vmul.f32 %v218, %v213
        %v220 = vadd.f32 %v219, 1e-05
        %v221 = vrsqrt.pop %v220
        %v222 = vmul.f32 %v215, %v221
        %v223 = vld [vmem:[%s1] sm:$0x1]
        %v225 = vlaneseq
        %v226 = vshrl.u32 %v225, 7
        %v227 = vsub.s32 0, %v226
        %v228 = vrot.slane %v223, %v227
        %v230 = vmul.f32 %v222, %v228
        %v231 = vld [vmem:[%s2] sm:$0x1]
        %v233 = vlaneseq
        %v234 = vshrl.u32 %v233, 7
        %v235 = vsub.s32 0, %v234
        %v236 = vrot.slane %v231, %v235
        %v238 = vadd.f32 %v230, %v236
        %v239 = vld [vmem:[#allocation2] sm:$0xff]
        %v240 = vld [vmem:[#allocation2 + $0x8] sm:$0xff]
        %v241 = vld [vmem:[#allocation2 + $0x10] sm:$0xff]
        %v242 = vld [vmem:[#allocation2 + $0x18] sm:$0xff]
        %v243 = vld [vmem:[#allocation2 + $0x20] sm:$0xff]
        %v244 = vld [vmem:[#allocation2 + $0x28] sm:$0xff]
        %v245 = vld [vmem:[#allocation2 + $0x30] sm:$0xff]
        %v246 = vld [vmem:[#allocation2 + $0x38] sm:$0xff]
        %v247 = vld [vmem:[#allocation2 + $0x40] sm:$0xff]
        %v248 = vld [vmem:[#allocation2 + $0x48] sm:$0xff]
        %v249 = vld [vmem:[#allocation2 + $0x50] sm:$0xff]
        %v250 = vld [vmem:[#allocation2 + $0x58] sm:$0xff]
        %v251 = vld [vmem:[#allocation2 + $0x60] sm:$0xff]
        %v252 = vld [vmem:[#allocation2 + $0x68] sm:$0xff]
        %v253 = vld [vmem:[#allocation2 + $0x70] sm:$0xff]
        %v254 = vld [vmem:[#allocation2 + $0x78] sm:$0xff]
        %v255 = vld [vmem:[#allocation2 + $0x80] sm:$0xff]
        %v256 = vld [vmem:[#allocation2 + $0x88] sm:$0xff]
        %v257 = vld [vmem:[#allocation2 + $0x90] sm:$0xff]
        %v258 = vld [vmem:[#allocation2 + $0x98] sm:$0xff]
        %v259 = vld [vmem:[#allocation2 + $0xa0] sm:$0xff]
        %v260 = vld [vmem:[#allocation2 + $0xa8] sm:$0xff]
        %v261 = vld [vmem:[#allocation2 + $0xb0] sm:$0xff]
        %v262 = vld [vmem:[#allocation2 + $0xb8] sm:$0xff]
        %v263 = vld [vmem:[#allocation2 + $0xc0] sm:$0xff]
        %v264 = vld [vmem:[#allocation2 + $0xc8] sm:$0xff]
        %v265 = vld [vmem:[#allocation2 + $0xd0] sm:$0xff]
        %v266 = vld [vmem:[#allocation2 + $0xd8] sm:$0xff]
        %v267 = vld [vmem:[#allocation2 + $0xe0] sm:$0xff]
        %v268 = vld [vmem:[#allocation2 + $0xe8] sm:$0xff]
        %v269 = vld [vmem:[#allocation2 + $0xf0] sm:$0xff]
        %v270 = vld [vmem:[#allocation2 + $0xf8] sm:$0xff]
        %v271 = vld [vmem:[#allocation2 + $0x100] sm:$0xff]
        %v272 = vld [vmem:[#allocation2 + $0x108] sm:$0xff]
        %v273 = vld [vmem:[#allocation2 + $0x110] sm:$0xff]
        %v274 = vld [vmem:[#allocation2 + $0x118] sm:$0xff]
        %v275 = vld [vmem:[#allocation2 + $0x120] sm:$0xff]
        %v276 = vld [vmem:[#allocation2 + $0x128] sm:$0xff]
        %v277 = vld [vmem:[#allocation2 + $0x130] sm:$0xff]
        %v278 = vld [vmem:[#allocation2 + $0x138] sm:$0xff]
        %v279 = vld [vmem:[#allocation2 + $0x140] sm:$0xff]
        %v280 = vld [vmem:[#allocation2 + $0x148] sm:$0xff]
        %v281 = vld [vmem:[#allocation2 + $0x150] sm:$0xff]
        %v282 = vld [vmem:[#allocation2 + $0x158] sm:$0xff]
        %v283 = vld [vmem:[#allocation2 + $0x160] sm:$0xff]
        %v284 = vld [vmem:[#allocation2 + $0x168] sm:$0xff]
        %v285 = vld [vmem:[#allocation2 + $0x170] sm:$0xff]
        %v286 = vld [vmem:[#allocation2 + $0x178] sm:$0xff]
        %v287 = vld [vmem:[#allocation2 + $0x180] sm:$0xff]
        %v288 = vld [vmem:[#allocation2 + $0x188] sm:$0xff]
        %v289 = vld [vmem:[#allocation2 + $0x190] sm:$0xff]
        %v290 = vld [vmem:[#allocation2 + $0x198] sm:$0xff]
        %v291 = vld [vmem:[#allocation2 + $0x1a0] sm:$0xff]
        %v292 = vld [vmem:[#allocation2 + $0x1a8] sm:$0xff]
        %v293 = vld [vmem:[#allocation2 + $0x1b0] sm:$0xff]
        %v294 = vld [vmem:[#allocation2 + $0x1b8] sm:$0xff]
        %v295 = vld [vmem:[#allocation2 + $0x1c0] sm:$0xff]
        %v296 = vld [vmem:[#allocation2 + $0x1c8] sm:$0xff]
        %v297 = vld [vmem:[#allocation2 + $0x1d0] sm:$0xff]
        %v298 = vld [vmem:[#allocation2 + $0x1d8] sm:$0xff]
        %v299 = vld [vmem:[#allocation2 + $0x1e0] sm:$0xff]
        %v300 = vld [vmem:[#allocation2 + $0x1e8] sm:$0xff]
        %v301 = vld [vmem:[#allocation2 + $0x1f0] sm:$0xff]
        %v302 = vld [vmem:[#allocation2 + $0x1f8] sm:$0xff]
        %303 = vmatprep.subr.mxu0 %v300
        %304 = vmatpush1.msra.mxu0 %v299
        %305 = vmatprep.subr.mxu0 %v296
        %306 = vmatpush1.msra.mxu0 %v295
        %307 = vmatprep.subr.mxu0 %v292
        %308 = vmatpush1.msra.mxu0 %v291
        %309 = vmatprep.subr.mxu0 %v288
        %310 = vmatpush1.msra.mxu0 %v287
        %311 = vmatprep.subr.mxu0 %v284
        %312 = vmatpush1.msra.mxu0 %v283
        %313 = vmatprep.subr.mxu0 %v280
        %314 = vmatpush1.msra.mxu0 %v279
        %315 = vmatprep.subr.mxu0 %v276
        %316 = vmatpush1.msra.mxu0 %v275
        %317 = vmatprep.subr.mxu0 %v272
        %318 = vmatpush1.msra.mxu0 %v271
        %319 = vmatprep.subr.mxu0 %v268
        %320 = vmatpush1.msra.mxu0 %v267
        %321 = vmatprep.subr.mxu0 %v264
        %322 = vmatpush1.msra.mxu0 %v263
        %323 = vmatprep.subr.mxu0 %v260
        %324 = vmatpush1.msra.mxu0 %v259
        %325 = vmatprep.subr.mxu0 %v256
        %326 = vmatpush1.msra.mxu0 %v255
        %327 = vmatprep.subr.mxu0 %v252
        %328 = vmatpush1.msra.mxu0 %v251
        %329 = vmatprep.subr.mxu0 %v248
        %330 = vmatpush1.msra.mxu0 %v247
        %331 = vmatprep.subr.mxu0 %v244
        %332 = vmatpush1.msra.mxu0 %v243
        %333 = vmatprep.subr.mxu0 %v240
        %334 = vmatpush1.msra.mxu0 %v239
        %335 = vmatprep.subr.mxu0 0.0
        %336 = vmatpush2.msra.mxu0 0.0
        %337 = vmatprep.subr.mxu0 0.0
        %338 = vmatpush2.msra.mxu0 0.0
        %339 = vmatprep.subr.mxu0 0.0
        %340 = vmatpush2.msra.mxu0 0.0
        %341 = vmatprep.subr.mxu0 0.0
        %342 = vmatpush2.msra.mxu0 0.0
        %343 = vmatprep.subr.mxu0 0.0
        %344 = vmatpush2.msra.mxu0 0.0
        %345 = vmatprep.subr.mxu0 0.0
        %346 = vmatpush2.msra.mxu0 0.0
        %347 = vmatprep.subr.mxu0 0.0
        %348 = vmatpush2.msra.mxu0 0.0
        %349 = vmatprep.subr.mxu0 0.0
        %350 = vmatpush2.msra.mxu0 0.0
        %351 = vmatprep.subr.mxu0 0.0
        %352 = vmatpush2.msra.mxu0 0.0
        %353 = vmatprep.subr.mxu0 0.0
        %354 = vmatpush2.msra.mxu0 0.0
        %355 = vmatprep.subr.mxu0 0.0
        %356 = vmatpush2.msra.mxu0 0.0
        %357 = vmatprep.subr.mxu0 0.0
        %358 = vmatpush2.msra.mxu0 0.0
        %359 = vmatprep.subr.mxu0 0.0
        %360 = vmatpush2.msra.mxu0 0.0
        %361 = vmatprep.subr.mxu0 0.0
        %362 = vmatpush2.msra.mxu0 0.0
        %363 = vmatprep.subr.mxu0 0.0
        %364 = vmatpush2.msra.mxu0 0.0
        %365 = vmatprep.subr.mxu0 0.0
        %366 = vmatpush2.msra.mxu0 0.0
        %367 = vmatprep.mubr.f32.mxu0 0.0
        %368 = vmatmul.mubr.f32.gmra.mxu0 %v238
        %v369 = vpop.f32.mrf.mxu0
        %v370 = vadd.f32 0.0, %v369
        %v371 = vpop.f32.mrf.mxu0
        %v372 = vadd.f32 0.0, %v371
        %373 = vdwg.mxu0
        %374 = vmatprep.subr.mxu0 %v302
        %375 = vmatpush1.msra.mxu0 %v301
        %376 = vmatprep.subr.mxu0 %v298
        %377 = vmatpush1.msra.mxu0 %v297
        %378 = vmatprep.subr.mxu0 %v294
        %379 = vmatpush1.msra.mxu0 %v293
        %380 = vmatprep.subr.mxu0 %v290
        %381 = vmatpush1.msra.mxu0 %v289
        %382 = vmatprep.subr.mxu0 %v286
        %383 = vmatpush1.msra.mxu0 %v285
        %384 = vmatprep.subr.mxu0 %v282
        %385 = vmatpush1.msra.mxu0 %v281
        %386 = vmatprep.subr.mxu0 %v278
        %387 = vmatpush1.msra.mxu0 %v277
        %388 = vmatprep.subr.mxu0 %v274
        %389 = vmatpush1.msra.mxu0 %v273
        %390 = vmatprep.subr.mxu0 %v270
        %391 = vmatpush1.msra.mxu0 %v269
        %392 = vmatprep.subr.mxu0 %v266
        %393 = vmatpush1.msra.mxu0 %v265
        %394 = vmatprep.subr.mxu0 %v262
        %395 = vmatpush1.msra.mxu0 %v261
        %396 = vmatprep.subr.mxu0 %v258
        %397 = vmatpush1.msra.mxu0 %v257
        %398 = vmatprep.subr.mxu0 %v254
        %399 = vmatpush1.msra.mxu0 %v253
        %400 = vmatprep.subr.mxu0 %v250
        %401 = vmatpush1.msra.mxu0 %v249
        %402 = vmatprep.subr.mxu0 %v246
        %403 = vmatpush1.msra.mxu0 %v245
        %404 = vmatprep.subr.mxu0 %v242
        %405 = vmatpush1.msra.mxu0 %v241
        %406 = vmatprep.subr.mxu0 0.0
        %407 = vmatpush2.msra.mxu0 0.0
        %408 = vmatprep.subr.mxu0 0.0
        %409 = vmatpush2.msra.mxu0 0.0
        %410 = vmatprep.subr.mxu0 0.0
        %411 = vmatpush2.msra.mxu0 0.0
        %412 = vmatprep.subr.mxu0 0.0
        %413 = vmatpush2.msra.mxu0 0.0
        %414 = vmatprep.subr.mxu0 0.0
        %415 = vmatpush2.msra.mxu0 0.0
        %416 = vmatprep.subr.mxu0 0.0
        %417 = vmatpush2.msra.mxu0 0.0
        %418 = vmatprep.subr.mxu0 0.0
        %419 = vmatpush2.msra.mxu0 0.0
        %420 = vmatprep.subr.mxu0 0.0
        %421 = vmatpush2.msra.mxu0 0.0
        %422 = vmatprep.subr.mxu0 0.0
        %423 = vmatpush2.msra.mxu0 0.0
        %424 = vmatprep.subr.mxu0 0.0
        %425 = vmatpush2.msra.mxu0 0.0
        %426 = vmatprep.subr.mxu0 0.0
        %427 = vmatpush2.msra.mxu0 0.0
        %428 = vmatprep.subr.mxu0 0.0
        %429 = vmatpush2.msra.mxu0 0.0
        %430 = vmatprep.subr.mxu0 0.0
        %431 = vmatpush2.msra.mxu0 0.0
        %432 = vmatprep.subr.mxu0 0.0
        %433 = vmatpush2.msra.mxu0 0.0
        %434 = vmatprep.subr.mxu0 0.0
        %435 = vmatpush2.msra.mxu0 0.0
        %436 = vmatprep.subr.mxu0 0.0
        %437 = vmatpush2.msra.mxu0 0.0
        %438 = vmatprep.mubr.f32.mxu0 0.0
        %439 = vmatmul.mubr.f32.gmra.mxu0 %v238
        %v440 = vpop.f32.mrf.mxu0
        %v441 = vadd.f32 0.0, %v440
        %v442 = vpop.f32.mrf.mxu0
        %v443 = vadd.f32 0.0, %v442
        %444 = vdwg.mxu0
        %445 = vst [vmem:[%s209] sm:$0xff] %v370
        %446 = vst [vmem:[%s209 + $0x8] sm:$0xff] %v372
        %447 = vst [vmem:[%s209 + $0x10] sm:$0xff] %v441
        %448 = vst [vmem:[%s209 + $0x18] sm:$0xff] %v443
        %p449 = scmp.lt.s32.totalorder %s16, 1
        %s450 = scalar_select %p449, %s16, 1
        %s451 = smul.addr %s450, 4
        %s452 = smul.addr %s451, 8
        %s453 = scalar_lea.vmem %s4, %s452
        // Predicated region
        $region41: #{mamba_block_forward.3} parent=35 // pred_check
          %p454 = pneg %p123
        $region42: #{mamba_block_forward.3} parent=35 // pred_check_branch
          %456 = sbr.rel (%p454) target = $region44
        $region43: #{mamba_block_forward.3} parent=35 // pred_region
          _
        $region44: #{mamba_block_forward.3} parent=35 // pred_fallthru
          _
      $region36: #{mamba_block_forward.3} parent=5 // pred_fallthru
        _
      %p457 = scmp.le.s32.totalorder 2, %s11
      // Predicated region
      $region45: #{mamba_block_forward.3} parent=5 // pred_check
        %p458 = pneg %p457
      $region46: #{mamba_block_forward.3} parent=5 // pred_check_branch
        %460 = sbr.rel (%p458) target = $region48
      $region47: #{mamba_block_forward.3} parent=5 // pred_region
        %s461 = ssub.s32 %s11, 2
        // Predicated region
        $region49: #{mamba_block_forward.3} parent=47 // pred_check
          %p462 = pneg %p129
        $region50: #{mamba_block_forward.3} parent=47 // pred_check_branch
          %464 = sbr.rel (%p462) target = $region52
        $region51: #{mamba_block_forward.3} parent=47 // pred_region
          %p465 = scmp.lt.s32.totalorder %s17, 1
          %s466 = scalar_select %p465, %s17, 1
          %s467 = smul.addr %s466, 4
          %s468 = smul.addr %s467, 8
          %s469 = scalar_lea.vmem %s4, %s468
        $region52: #{mamba_block_forward.3} parent=47 // pred_fallthru
          _
      $region48: #{mamba_block_forward.3} parent=5 // pred_fallthru
        _
    $region6: #{mamba_block_forward.3} parent=1 // loop_footer
      %s15 = sadd.s32 1, %s11
    $region7: #{mamba_block_forward.3} parent=1 // loop_footer_branch
      %10 = sbr.rel target = $region3
    $region8: #{mamba_block_forward.3} parent=1 // loop_exit
      _
    %470 = vsyncpa [#allocation3], 1
    %s471 = scalar_lea.sflag [#allocation3], 1
    %472 = vsyncpa %s471, 1

// kernel: mamba_block_forward.5
$region0: #{mamba_block_forward.5}
  #allocation0 [shape = 'u32[]', space=smem, size = 0x4, offset = 0x4, fixed_abs, tag = 'smem constant byte address 0x4 - core index']
  #allocation1 [shape = 'u32[144,128]{1,0:T(1,128)}', space=vmem, size = 0x12000, scoped, tag = 'internal scratch']
  %s0 = inlined_call_operand.vmem [shape: f32[16,128], index: 0, kind: input, shape index: {}]
  %s1 = inlined_call_operand.vmem [shape: f32[16,128], index: 1, kind: input, shape index: {}]
  %s2 = inlined_call_operand.vmem [shape: f32[1,128], index: 2, kind: input, shape index: {}]
  %s3 = inlined_call_operand.vmem [shape: f32[1,128], index: 3, kind: input, shape index: {}]
  %s4 = inlined_call_operand.vmem [shape: f32[128,512], index: 4, kind: input, shape index: {}]
  %s5 = inlined_call_operand.vmem [shape: f32[512,128], index: 5, kind: input, shape index: {}]
  %s6 = inlined_call_operand.hbm [shape: f32[16,128], index: 6, kind: output, shape index: {}]
  %s7 = sld [smem:[#allocation0]]
  $region57: #{mamba_block_forward.5} parent=0
    _
  %s9 = ssub.s32 1, %s7
  %s10 = scalar_select 0, %s9, %s7
  $region1: #{mamba_block_forward.5} parent=0
    #allocation2 [shape = 'u8[8192]{0}', space=vmem, size = 0x2000, scoped, tag = 'output window, operand 0']
    #allocation3 [shape = 's32[2]{0}', space=sflag, size = 0x8, scoped, tag = 'scoped memory for mamba_block_forward.5']
    %11 = vsyncpa [#allocation3], 0
    %s12 = scalar_lea.sflag [#allocation3], 1
    %13 = vsyncpa %s12, 0
    loop: start=0, step=1, limit=4
    $region2: #{mamba_block_forward.5} parent=1 // loop_pre_header
      _
    $region3: #{mamba_block_forward.5} parent=1 // loop_header
      %s15 = sphi 0, %s19
      %p16 = scmp.ge.s32.totalorder %s15, 4
      %s25 = sphi 0, %s27
      %s28 = sphi 0, %s25
      %s29 = sphi 0, %s28
      %s45 = sphi 0, %s29
      %s51 = sphi 0, %s53
      %s54 = sphi 0, %s51
      %s55 = sphi 0, %s54
      %s71 = sphi 0, %s55
      %s75 = sphi 0, %s75
      %s77 = sphi 0, %s75
      %s78 = sphi 0, %s77
      %s92 = sphi 0, %s78
      %s96 = sphi 0, %s96
      %s98 = sphi 0, %s96
      %s99 = sphi 0, %s98
      %s113 = sphi 0, %s99
      %s117 = sphi 0, %s117
      %s119 = sphi 0, %s117
      %s120 = sphi 0, %s119
      %s134 = sphi 0, %s120
      %s138 = sphi 0, %s138
      %s140 = sphi 0, %s138
      %s141 = sphi 0, %s140
      %s155 = sphi 0, %s141
      %s161 = sphi 0, %s163
      %s164 = sphi 0, %s161
      %s165 = sphi 0, %s164
      %s181 = sphi 0, %s165
    $region4: #{mamba_block_forward.5} parent=1 // loop_header_branch
      %18 = sbr.rel (%p16) target = $region8
    $region5: #{mamba_block_forward.5} parent=1 // loop_body
      %s20 = ssub.s32 %s15, 1
      %s21 = ssub.s32 %s15, 2
      %s22 = sadd.s32 %s15, 1
      %s23 = ssub.s32 %s15, %s22
      %p24 = scmp.eq.s32.totalorder %s23, 0
      %s26 = sadd.s32 %s25, 1
      %s27 = scalar_select %p24, %s25, %s26
      %p30 = pneg %p24
      %p31 = scmp.eq.s32.totalorder %s15, 1
      %p32 = por %p30, %p31
      %p33 = scmp.ne.s32.totalorder %s25, %s28
      %p34 = scmp.eq.s32.totalorder %s15, 0
      %p35 = por %p33, %p34
      %p36 = scmp.ne.s32.totalorder %s25, %s28
      %p37 = scmp.eq.s32.totalorder %s20, 1
      %p38 = por %p36, %p37
      %p39 = scmp.ne.s32.totalorder %s28, %s29
      %p40 = scmp.eq.s32.totalorder %s20, 0
      %p41 = por %p39, %p40
      %p42 = scmp.ne.s32.totalorder %s28, %s29
      %p43 = scmp.eq.s32.totalorder %s21, 1
      %p44 = por %p42, %p43
      %p46 = scmp.ne.s32.totalorder %s29, %s45
      %p47 = scmp.eq.s32.totalorder %s21, 0
      %p48 = por %p46, %p47
      %s49 = ssub.s32 %s15, %s22
      %p50 = scmp.eq.s32.totalorder %s49, 0
      %s52 = sadd.s32 %s51, 1
      %s53 = scalar_select %p50, %s51, %s52
      %p56 = pneg %p50
      %p57 = scmp.eq.s32.totalorder %s15, 1
      %p58 = por %p56, %p57
      %p59 = scmp.ne.s32.totalorder %s51, %s54
      %p60 = scmp.eq.s32.totalorder %s15, 0
      %p61 = por %p59, %p60
      %p62 = scmp.ne.s32.totalorder %s51, %s54
      %p63 = scmp.eq.s32.totalorder %s20, 1
      %p64 = por %p62, %p63
      %p65 = scmp.ne.s32.totalorder %s54, %s55
      %p66 = scmp.eq.s32.totalorder %s20, 0
      %p67 = por %p65, %p66
      %p68 = scmp.ne.s32.totalorder %s54, %s55
      %p69 = scmp.eq.s32.totalorder %s21, 1
      %p70 = por %p68, %p69
      %p72 = scmp.ne.s32.totalorder %s55, %s71
      %p73 = scmp.eq.s32.totalorder %s21, 0
      %p74 = por %p72, %p73
      %s76 = sadd.s32 %s75, 1
      %p79 = scmp.eq.s32.totalorder %s15, 1
      %p80 = scmp.ne.s32.totalorder %s75, %s77
      %p81 = scmp.eq.s32.totalorder %s15, 0
      %p82 = por %p80, %p81
      %p83 = scmp.ne.s32.totalorder %s75, %s77
      %p84 = scmp.eq.s32.totalorder %s20, 1
      %p85 = por %p83, %p84
      %p86 = scmp.ne.s32.totalorder %s77, %s78
      %p87 = scmp.eq.s32.totalorder %s20, 0
      %p88 = por %p86, %p87
      %p89 = scmp.ne.s32.totalorder %s77, %s78
      %p90 = scmp.eq.s32.totalorder %s21, 1
      %p91 = por %p89, %p90
      %p93 = scmp.ne.s32.totalorder %s78, %s92
      %p94 = scmp.eq.s32.totalorder %s21, 0
      %p95 = por %p93, %p94
      %s97 = sadd.s32 %s96, 1
      %p100 = scmp.eq.s32.totalorder %s15, 1
      %p101 = scmp.ne.s32.totalorder %s96, %s98
      %p102 = scmp.eq.s32.totalorder %s15, 0
      %p103 = por %p101, %p102
      %p104 = scmp.ne.s32.totalorder %s96, %s98
      %p105 = scmp.eq.s32.totalorder %s20, 1
      %p106 = por %p104, %p105
      %p107 = scmp.ne.s32.totalorder %s98, %s99
      %p108 = scmp.eq.s32.totalorder %s20, 0
      %p109 = por %p107, %p108
      %p110 = scmp.ne.s32.totalorder %s98, %s99
      %p111 = scmp.eq.s32.totalorder %s21, 1
      %p112 = por %p110, %p111
      %p114 = scmp.ne.s32.totalorder %s99, %s113
      %p115 = scmp.eq.s32.totalorder %s21, 0
      %p116 = por %p114, %p115
      %s118 = sadd.s32 %s117, 1
      %p121 = scmp.eq.s32.totalorder %s15, 1
      %p122 = scmp.ne.s32.totalorder %s117, %s119
      %p123 = scmp.eq.s32.totalorder %s15, 0
      %p124 = por %p122, %p123
      %p125 = scmp.ne.s32.totalorder %s117, %s119
      %p126 = scmp.eq.s32.totalorder %s20, 1
      %p127 = por %p125, %p126
      %p128 = scmp.ne.s32.totalorder %s119, %s120
      %p129 = scmp.eq.s32.totalorder %s20, 0
      %p130 = por %p128, %p129
      %p131 = scmp.ne.s32.totalorder %s119, %s120
      %p132 = scmp.eq.s32.totalorder %s21, 1
      %p133 = por %p131, %p132
      %p135 = scmp.ne.s32.totalorder %s120, %s134
      %p136 = scmp.eq.s32.totalorder %s21, 0
      %p137 = por %p135, %p136
      %s139 = sadd.s32 %s138, 1
      %p142 = scmp.eq.s32.totalorder %s15, 1
      %p143 = scmp.ne.s32.totalorder %s138, %s140
      %p144 = scmp.eq.s32.totalorder %s15, 0
      %p145 = por %p143, %p144
      %p146 = scmp.ne.s32.totalorder %s138, %s140
      %p147 = scmp.eq.s32.totalorder %s20, 1
      %p148 = por %p146, %p147
      %p149 = scmp.ne.s32.totalorder %s140, %s141
      %p150 = scmp.eq.s32.totalorder %s20, 0
      %p151 = por %p149, %p150
      %p152 = scmp.ne.s32.totalorder %s140, %s141
      %p153 = scmp.eq.s32.totalorder %s21, 1
      %p154 = por %p152, %p153
      %p156 = scmp.ne.s32.totalorder %s141, %s155
      %p157 = scmp.eq.s32.totalorder %s21, 0
      %p158 = por %p156, %p157
      %s159 = ssub.s32 %s15, %s22
      %p160 = scmp.eq.s32.totalorder %s159, 0
      %s162 = sadd.s32 %s161, 1
      %s163 = scalar_select %p160, %s161, %s162
      %p166 = pneg %p160
      %p167 = scmp.eq.s32.totalorder %s15, 1
      %p168 = por %p166, %p167
      %p169 = scmp.ne.s32.totalorder %s161, %s164
      %p170 = scmp.eq.s32.totalorder %s15, 0
      %p171 = por %p169, %p170
      %p172 = scmp.ne.s32.totalorder %s161, %s164
      %p173 = scmp.eq.s32.totalorder %s20, 1
      %p174 = por %p172, %p173
      %p175 = scmp.ne.s32.totalorder %s164, %s165
      %p176 = scmp.eq.s32.totalorder %s20, 0
      %p177 = por %p175, %p176
      %p178 = scmp.ne.s32.totalorder %s164, %s165
      %p179 = scmp.eq.s32.totalorder %s21, 1
      %p180 = por %p178, %p179
      %p182 = scmp.ne.s32.totalorder %s165, %s181
      %p183 = scmp.eq.s32.totalorder %s21, 0
      %p184 = por %p182, %p183
      %p185 = scmp.le.s32.totalorder 1, %s15
      %p186 = scmp.lt.s32.totalorder %s15, 3
      %p187 = pnand %p185, %p186
      %p188 = pneg %p187
      // Predicated region
      $region9: #{mamba_block_forward.5} parent=5 // pred_check
        _
      $region10: #{mamba_block_forward.5} parent=5 // pred_check_branch
        %190 = sbr.rel (%p187) target = $region12
      $region11: #{mamba_block_forward.5} parent=5 // pred_region
        %s191 = ssub.s32 %s15, 1
        // Predicated region
        $region13: #{mamba_block_forward.5} parent=11 // pred_check
          %p192 = pneg %p88
        $region14: #{mamba_block_forward.5} parent=11 // pred_check_branch
          %194 = sbr.rel (%p192) target = $region16
        $region15: #{mamba_block_forward.5} parent=11 // pred_region
          _
        $region16: #{mamba_block_forward.5} parent=11 // pred_fallthru
          _
        // Predicated region
        $region17: #{mamba_block_forward.5} parent=11 // pred_check
          %p195 = pneg %p109
        $region18: #{mamba_block_forward.5} parent=11 // pred_check_branch
          %197 = sbr.rel (%p195) target = $region20
        $region19: #{mamba_block_forward.5} parent=11 // pred_region
          _
        $region20: #{mamba_block_forward.5} parent=11 // pred_fallthru
          _
        // Predicated region
        $region21: #{mamba_block_forward.5} parent=11 // pred_check
          %p198 = pneg %p130
        $region22: #{mamba_block_forward.5} parent=11 // pred_check_branch
          %200 = sbr.rel (%p198) target = $region24
        $region23: #{mamba_block_forward.5} parent=11 // pred_region
          _
        $region24: #{mamba_block_forward.5} parent=11 // pred_fallthru
          _
        // Predicated region
        $region25: #{mamba_block_forward.5} parent=11 // pred_check
          %p201 = pneg %p151
        $region26: #{mamba_block_forward.5} parent=11 // pred_check_branch
          %203 = sbr.rel (%p201) target = $region28
        $region27: #{mamba_block_forward.5} parent=11 // pred_region
          _
        $region28: #{mamba_block_forward.5} parent=11 // pred_fallthru
          _
      $region12: #{mamba_block_forward.5} parent=5 // pred_fallthru
        _
      %p204 = scmp.lt.s32.totalorder %s15, 2
      // Predicated region
      $region29: #{mamba_block_forward.5} parent=5 // pred_check
        %p205 = pneg %p204
      $region30: #{mamba_block_forward.5} parent=5 // pred_check_branch
        %207 = sbr.rel (%p205) target = $region32
      $region31: #{mamba_block_forward.5} parent=5 // pred_region
        // Predicated region
        $region33: #{mamba_block_forward.5} parent=31 // pred_check
          %p208 = pneg %p35
        $region34: #{mamba_block_forward.5} parent=31 // pred_check_branch
          %210 = sbr.rel (%p208) target = $region36
        $region35: #{mamba_block_forward.5} parent=31 // pred_region
          %p211 = scmp.lt.s32.totalorder %s15, 1
          %s212 = scalar_select %p211, %s15, 1
          %s213 = smul.addr %s212, 8
          %s214 = scalar_lea.vmem %s0, %s213
        $region36: #{mamba_block_forward.5} parent=31 // pred_fallthru
          _
        // Predicated region
        $region37: #{mamba_block_forward.5} parent=31 // pred_check
          %p215 = pneg %p61
        $region38: #{mamba_block_forward.5} parent=31 // pred_check_branch
          %217 = sbr.rel (%p215) target = $region40
        $region39: #{mamba_block_forward.5} parent=31 // pred_region
          %p218 = scmp.lt.s32.totalorder %s15, 1
          %s219 = scalar_select %p218, %s15, 1
          %s220 = smul.addr %s219, 8
          %s221 = scalar_lea.vmem %s1, %s220
        $region40: #{mamba_block_forward.5} parent=31 // pred_fallthru
          _
      $region32: #{mamba_block_forward.5} parent=5 // pred_fallthru
        _
      %p222 = scmp.le.s32.totalorder 1, %s15
      %p223 = scmp.lt.s32.totalorder %s15, 3
      %p224 = pnand %p222, %p223
      %p225 = pneg %p224
      // Predicated region
      $region41: #{mamba_block_forward.5} parent=5 // pred_check
        _
      $region42: #{mamba_block_forward.5} parent=5 // pred_check_branch
        %227 = sbr.rel (%p224) target = $region44
      $region43: #{mamba_block_forward.5} parent=5 // pred_region
        %s228 = ssub.s32 %s15, 1
        %p229 = scmp.lt.s32.totalorder %s20, 1
        %s230 = scalar_select %p229, %s20, 1
        %s231 = smul.addr %s230, 8
        %s232 = scalar_lea.vmem %s0, %s231
        %p233 = pneg %p41
        %p234 = pneg %p38
        %p235 = scmp.lt.s32.totalorder %s20, 1
        %s236 = scalar_select %p235, %s20, 1
        %s237 = smul.addr %s236, 8
        %s238 = scalar_lea.vmem %s1, %s237
        %p239 = pneg %p67
        %p240 = pneg %p64
        %p241 = pneg %p88
        %p242 = pneg %p85
        %p243 = pneg %p109
        %p244 = pneg %p106
        %p245 = pneg %p130
        %p246 = pneg %p127
        %p247 = pneg %p151
        %p248 = pneg %p148
        %p249 = pneg %p177
        %p250 = pneg %p174
        %s251 = sand.u32 %s164, 1
        %s252 = scalar_lea.sflag [#allocation3], %s251
        %s253 = sand.u32 %s164, 1
        %s254 = smul.addr %s253, 8
        %s255 = scalar_lea.vmem [#allocation2], %s254
        %p256 = scmp.lt.s32.totalorder %s20, 1
        %s257 = scalar_select %p256, %s20, 1
        %s258 = smul.addr %s257, 8
        %s259 = scalar_lea.vmem %s0, %s258
        %p260 = scmp.lt.s32.totalorder %s20, 1
        %s261 = scalar_select %p260, %s20, 1
        %s262 = smul.addr %s261, 8
        %s263 = scalar_lea.vmem %s1, %s262
        %v264 = vld [vmem:[%s259] sm:$0xff]
        %v265 = vld [vmem:[%s263] sm:$0xff]
        %v266 = vadd.f32 %v264, %v265
        %267 = vadd.xlane.f32.xlu0 %v266
        %v268 = vpop.xlane.xlu0 %267
        %v269 = vrcp.pop 128.0
        %v270 = vmul.f32 %v268, %v269
        %v271 = vsub.f32 %v266, %v270
        %v272 = vmul.f32 %v271, %v271
        %273 = vadd.xlane.f32.xlu0 %v272
        %v274 = vpop.xlane.xlu0 %273
        %v275 = vmul.f32 %v274, %v269
        %v276 = vadd.f32 %v275, 1e-05
        %v277 = vrsqrt.pop %v276
        %v278 = vmul.f32 %v271, %v277
        %v279 = vld [vmem:[%s2] sm:$0x1]
        %v281 = vlaneseq
        %v282 = vshrl.u32 %v281, 7
        %v283 = vsub.s32 0, %v282
        %v284 = vrot.slane %v279, %v283
        %v286 = vmul.f32 %v278, %v284
        %v287 = vld [vmem:[%s3] sm:$0x1]
        %v289 = vlaneseq
        %v290 = vshrl.u32 %v289, 7
        %v291 = vsub.s32 0, %v290
        %v292 = vrot.slane %v287, %v291
        %v294 = vadd.f32 %v286, %v292
        %v295 = vld [vmem:[%s4] sm:$0xff]
        %v296 = vld [vmem:[%s4 + $0x8] sm:$0xff]
        %v297 = vld [vmem:[%s4 + $0x10] sm:$0xff]
        %v298 = vld [vmem:[%s4 + $0x18] sm:$0xff]
        %v299 = vld [vmem:[%s4 + $0x20] sm:$0xff]
        %v300 = vld [vmem:[%s4 + $0x28] sm:$0xff]
        %v301 = vld [vmem:[%s4 + $0x30] sm:$0xff]
        %v302 = vld [vmem:[%s4 + $0x38] sm:$0xff]
        %v303 = vld [vmem:[%s4 + $0x40] sm:$0xff]
        %v304 = vld [vmem:[%s4 + $0x48] sm:$0xff]
        %v305 = vld [vmem:[%s4 + $0x50] sm:$0xff]
        %v306 = vld [vmem:[%s4 + $0x58] sm:$0xff]
        %v307 = vld [vmem:[%s4 + $0x60] sm:$0xff]
        %v308 = vld [vmem:[%s4 + $0x68] sm:$0xff]
        %v309 = vld [vmem:[%s4 + $0x70] sm:$0xff]
        %v310 = vld [vmem:[%s4 + $0x78] sm:$0xff]
        %v311 = vld [vmem:[%s4 + $0x80] sm:$0xff]
        %v312 = vld [vmem:[%s4 + $0x88] sm:$0xff]
        %v313 = vld [vmem:[%s4 + $0x90] sm:$0xff]
        %v314 = vld [vmem:[%s4 + $0x98] sm:$0xff]
        %v315 = vld [vmem:[%s4 + $0xa0] sm:$0xff]
        %v316 = vld [vmem:[%s4 + $0xa8] sm:$0xff]
        %v317 = vld [vmem:[%s4 + $0xb0] sm:$0xff]
        %v318 = vld [vmem:[%s4 + $0xb8] sm:$0xff]
        %v319 = vld [vmem:[%s4 + $0xc0] sm:$0xff]
        %v320 = vld [vmem:[%s4 + $0xc8] sm:$0xff]
        %v321 = vld [vmem:[%s4 + $0xd0] sm:$0xff]
        %v322 = vld [vmem:[%s4 + $0xd8] sm:$0xff]
        %v323 = vld [vmem:[%s4 + $0xe0] sm:$0xff]
        %v324 = vld [vmem:[%s4 + $0xe8] sm:$0xff]
        %v325 = vld [vmem:[%s4 + $0xf0] sm:$0xff]
        %v326 = vld [vmem:[%s4 + $0xf8] sm:$0xff]
        %v327 = vld [vmem:[%s4 + $0x100] sm:$0xff]
        %v328 = vld [vmem:[%s4 + $0x108] sm:$0xff]
        %v329 = vld [vmem:[%s4 + $0x110] sm:$0xff]
        %v330 = vld [vmem:[%s4 + $0x118] sm:$0xff]
        %v331 = vld [vmem:[%s4 + $0x120] sm:$0xff]
        %v332 = vld [vmem:[%s4 + $0x128] sm:$0xff]
        %v333 = vld [vmem:[%s4 + $0x130] sm:$0xff]
        %v334 = vld [vmem:[%s4 + $0x138] sm:$0xff]
        %v335 = vld [vmem:[%s4 + $0x140] sm:$0xff]
        %v336 = vld [vmem:[%s4 + $0x148] sm:$0xff]
        %v337 = vld [vmem:[%s4 + $0x150] sm:$0xff]
        %v338 = vld [vmem:[%s4 + $0x158] sm:$0xff]
        %v339 = vld [vmem:[%s4 + $0x160] sm:$0xff]
        %v340 = vld [vmem:[%s4 + $0x168] sm:$0xff]
        %v341 = vld [vmem:[%s4 + $0x170] sm:$0xff]
        %v342 = vld [vmem:[%s4 + $0x178] sm:$0xff]
        %v343 = vld [vmem:[%s4 + $0x180] sm:$0xff]
        %v344 = vld [vmem:[%s4 + $0x188] sm:$0xff]
        %v345 = vld [vmem:[%s4 + $0x190] sm:$0xff]
        %v346 = vld [vmem:[%s4 + $0x198] sm:$0xff]
        %v347 = vld [vmem:[%s4 + $0x1a0] sm:$0xff]
        %v348 = vld [vmem:[%s4 + $0x1a8] sm:$0xff]
        %v349 = vld [vmem:[%s4 + $0x1b0] sm:$0xff]
        %v350 = vld [vmem:[%s4 + $0x1b8] sm:$0xff]
        %v351 = vld [vmem:[%s4 + $0x1c0] sm:$0xff]
        %v352 = vld [vmem:[%s4 + $0x1c8] sm:$0xff]
        %v353 = vld [vmem:[%s4 + $0x1d0] sm:$0xff]
        %v354 = vld [vmem:[%s4 + $0x1d8] sm:$0xff]
        %v355 = vld [vmem:[%s4 + $0x1e0] sm:$0xff]
        %v356 = vld [vmem:[%s4 + $0x1e8] sm:$0xff]
        %v357 = vld [vmem:[%s4 + $0x1f0] sm:$0xff]
        %v358 = vld [vmem:[%s4 + $0x1f8] sm:$0xff]
        %359 = vmatprep.subr.mxu0 %v356
        %360 = vmatpush1.msra.mxu0 %v355
        %361 = vmatprep.subr.mxu0 %v352
        %362 = vmatpush1.msra.mxu0 %v351
        %363 = vmatprep.subr.mxu0 %v348
        %364 = vmatpush1.msra.mxu0 %v347
        %365 = vmatprep.subr.mxu0 %v344
        %366 = vmatpush1.msra.mxu0 %v343
        %367 = vmatprep.subr.mxu0 %v340
        %368 = vmatpush1.msra.mxu0 %v339
        %369 = vmatprep.subr.mxu0 %v336
        %370 = vmatpush1.msra.mxu0 %v335
        %371 = vmatprep.subr.mxu0 %v332
        %372 = vmatpush1.msra.mxu0 %v331
        %373 = vmatprep.subr.mxu0 %v328
        %374 = vmatpush1.msra.mxu0 %v327
        %375 = vmatprep.subr.mxu0 %v324
        %376 = vmatpush1.msra.mxu0 %v323
        %377 = vmatprep.subr.mxu0 %v320
        %378 = vmatpush1.msra.mxu0 %v319
        %379 = vmatprep.subr.mxu0 %v316
        %380 = vmatpush1.msra.mxu0 %v315
        %381 = vmatprep.subr.mxu0 %v312
        %382 = vmatpush1.msra.mxu0 %v311
        %383 = vmatprep.subr.mxu0 %v308
        %384 = vmatpush1.msra.mxu0 %v307
        %385 = vmatprep.subr.mxu0 %v304
        %386 = vmatpush1.msra.mxu0 %v303
        %387 = vmatprep.subr.mxu0 %v300
        %388 = vmatpush1.msra.mxu0 %v299
        %389 = vmatprep.subr.mxu0 %v296
        %390 = vmatpush1.msra.mxu0 %v295
        %391 = vmatprep.subr.mxu0 0.0
        %392 = vmatpush2.msra.mxu0 0.0
        %393 = vmatprep.subr.mxu0 0.0
        %394 = vmatpush2.msra.mxu0 0.0
        %395 = vmatprep.subr.mxu0 0.0
        %396 = vmatpush2.msra.mxu0 0.0
        %397 = vmatprep.subr.mxu0 0.0
        %398 = vmatpush2.msra.mxu0 0.0
        %399 = vmatprep.subr.mxu0 0.0
        %400 = vmatpush2.msra.mxu0 0.0
        %401 = vmatprep.subr.mxu0 0.0
        %402 = vmatpush2.msra.mxu0 0.0
        %403 = vmatprep.subr.mxu0 0.0
        %404 = vmatpush2.msra.mxu0 0.0
        %405 = vmatprep.subr.mxu0 0.0
        %406 = vmatpush2.msra.mxu0 0.0
        %407 = vmatprep.subr.mxu0 0.0
        %408 = vmatpush2.msra.mxu0 0.0
        %409 = vmatprep.subr.mxu0 0.0
        %410 = vmatpush2.msra.mxu0 0.0
        %411 = vmatprep.subr.mxu0 0.0
        %412 = vmatpush2.msra.mxu0 0.0
        %413 = vmatprep.subr.mxu0 0.0
        %414 = vmatpush2.msra.mxu0 0.0
        %415 = vmatprep.subr.mxu0 0.0
        %416 = vmatpush2.msra.mxu0 0.0
        %417 = vmatprep.subr.mxu0 0.0
        %418 = vmatpush2.msra.mxu0 0.0
        %419 = vmatprep.subr.mxu0 0.0
        %420 = vmatpush2.msra.mxu0 0.0
        %421 = vmatprep.subr.mxu0 0.0
        %422 = vmatpush2.msra.mxu0 0.0
        %423 = vmatprep.mubr.f32.mxu0 0.0
        %424 = vmatmul.mubr.f32.gmra.mxu0 %v294
        %v425 = vpop.f32.mrf.mxu0
        %v426 = vadd.f32 0.0, %v425
        %v427 = vpop.f32.mrf.mxu0
        %v428 = vadd.f32 0.0, %v427
        %429 = vdwg.mxu0
        %430 = vmatprep.subr.mxu0 %v358
        %431 = vmatpush1.msra.mxu0 %v357
        %432 = vmatprep.subr.mxu0 %v354
        %433 = vmatpush1.msra.mxu0 %v353
        %434 = vmatprep.subr.mxu0 %v350
        %435 = vmatpush1.msra.mxu0 %v349
        %436 = vmatprep.subr.mxu0 %v346
        %437 = vmatpush1.msra.mxu0 %v345
        %438 = vmatprep.subr.mxu0 %v342
        %439 = vmatpush1.msra.mxu0 %v341
        %440 = vmatprep.subr.mxu0 %v338
        %441 = vmatpush1.msra.mxu0 %v337
        %442 = vmatprep.subr.mxu0 %v334
        %443 = vmatpush1.msra.mxu0 %v333
        %444 = vmatprep.subr.mxu0 %v330
        %445 = vmatpush1.msra.mxu0 %v329
        %446 = vmatprep.subr.mxu0 %v326
        %447 = vmatpush1.msra.mxu0 %v325
        %448 = vmatprep.subr.mxu0 %v322
        %449 = vmatpush1.msra.mxu0 %v321
        %450 = vmatprep.subr.mxu0 %v318
        %451 = vmatpush1.msra.mxu0 %v317
        %452 = vmatprep.subr.mxu0 %v314
        %453 = vmatpush1.msra.mxu0 %v313
        %454 = vmatprep.subr.mxu0 %v310
        %455 = vmatpush1.msra.mxu0 %v309
        %456 = vmatprep.subr.mxu0 %v306
        %457 = vmatpush1.msra.mxu0 %v305
        %458 = vmatprep.subr.mxu0 %v302
        %459 = vmatpush1.msra.mxu0 %v301
        %460 = vmatprep.subr.mxu0 %v298
        %461 = vmatpush1.msra.mxu0 %v297
        %462 = vmatprep.subr.mxu0 0.0
        %463 = vmatpush2.msra.mxu0 0.0
        %464 = vmatprep.subr.mxu0 0.0
        %465 = vmatpush2.msra.mxu0 0.0
        %466 = vmatprep.subr.mxu0 0.0
        %467 = vmatpush2.msra.mxu0 0.0
        %468 = vmatprep.subr.mxu0 0.0
        %469 = vmatpush2.msra.mxu0 0.0
        %470 = vmatprep.subr.mxu0 0.0
        %471 = vmatpush2.msra.mxu0 0.0
        %472 = vmatprep.subr.mxu0 0.0
        %473 = vmatpush2.msra.mxu0 0.0
        %474 = vmatprep.subr.mxu0 0.0
        %475 = vmatpush2.msra.mxu0 0.0
        %476 = vmatprep.subr.mxu0 0.0
        %477 = vmatpush2.msra.mxu0 0.0
        %478 = vmatprep.subr.mxu0 0.0
        %479 = vmatpush2.msra.mxu0 0.0
        %480 = vmatprep.subr.mxu0 0.0
        %481 = vmatpush2.msra.mxu0 0.0
        %482 = vmatprep.subr.mxu0 0.0
        %483 = vmatpush2.msra.mxu0 0.0
        %484 = vmatprep.subr.mxu0 0.0
        %485 = vmatpush2.msra.mxu0 0.0
        %486 = vmatprep.subr.mxu0 0.0
        %487 = vmatpush2.msra.mxu0 0.0
        %488 = vmatprep.subr.mxu0 0.0
        %489 = vmatpush2.msra.mxu0 0.0
        %490 = vmatprep.subr.mxu0 0.0
        %491 = vmatpush2.msra.mxu0 0.0
        %492 = vmatprep.subr.mxu0 0.0
        %493 = vmatpush2.msra.mxu0 0.0
        %494 = vmatprep.mubr.f32.mxu0 0.0
        %495 = vmatmul.mubr.f32.gmra.mxu0 %v294
        %v496 = vpop.f32.mrf.mxu0
        %v497 = vadd.f32 0.0, %v496
        %v498 = vpop.f32.mrf.mxu0
        %v499 = vadd.f32 0.0, %v498
        %500 = vdwg.mxu0
        %v501 = vmax.f32 %v426, 0.0
        %v502 = vmax.f32 %v428, 0.0
        %v503 = vmax.f32 %v497, 0.0
        %v504 = vmax.f32 %v499, 0.0
        %v505 = vld [vmem:[%s5] sm:$0xff]
        %v506 = vld [vmem:[%s5 + $0x8] sm:$0xff]
        %v507 = vld [vmem:[%s5 + $0x10] sm:$0xff]
        %v508 = vld [vmem:[%s5 + $0x18] sm:$0xff]
        %v509 = vld [vmem:[%s5 + $0x20] sm:$0xff]
        %v510 = vld [vmem:[%s5 + $0x28] sm:$0xff]
        %v511 = vld [vmem:[%s5 + $0x30] sm:$0xff]
        %v512 = vld [vmem:[%s5 + $0x38] sm:$0xff]
        %v513 = vld [vmem:[%s5 + $0x40] sm:$0xff]
        %v514 = vld [vmem:[%s5 + $0x48] sm:$0xff]
        %v515 = vld [vmem:[%s5 + $0x50] sm:$0xff]
        %v516 = vld [vmem:[%s5 + $0x58] sm:$0xff]
        %v517 = vld [vmem:[%s5 + $0x60] sm:$0xff]
        %v518 = vld [vmem:[%s5 + $0x68] sm:$0xff]
        %v519 = vld [vmem:[%s5 + $0x70] sm:$0xff]
        %v520 = vld [vmem:[%s5 + $0x78] sm:$0xff]
        %v521 = vld [vmem:[%s5 + $0x80] sm:$0xff]
        %v522 = vld [vmem:[%s5 + $0x88] sm:$0xff]
        %v523 = vld [vmem:[%s5 + $0x90] sm:$0xff]
        %v524 = vld [vmem:[%s5 + $0x98] sm:$0xff]
        %v525 = vld [vmem:[%s5 + $0xa0] sm:$0xff]
        %v526 = vld [vmem:[%s5 + $0xa8] sm:$0xff]
        %v527 = vld [vmem:[%s5 + $0xb0] sm:$0xff]
        %v528 = vld [vmem:[%s5 + $0xb8] sm:$0xff]
        %v529 = vld [vmem:[%s5 + $0xc0] sm:$0xff]
        %v530 = vld [vmem:[%s5 + $0xc8] sm:$0xff]
        %v531 = vld [vmem:[%s5 + $0xd0] sm:$0xff]
        %v532 = vld [vmem:[%s5 + $0xd8] sm:$0xff]
        %v533 = vld [vmem:[%s5 + $0xe0] sm:$0xff]
        %v534 = vld [vmem:[%s5 + $0xe8] sm:$0xff]
        %v535 = vld [vmem:[%s5 + $0xf0] sm:$0xff]
        %v536 = vld [vmem:[%s5 + $0xf8] sm:$0xff]
        %v537 = vld [vmem:[%s5 + $0x100] sm:$0xff]
        %v538 = vld [vmem:[%s5 + $0x108] sm:$0xff]
        %v539 = vld [vmem:[%s5 + $0x110] sm:$0xff]
        %v540 = vld [vmem:[%s5 + $0x118] sm:$0xff]
        %v541 = vld [vmem:[%s5 + $0x120] sm:$0xff]
        %v542 = vld [vmem:[%s5 + $0x128] sm:$0xff]
        %v543 = vld [vmem:[%s5 + $0x130] sm:$0xff]
        %v544 = vld [vmem:[%s5 + $0x138] sm:$0xff]
        %v545 = vld [vmem:[%s5 + $0x140] sm:$0xff]
        %v546 = vld [vmem:[%s5 + $0x148] sm:$0xff]
        %v547 = vld [vmem:[%s5 + $0x150] sm:$0xff]
        %v548 = vld [vmem:[%s5 + $0x158] sm:$0xff]
        %v549 = vld [vmem:[%s5 + $0x160] sm:$0xff]
        %v550 = vld [vmem:[%s5 + $0x168] sm:$0xff]
        %v551 = vld [vmem:[%s5 + $0x170] sm:$0xff]
        %v552 = vld [vmem:[%s5 + $0x178] sm:$0xff]
        %v553 = vld [vmem:[%s5 + $0x180] sm:$0xff]
        %v554 = vld [vmem:[%s5 + $0x188] sm:$0xff]
        %v555 = vld [vmem:[%s5 + $0x190] sm:$0xff]
        %v556 = vld [vmem:[%s5 + $0x198] sm:$0xff]
        %v557 = vld [vmem:[%s5 + $0x1a0] sm:$0xff]
        %v558 = vld [vmem:[%s5 + $0x1a8] sm:$0xff]
        %v559 = vld [vmem:[%s5 + $0x1b0] sm:$0xff]
        %v560 = vld [vmem:[%s5 + $0x1b8] sm:$0xff]
        %v561 = vld [vmem:[%s5 + $0x1c0] sm:$0xff]
        %v562 = vld [vmem:[%s5 + $0x1c8] sm:$0xff]
        %v563 = vld [vmem:[%s5 + $0x1d0] sm:$0xff]
        %v564 = vld [vmem:[%s5 + $0x1d8] sm:$0xff]
        %v565 = vld [vmem:[%s5 + $0x1e0] sm:$0xff]
        %v566 = vld [vmem:[%s5 + $0x1e8] sm:$0xff]
        %v567 = vld [vmem:[%s5 + $0x1f0] sm:$0xff]
        %v568 = vld [vmem:[%s5 + $0x1f8] sm:$0xff]
        %569 = vmatprep.subr.mxu0 0.0
        %570 = vmatpush1.msra.mxu0 %v520
        %571 = vmatprep.subr.mxu0 0.0
        %572 = vmatpush1.msra.mxu0 %v519
        %573 = vmatprep.subr.mxu0 0.0
        %574 = vmatpush1.msra.mxu0 %v518
        %575 = vmatprep.subr.mxu0 0.0
        %576 = vmatpush1.msra.mxu0 %v517
        %577 = vmatprep.subr.mxu0 0.0
        %578 = vmatpush1.msra.mxu0 %v516
        %579 = vmatprep.subr.mxu0 0.0
        %580 = vmatpush1.msra.mxu0 %v515
        %581 = vmatprep.subr.mxu0 0.0
        %582 = vmatpush1.msra.mxu0 %v514
        %583 = vmatprep.subr.mxu0 0.0
        %584 = vmatpush1.msra.mxu0 %v513
        %585 = vmatprep.subr.mxu0 0.0
        %586 = vmatpush1.msra.mxu0 %v512
        %587 = vmatprep.subr.mxu0 0.0
        %588 = vmatpush1.msra.mxu0 %v511
        %589 = vmatprep.subr.mxu0 0.0
        %590 = vmatpush1.msra.mxu0 %v510
        %591 = vmatprep.subr.mxu0 0.0
        %592 = vmatpush1.msra.mxu0 %v509
        %593 = vmatprep.subr.mxu0 0.0
        %594 = vmatpush1.msra.mxu0 %v508
        %595 = vmatprep.subr.mxu0 0.0
        %596 = vmatpush1.msra.mxu0 %v507
        %597 = vmatprep.subr.mxu0 0.0
        %598 = vmatpush1.msra.mxu0 %v506
        %599 = vmatprep.subr.mxu0 0.0
        %600 = vmatpush1.msra.mxu0 %v505
        %601 = vmatprep.subr.mxu0 0.0
        %602 = vmatpush2.msra.mxu0 %v536
        %603 = vmatprep.subr.mxu0 0.0
        %604 = vmatpush2.msra.mxu0 %v535
        %605 = vmatprep.subr.mxu0 0.0
        %606 = vmatpush2.msra.mxu0 %v534
        %607 = vmatprep.subr.mxu0 0.0
        %608 = vmatpush2.msra.mxu0 %v533
        %609 = vmatprep.subr.mxu0 0.0
        %610 = vmatpush2.msra.mxu0 %v532
        %611 = vmatprep.subr.mxu0 0.0
        %612 = vmatpush2.msra.mxu0 %v531
        %613 = vmatprep.subr.mxu0 0.0
        %614 = vmatpush2.msra.mxu0 %v530
        %615 = vmatprep.subr.mxu0 0.0
        %616 = vmatpush2.msra.mxu0 %v529
        %617 = vmatprep.subr.mxu0 0.0
        %618 = vmatpush2.msra.mxu0 %v528
        %619 = vmatprep.subr.mxu0 0.0
        %620 = vmatpush2.msra.mxu0 %v527
        %621 = vmatprep.subr.mxu0 0.0
        %622 = vmatpush2.msra.mxu0 %v526
        %623 = vmatprep.subr.mxu0 0.0
        %624 = vmatpush2.msra.mxu0 %v525
        %625 = vmatprep.subr.mxu0 0.0
        %626 = vmatpush2.msra.mxu0 %v524
        %627 = vmatprep.subr.mxu0 0.0
        %628 = vmatpush2.msra.mxu0 %v523
        %629 = vmatprep.subr.mxu0 0.0
        %630 = vmatpush2.msra.mxu0 %v522
        %631 = vmatprep.subr.mxu0 0.0
        %632 = vmatpush2.msra.mxu0 %v521
        %633 = vmatprep.mubr.f32.mxu0 %v502
        %634 = vmatmul.mubr.f32.gmra.mxu0 %v501
        %v635 = vpop.f32.mrf.mxu0
        %v636 = vadd.f32 0.0, %v635
        %v637 = vpop.f32.mrf.mxu0
        %638 = vdwg.mxu0
        %639 = vmatprep.subr.mxu0 0.0
        %640 = vmatpush1.msra.mxu0 %v552
        %641 = vmatprep.subr.mxu0 0.0
        %642 = vmatpush1.msra.mxu0 %v551
        %643 = vmatprep.subr.mxu0 0.0
        %644 = vmatpush1.msra.mxu0 %v550
        %645 = vmatprep.subr.mxu0 0.0
        %646 = vmatpush1.msra.mxu0 %v549
        %647 = vmatprep.subr.mxu0 0.0
        %648 = vmatpush1.msra.mxu0 %v548
        %649 = vmatprep.subr.mxu0 0.0
        %650 = vmatpush1.msra.mxu0 %v547
        %651 = vmatprep.subr.mxu0 0.0
        %652 = vmatpush1.msra.mxu0 %v546
        %653 = vmatprep.subr.mxu0 0.0
        %654 = vmatpush1.msra.mxu0 %v545
        %655 = vmatprep.subr.mxu0 0.0
        %656 = vmatpush1.msra.mxu0 %v544
        %657 = vmatprep.subr.mxu0 0.0
        %658 = vmatpush1.msra.mxu0 %v543
        %659 = vmatprep.subr.mxu0 0.0
        %660 = vmatpush1.msra.mxu0 %v542
        %661 = vmatprep.subr.mxu0 0.0
        %662 = vmatpush1.msra.mxu0 %v541
        %663 = vmatprep.subr.mxu0 0.0
        %664 = vmatpush1.msra.mxu0 %v540
        %665 = vmatprep.subr.mxu0 0.0
        %666 = vmatpush1.msra.mxu0 %v539
        %667 = vmatprep.subr.mxu0 0.0
        %668 = vmatpush1.msra.mxu0 %v538
        %669 = vmatprep.subr.mxu0 0.0
        %670 = vmatpush1.msra.mxu0 %v537
        %671 = vmatprep.subr.mxu0 0.0
        %672 = vmatpush2.msra.mxu0 %v568
        %673 = vmatprep.subr.mxu0 0.0
        %674 = vmatpush2.msra.mxu0 %v567
        %675 = vmatprep.subr.mxu0 0.0
        %676 = vmatpush2.msra.mxu0 %v566
        %677 = vmatprep.subr.mxu0 0.0
        %678 = vmatpush2.msra.mxu0 %v565
        %679 = vmatprep.subr.mxu0 0.0
        %680 = vmatpush2.msra.mxu0 %v564
        %681 = vmatprep.subr.mxu0 0.0
        %682 = vmatpush2.msra.mxu0 %v563
        %683 = vmatprep.subr.mxu0 0.0
        %684 = vmatpush2.msra.mxu0 %v562
        %685 = vmatprep.subr.mxu0 0.0
        %686 = vmatpush2.msra.mxu0 %v561
        %687 = vmatprep.subr.mxu0 0.0
        %688 = vmatpush2.msra.mxu0 %v560
        %689 = vmatprep.subr.mxu0 0.0
        %690 = vmatpush2.msra.mxu0 %v559
        %691 = vmatprep.subr.mxu0 0.0
        %692 = vmatpush2.msra.mxu0 %v558
        %693 = vmatprep.subr.mxu0 0.0
        %694 = vmatpush2.msra.mxu0 %v557
        %695 = vmatprep.subr.mxu0 0.0
        %696 = vmatpush2.msra.mxu0 %v556
        %697 = vmatprep.subr.mxu0 0.0
        %698 = vmatpush2.msra.mxu0 %v555
        %699 = vmatprep.subr.mxu0 0.0
        %700 = vmatpush2.msra.mxu0 %v554
        %701 = vmatprep.subr.mxu0 0.0
        %702 = vmatpush2.msra.mxu0 %v553
        %703 = vmatprep.mubr.f32.mxu0 %v504
        %704 = vmatmul.mubr.f32.gmra.mxu0 %v503
        %v705 = vpop.f32.mrf.mxu0
        %v706 = vadd.f32 %v636, %v705
        %v707 = vpop.f32.mrf.mxu0
        %708 = vdwg.mxu0
        %v709 = vadd.f32 %v266, %v706
        %710 = vst [vmem:[%s255] sm:$0xff] %v709
        %s711 = sand.u32 %s164, 1
        %s712 = scalar_lea.sflag [#allocation3], %s711
        %s713 = sand.u32 %s164, 1
        %s714 = smul.addr %s713, 8
        %s715 = scalar_lea.vmem [#allocation2], %s714
        // Predicated region
        $region45: #{mamba_block_forward.5} parent=43 // pred_check
          %p716 = pneg %p174
        $region46: #{mamba_block_forward.5} parent=43 // pred_check_branch
          %718 = sbr.rel (%p716) target = $region48
        $region47: #{mamba_block_forward.5} parent=43 // pred_region
          %s720 = ssub.s32 128, 128
          %721 = vsyncadd %s712, %s720
          %s722 = smul.addr %s20, 128
          %s723 = scalar_lea.hbm %s6, %s722
          %s725 = sshll.u32 %s715, 4
          %s726 = int_to_ptr.vmem [resolvable:$true] %s725
          %728 = dma.vmem_to_hbm [thread:$0]  %s726, 128, %s723, %s712
        $region48: #{mamba_block_forward.5} parent=43 // pred_fallthru
          _
      $region44: #{mamba_block_forward.5} parent=5 // pred_fallthru
        _
      %p729 = scmp.le.s32.totalorder 2, %s15
      // Predicated region
      $region49: #{mamba_block_forward.5} parent=5 // pred_check
        %p730 = pneg %p729
      $region50: #{mamba_block_forward.5} parent=5 // pred_check_branch
        %732 = sbr.rel (%p730) target = $region52
      $region51: #{mamba_block_forward.5} parent=5 // pred_region
        %s733 = ssub.s32 %s15, 2
        // Predicated region
        $region53: #{mamba_block_forward.5} parent=51 // pred_check
          %p734 = pneg %p180
        $region54: #{mamba_block_forward.5} parent=51 // pred_check_branch
          %736 = sbr.rel (%p734) target = $region56
        $region55: #{mamba_block_forward.5} parent=51 // pred_region
          %s737 = sand.u32 %s165, 1
          %s738 = scalar_lea.sflag [#allocation3], %s737
          %s739 = sand.u32 %s165, 1
          %s740 = smul.addr %s739, 8
          %s741 = scalar_lea.vmem [#allocation2], %s740
          %742 = dma.done %s738, 128
        $region56: #{mamba_block_forward.5} parent=51 // pred_fallthru
          _
      $region52: #{mamba_block_forward.5} parent=5 // pred_fallthru
        _
    $region6: #{mamba_block_forward.5} parent=1 // loop_footer
      %s19 = sadd.s32 1, %s15
    $region7: #{mamba_block_forward.5} parent=1 // loop_footer_branch
      %14 = sbr.rel target = $region3
    $region8: #{mamba_block_forward.5} parent=1 // loop_exit
      _
    %743 = vsyncpa [#allocation3], 1
    %s744 = scalar_lea.sflag [#allocation3], 1
    %745 = vsyncpa %s744, 1

// kernel: mamba_block_forward.4
$region0: #{mamba_block_forward.4}
  #allocation0 [shape = 'u32[]', space=smem, size = 0x4, offset = 0x4, fixed_abs, tag = 'smem constant byte address 0x4 - core index']
  #allocation1 [shape = 'u32[144,128]{1,0:T(1,128)}', space=vmem, size = 0x12000, scoped, tag = 'internal scratch']
  %s0 = inlined_call_operand.vmem [shape: f32[2,8,512], index: 0, kind: input, shape index: {}]
  %s1 = inlined_call_operand.vmem [shape: f32[4,256], index: 1, kind: input, shape index: {}]
  %s2 = inlined_call_operand.vmem [shape: f32[1,256], index: 2, kind: input, shape index: {}]
  %s3 = inlined_call_operand.vmem [shape: f32[256,40], index: 3, kind: input, shape index: {}]
  %s4 = inlined_call_operand.vmem [shape: f32[8,256], index: 4, kind: input, shape index: {}]
  %s5 = inlined_call_operand.vmem [shape: f32[1,256], index: 5, kind: input, shape index: {}]
  %s6 = inlined_call_operand.vmem [shape: f32[16,256], index: 6, kind: input, shape index: {}]
  %s7 = inlined_call_operand.vmem [shape: f32[1,256], index: 7, kind: input, shape index: {}]
  %s8 = inlined_call_operand.vmem [shape: f32[256,128], index: 8, kind: input, shape index: {}]
  %s9 = inlined_call_operand.vmem [shape: f32[2,8,128], index: 9, kind: output, shape index: {}]
  %s10 = sld [smem:[#allocation0]]
  $region69: #{mamba_block_forward.4} parent=0
    _
  %s12 = ssub.s32 1, %s10
  %s13 = scalar_select 0, %s12, %s10
  loop: start=0, step=1, limit=4
  $region2: #{mamba_block_forward.4} parent=0 // loop_pre_header
    _
  $region3: #{mamba_block_forward.4} parent=0 // loop_header
    %s15 = sphi 0, %s19
    %p16 = scmp.ge.s32.totalorder %s15, 4
    %s25 = sphi 0, %s27
    %s28 = sphi 0, %s25
    %s29 = sphi 0, %s28
    %s45 = sphi 0, %s29
    %s49 = sphi 0, %s49
    %s51 = sphi 0, %s49
    %s52 = sphi 0, %s51
    %s66 = sphi 0, %s52
    %s70 = sphi 0, %s70
    %s72 = sphi 0, %s70
    %s73 = sphi 0, %s72
    %s87 = sphi 0, %s73
    %s91 = sphi 0, %s91
    %s93 = sphi 0, %s91
    %s94 = sphi 0, %s93
    %s108 = sphi 0, %s94
    %s112 = sphi 0, %s112
    %s114 = sphi 0, %s112
    %s115 = sphi 0, %s114
    %s129 = sphi 0, %s115
    %s133 = sphi 0, %s133
    %s135 = sphi 0, %s133
    %s136 = sphi 0, %s135
    %s150 = sphi 0, %s136
    %s154 = sphi 0, %s154
    %s156 = sphi 0, %s154
    %s157 = sphi 0, %s156
    %s171 = sphi 0, %s157
    %s175 = sphi 0, %s175
    %s177 = sphi 0, %s175
    %s178 = sphi 0, %s177
    %s192 = sphi 0, %s178
    %s196 = sphi 0, %s196
    %s198 = sphi 0, %s196
    %s199 = sphi 0, %s198
    %s213 = sphi 0, %s199
    %s219 = sphi 0, %s221
    %s222 = sphi 0, %s219
    %s223 = sphi 0, %s222
    %s239 = sphi 0, %s223
  $region4: #{mamba_block_forward.4} parent=0 // loop_header_branch
    %18 = sbr.rel (%p16) target = $region8
  $region5: #{mamba_block_forward.4} parent=0 // loop_body
    %s20 = ssub.s32 %s15, 1
    %s21 = ssub.s32 %s15, 2
    %s22 = sadd.s32 %s15, 1
    %s23 = ssub.s32 %s15, %s22
    %p24 = scmp.eq.s32.totalorder %s23, 0
    %s26 = sadd.s32 %s25, 1
    %s27 = scalar_select %p24, %s25, %s26
    %p30 = pneg %p24
    %p31 = scmp.eq.s32.totalorder %s15, 1
    %p32 = por %p30, %p31
    %p33 = scmp.ne.s32.totalorder %s25, %s28
    %p34 = scmp.eq.s32.totalorder %s15, 0
    %p35 = por %p33, %p34
    %p36 = scmp.ne.s32.totalorder %s25, %s28
    %p37 = scmp.eq.s32.totalorder %s20, 1
    %p38 = por %p36, %p37
    %p39 = scmp.ne.s32.totalorder %s28, %s29
    %p40 = scmp.eq.s32.totalorder %s20, 0
    %p41 = por %p39, %p40
    %p42 = scmp.ne.s32.totalorder %s28, %s29
    %p43 = scmp.eq.s32.totalorder %s21, 1
    %p44 = por %p42, %p43
    %p46 = scmp.ne.s32.totalorder %s29, %s45
    %p47 = scmp.eq.s32.totalorder %s21, 0
    %p48 = por %p46, %p47
    %s50 = sadd.s32 %s49, 1
    %p53 = scmp.eq.s32.totalorder %s15, 1
    %p54 = scmp.ne.s32.totalorder %s49, %s51
    %p55 = scmp.eq.s32.totalorder %s15, 0
    %p56 = por %p54, %p55
    %p57 = scmp.ne.s32.totalorder %s49, %s51
    %p58 = scmp.eq.s32.totalorder %s20, 1
    %p59 = por %p57, %p58
    %p60 = scmp.ne.s32.totalorder %s51, %s52
    %p61 = scmp.eq.s32.totalorder %s20, 0
    %p62 = por %p60, %p61
    %p63 = scmp.ne.s32.totalorder %s51, %s52
    %p64 = scmp.eq.s32.totalorder %s21, 1
    %p65 = por %p63, %p64
    %p67 = scmp.ne.s32.totalorder %s52, %s66
    %p68 = scmp.eq.s32.totalorder %s21, 0
    %p69 = por %p67, %p68
    %s71 = sadd.s32 %s70, 1
    %p74 = scmp.eq.s32.totalorder %s15, 1
    %p75 = scmp.ne.s32.totalorder %s70, %s72
    %p76 = scmp.eq.s32.totalorder %s15, 0
    %p77 = por %p75, %p76
    %p78 = scmp.ne.s32.totalorder %s70, %s72
    %p79 = scmp.eq.s32.totalorder %s20, 1
    %p80 = por %p78, %p79
    %p81 = scmp.ne.s32.totalorder %s72, %s73
    %p82 = scmp.eq.s32.totalorder %s20, 0
    %p83 = por %p81, %p82
    %p84 = scmp.ne.s32.totalorder %s72, %s73
    %p85 = scmp.eq.s32.totalorder %s21, 1
    %p86 = por %p84, %p85
    %p88 = scmp.ne.s32.totalorder %s73, %s87
    %p89 = scmp.eq.s32.totalorder %s21, 0
    %p90 = por %p88, %p89
    %s92 = sadd.s32 %s91, 1
    %p95 = scmp.eq.s32.totalorder %s15, 1
    %p96 = scmp.ne.s32.totalorder %s91, %s93
    %p97 = scmp.eq.s32.totalorder %s15, 0
    %p98 = por %p96, %p97
    %p99 = scmp.ne.s32.totalorder %s91, %s93
    %p100 = scmp.eq.s32.totalorder %s20, 1
    %p101 = por %p99, %p100
    %p102 = scmp.ne.s32.totalorder %s93, %s94
    %p103 = scmp.eq.s32.totalorder %s20, 0
    %p104 = por %p102, %p103
    %p105 = scmp.ne.s32.totalorder %s93, %s94
    %p106 = scmp.eq.s32.totalorder %s21, 1
    %p107 = por %p105, %p106
    %p109 = scmp.ne.s32.totalorder %s94, %s108
    %p110 = scmp.eq.s32.totalorder %s21, 0
    %p111 = por %p109, %p110
    %s113 = sadd.s32 %s112, 1
    %p116 = scmp.eq.s32.totalorder %s15, 1
    %p117 = scmp.ne.s32.totalorder %s112, %s114
    %p118 = scmp.eq.s32.totalorder %s15, 0
    %p119 = por %p117, %p118
    %p120 = scmp.ne.s32.totalorder %s112, %s114
    %p121 = scmp.eq.s32.totalorder %s20, 1
    %p122 = por %p120, %p121
    %p123 = scmp.ne.s32.totalorder %s114, %s115
    %p124 = scmp.eq.s32.totalorder %s20, 0
    %p125 = por %p123, %p124
    %p126 = scmp.ne.s32.totalorder %s114, %s115
    %p127 = scmp.eq.s32.totalorder %s21, 1
    %p128 = por %p126, %p127
    %p130 = scmp.ne.s32.totalorder %s115, %s129
    %p131 = scmp.eq.s32.totalorder %s21, 0
    %p132 = por %p130, %p131
    %s134 = sadd.s32 %s133, 1
    %p137 = scmp.eq.s32.totalorder %s15, 1
    %p138 = scmp.ne.s32.totalorder %s133, %s135
    %p139 = scmp.eq.s32.totalorder %s15, 0
    %p140 = por %p138, %p139
    %p141 = scmp.ne.s32.totalorder %s133, %s135
    %p142 = scmp.eq.s32.totalorder %s20, 1
    %p143 = por %p141, %p142
    %p144 = scmp.ne.s32.totalorder %s135, %s136
    %p145 = scmp.eq.s32.totalorder %s20, 0
    %p146 = por %p144, %p145
    %p147 = scmp.ne.s32.totalorder %s135, %s136
    %p148 = scmp.eq.s32.totalorder %s21, 1
    %p149 = por %p147, %p148
    %p151 = scmp.ne.s32.totalorder %s136, %s150
    %p152 = scmp.eq.s32.totalorder %s21, 0
    %p153 = por %p151, %p152
    %s155 = sadd.s32 %s154, 1
    %p158 = scmp.eq.s32.totalorder %s15, 1
    %p159 = scmp.ne.s32.totalorder %s154, %s156
    %p160 = scmp.eq.s32.totalorder %s15, 0
    %p161 = por %p159, %p160
    %p162 = scmp.ne.s32.totalorder %s154, %s156
    %p163 = scmp.eq.s32.totalorder %s20, 1
    %p164 = por %p162, %p163
    %p165 = scmp.ne.s32.totalorder %s156, %s157
    %p166 = scmp.eq.s32.totalorder %s20, 0
    %p167 = por %p165, %p166
    %p168 = scmp.ne.s32.totalorder %s156, %s157
    %p169 = scmp.eq.s32.totalorder %s21, 1
    %p170 = por %p168, %p169
    %p172 = scmp.ne.s32.totalorder %s157, %s171
    %p173 = scmp.eq.s32.totalorder %s21, 0
    %p174 = por %p172, %p173
    %s176 = sadd.s32 %s175, 1
    %p179 = scmp.eq.s32.totalorder %s15, 1
    %p180 = scmp.ne.s32.totalorder %s175, %s177
    %p181 = scmp.eq.s32.totalorder %s15, 0
    %p182 = por %p180, %p181
    %p183 = scmp.ne.s32.totalorder %s175, %s177
    %p184 = scmp.eq.s32.totalorder %s20, 1
    %p185 = por %p183, %p184
    %p186 = scmp.ne.s32.totalorder %s177, %s178
    %p187 = scmp.eq.s32.totalorder %s20, 0
    %p188 = por %p186, %p187
    %p189 = scmp.ne.s32.totalorder %s177, %s178
    %p190 = scmp.eq.s32.totalorder %s21, 1
    %p191 = por %p189, %p190
    %p193 = scmp.ne.s32.totalorder %s178, %s192
    %p194 = scmp.eq.s32.totalorder %s21, 0
    %p195 = por %p193, %p194
    %s197 = sadd.s32 %s196, 1
    %p200 = scmp.eq.s32.totalorder %s15, 1
    %p201 = scmp.ne.s32.totalorder %s196, %s198
    %p202 = scmp.eq.s32.totalorder %s15, 0
    %p203 = por %p201, %p202
    %p204 = scmp.ne.s32.totalorder %s196, %s198
    %p205 = scmp.eq.s32.totalorder %s20, 1
    %p206 = por %p204, %p205
    %p207 = scmp.ne.s32.totalorder %s198, %s199
    %p208 = scmp.eq.s32.totalorder %s20, 0
    %p209 = por %p207, %p208
    %p210 = scmp.ne.s32.totalorder %s198, %s199
    %p211 = scmp.eq.s32.totalorder %s21, 1
    %p212 = por %p210, %p211
    %p214 = scmp.ne.s32.totalorder %s199, %s213
    %p215 = scmp.eq.s32.totalorder %s21, 0
    %p216 = por %p214, %p215
    %s217 = ssub.s32 %s15, %s22
    %p218 = scmp.eq.s32.totalorder %s217, 0
    %s220 = sadd.s32 %s219, 1
    %s221 = scalar_select %p218, %s219, %s220
    %p224 = pneg %p218
    %p225 = scmp.eq.s32.totalorder %s15, 1
    %p226 = por %p224, %p225
    %p227 = scmp.ne.s32.totalorder %s219, %s222
    %p228 = scmp.eq.s32.totalorder %s15, 0
    %p229 = por %p227, %p228
    %p230 = scmp.ne.s32.totalorder %s219, %s222
    %p231 = scmp.eq.s32.totalorder %s20, 1
    %p232 = por %p230, %p231
    %p233 = scmp.ne.s32.totalorder %s222, %s223
    %p234 = scmp.eq.s32.totalorder %s20, 0
    %p235 = por %p233, %p234
    %p236 = scmp.ne.s32.totalorder %s222, %s223
    %p237 = scmp.eq.s32.totalorder %s21, 1
    %p238 = por %p236, %p237
    %p240 = scmp.ne.s32.totalorder %s223, %s239
    %p241 = scmp.eq.s32.totalorder %s21, 0
    %p242 = por %p240, %p241
    %p243 = scmp.le.s32.totalorder 1, %s15
    %p244 = scmp.lt.s32.totalorder %s15, 3
    %p245 = pnand %p243, %p244
    %p246 = pneg %p245
    // Predicated region
    $region9: #{mamba_block_forward.4} parent=5 // pred_check
      _
    $region10: #{mamba_block_forward.4} parent=5 // pred_check_branch
      %248 = sbr.rel (%p245) target = $region12
    $region11: #{mamba_block_forward.4} parent=5 // pred_region
      %s249 = ssub.s32 %s15, 1
      // Predicated region
      $region13: #{mamba_block_forward.4} parent=11 // pred_check
        %p250 = pneg %p62
      $region14: #{mamba_block_forward.4} parent=11 // pred_check_branch
        %252 = sbr.rel (%p250) target = $region16
      $region15: #{mamba_block_forward.4} parent=11 // pred_region
        _
      $region16: #{mamba_block_forward.4} parent=11 // pred_fallthru
        _
      // Predicated region
      $region17: #{mamba_block_forward.4} parent=11 // pred_check
        %p253 = pneg %p83
      $region18: #{mamba_block_forward.4} parent=11 // pred_check_branch
        %255 = sbr.rel (%p253) target = $region20
      $region19: #{mamba_block_forward.4} parent=11 // pred_region
        _
      $region20: #{mamba_block_forward.4} parent=11 // pred_fallthru
        _
      // Predicated region
      $region21: #{mamba_block_forward.4} parent=11 // pred_check
        %p256 = pneg %p104
      $region22: #{mamba_block_forward.4} parent=11 // pred_check_branch
        %258 = sbr.rel (%p256) target = $region24
      $region23: #{mamba_block_forward.4} parent=11 // pred_region
        _
      $region24: #{mamba_block_forward.4} parent=11 // pred_fallthru
        _
      // Predicated region
      $region25: #{mamba_block_forward.4} parent=11 // pred_check
        %p259 = pneg %p125
      $region26: #{mamba_block_forward.4} parent=11 // pred_check_branch
        %261 = sbr.rel (%p259) target = $region28
      $region27: #{mamba_block_forward.4} parent=11 // pred_region
        _
      $region28: #{mamba_block_forward.4} parent=11 // pred_fallthru
        _
      // Predicated region
      $region29: #{mamba_block_forward.4} parent=11 // pred_check
        %p262 = pneg %p146
      $region30: #{mamba_block_forward.4} parent=11 // pred_check_branch
        %264 = sbr.rel (%p262) target = $region32
      $region31: #{mamba_block_forward.4} parent=11 // pred_region
        _
      $region32: #{mamba_block_forward.4} parent=11 // pred_fallthru
        _
      // Predicated region
      $region33: #{mamba_block_forward.4} parent=11 // pred_check
        %p265 = pneg %p167
      $region34: #{mamba_block_forward.4} parent=11 // pred_check_branch
        %267 = sbr.rel (%p265) target = $region36
      $region35: #{mamba_block_forward.4} parent=11 // pred_region
        _
      $region36: #{mamba_block_forward.4} parent=11 // pred_fallthru
        _
      // Predicated region
      $region37: #{mamba_block_forward.4} parent=11 // pred_check
        %p268 = pneg %p188
      $region38: #{mamba_block_forward.4} parent=11 // pred_check_branch
        %270 = sbr.rel (%p268) target = $region40
      $region39: #{mamba_block_forward.4} parent=11 // pred_region
        _
      $region40: #{mamba_block_forward.4} parent=11 // pred_fallthru
        _
      // Predicated region
      $region41: #{mamba_block_forward.4} parent=11 // pred_check
        %p271 = pneg %p209
      $region42: #{mamba_block_forward.4} parent=11 // pred_check_branch
        %273 = sbr.rel (%p271) target = $region44
      $region43: #{mamba_block_forward.4} parent=11 // pred_region
        _
      $region44: #{mamba_block_forward.4} parent=11 // pred_fallthru
        _
    $region12: #{mamba_block_forward.4} parent=5 // pred_fallthru
      _
    %p274 = scmp.lt.s32.totalorder %s15, 2
    // Predicated region
    $region45: #{mamba_block_forward.4} parent=5 // pred_check
      %p275 = pneg %p274
    $region46: #{mamba_block_forward.4} parent=5 // pred_check_branch
      %277 = sbr.rel (%p275) target = $region48
    $region47: #{mamba_block_forward.4} parent=5 // pred_region
      // Predicated region
      $region49: #{mamba_block_forward.4} parent=47 // pred_check
        %p278 = pneg %p35
      $region50: #{mamba_block_forward.4} parent=47 // pred_check_branch
        %280 = sbr.rel (%p278) target = $region52
      $region51: #{mamba_block_forward.4} parent=47 // pred_region
        %p281 = scmp.lt.s32.totalorder %s15, 1
        %s282 = scalar_select %p281, %s15, 1
        %s283 = smul.addr %s282, 4
        %s284 = smul.addr %s283, 8
        %s285 = scalar_lea.vmem %s0, %s284
      $region52: #{mamba_block_forward.4} parent=47 // pred_fallthru
        _
    $region48: #{mamba_block_forward.4} parent=5 // pred_fallthru
      _
    %p286 = scmp.le.s32.totalorder 1, %s15
    %p287 = scmp.lt.s32.totalorder %s15, 3
    %p288 = pnand %p286, %p287
    %p289 = pneg %p288
    // Predicated region
    $region53: #{mamba_block_forward.4} parent=5 // pred_check
      _
    $region54: #{mamba_block_forward.4} parent=5 // pred_check_branch
      %291 = sbr.rel (%p288) target = $region56
    $region55: #{mamba_block_forward.4} parent=5 // pred_region
      %s292 = ssub.s32 %s15, 1
      %p293 = scmp.lt.s32.totalorder %s20, 1
      %s294 = scalar_select %p293, %s20, 1
      %s295 = smul.addr %s294, 4
      %s296 = smul.addr %s295, 8
      %s297 = scalar_lea.vmem %s0, %s296
      %p298 = pneg %p41
      %p299 = pneg %p38
      %p300 = pneg %p62
      %p301 = pneg %p59
      %p302 = pneg %p83
      %p303 = pneg %p80
      %p304 = pneg %p104
      %p305 = pneg %p101
      %p306 = pneg %p125
      %p307 = pneg %p122
      %p308 = pneg %p146
      %p309 = pneg %p143
      %p310 = pneg %p167
      %p311 = pneg %p164
      %p312 = pneg %p188
      %p313 = pneg %p185
      %p314 = pneg %p209
      %p315 = pneg %p206
      %p316 = pneg %p235
      %p317 = pneg %p232
      %p318 = scmp.lt.s32.totalorder %s20, 1
      %s319 = scalar_select %p318, %s20, 1
      %s320 = smul.addr %s319, 8
      %s321 = scalar_lea.vmem %s9, %s320
      %p322 = scmp.lt.s32.totalorder %s20, 1
      %s323 = scalar_select %p322, %s20, 1
      %s324 = smul.addr %s323, 4
      %s325 = smul.addr %s324, 8
      %s326 = scalar_lea.vmem %s0, %s325
      %p327 = scmp.lt.s32.totalorder %s20, 1
      %s328 = scalar_select %p327, %s20, 1
      %s329 = smul.addr %s328, 8
      %s330 = scalar_lea.vmem %s9, %s329
      %v331 = vld [vmem:[%s326] sm:$0xff]
      %v332 = vld [vmem:[%s326 + $0x8] sm:$0xff]
      %v333 = vld [vmem:[%s326 + $0x10] sm:$0xff]
      %v334 = vld [vmem:[%s326 + $0x18] sm:$0xff]
      %v337 = vrot.slane %v331, 5
      %v338 = vrot.slane %v332, 5
      %vm341 = vcmask 1042432
      %v342 = vsel %vm341, 0.0, %v337
      %v343 = vsel %vm341, 0.0, %v338
      %v344 = vld [vmem:[%s1] ss:$4 sm:$0x3]
      %v346 = vlaneseq
      %v347 = vshrl.u32 %v346, 7
      %v348 = vsub.s32 0, %v347
      %v349 = vrot.slane %v344, %v348
      %v350 = vlaneseq
      %v351 = vshrl.u32 %v350, 7
      %v352 = vsub.s32 1, %v351
      %v353 = vrot.slane %v344, %v352
      %v356 = vmul.f32 %v342, %v349
      %v357 = vmul.f32 %v343, %v353
      %v358 = vadd.f32 %v356, 0.0
      %v359 = vadd.f32 %v357, 0.0
      %s360 = scalar_lea.vmem %s1, 1
      %v361 = vld [vmem:[%s360] ss:$4 sm:$0x3]
      %v363 = vlaneseq
      %v364 = vshrl.u32 %v363, 7
      %v365 = vsub.s32 0, %v364
      %v366 = vrot.slane %v361, %v365
      %v367 = vlaneseq
      %v368 = vshrl.u32 %v367, 7
      %v369 = vsub.s32 1, %v368
      %v370 = vrot.slane %v361, %v369
      %v373 = vmul.f32 %v342, %v366
      %v374 = vmul.f32 %v343, %v370
      %v375 = vmul.f32 %v337, %v366
      %v376 = vmul.f32 %v338, %v370
      %vm381 = vcmask 1046528
      %v382 = vrot.slane %v373, 1
      %v383 = vrot.slane %v375, 1
      %v384 = vsel %vm381, %v382, %v383
      %v385 = vrot.slane %v374, 1
      %v386 = vrot.slane %v376, 1
      %v387 = vsel %vm381, %v385, %v386
      %v390 = vadd.f32 %v358, %v384
      %v391 = vadd.f32 %v359, %v387
      %s392 = scalar_lea.vmem %s1, 2
      %v393 = vld [vmem:[%s392] ss:$4 sm:$0x3]
      %v395 = vlaneseq
      %v396 = vshrl.u32 %v395, 7
      %v397 = vsub.s32 0, %v396
      %v398 = vrot.slane %v393, %v397
      %v399 = vlaneseq
      %v400 = vshrl.u32 %v399, 7
      %v401 = vsub.s32 1, %v400
      %v402 = vrot.slane %v393, %v401
      %v405 = vmul.f32 %v342, %v398
      %v406 = vmul.f32 %v343, %v402
      %v407 = vmul.f32 %v337, %v398
      %v408 = vmul.f32 %v338, %v402
      %vm413 = vcmask 1045504
      %v414 = vrot.slane %v405, 2
      %v415 = vrot.slane %v407, 2
      %v416 = vsel %vm413, %v414, %v415
      %v417 = vrot.slane %v406, 2
      %v418 = vrot.slane %v408, 2
      %v419 = vsel %vm413, %v417, %v418
      %v422 = vadd.f32 %v390, %v416
      %v423 = vadd.f32 %v391, %v419
      %s424 = scalar_lea.vmem %s1, 3
      %v425 = vld [vmem:[%s424] ss:$4 sm:$0x3]
      %v427 = vlaneseq
      %v428 = vshrl.u32 %v427, 7
      %v429 = vsub.s32 0, %v428
      %v430 = vrot.slane %v425, %v429
      %v431 = vlaneseq
      %v432 = vshrl.u32 %v431, 7
      %v433 = vsub.s32 1, %v432
      %v434 = vrot.slane %v425, %v433
      %v437 = vmul.f32 %v342, %v430
      %v438 = vmul.f32 %v343, %v434
      %v439 = vmul.f32 %v337, %v430
      %v440 = vmul.f32 %v338, %v434
      %vm445 = vcmask 1044480
      %v446 = vrot.slane %v437, 3
      %v447 = vrot.slane %v439, 3
      %v448 = vsel %vm445, %v446, %v447
      %v449 = vrot.slane %v438, 3
      %v450 = vrot.slane %v440, 3
      %v451 = vsel %vm445, %v449, %v450
      %v454 = vadd.f32 %v422, %v448
      %v455 = vadd.f32 %v423, %v451
      %v456 = vld [vmem:[%s2] sm:$0x3]
      %v458 = vlaneseq
      %v459 = vshrl.u32 %v458, 7
      %v460 = vsub.s32 0, %v459
      %v461 = vrot.slane %v456, %v460
      %v462 = vlaneseq
      %v463 = vshrl.u32 %v462, 7
      %v464 = vsub.s32 1, %v463
      %v465 = vrot.slane %v456, %v464
      %v468 = vadd.f32 %v454, %v461
      %v469 = vadd.f32 %v455, %v465
      %v470 = vsub.f32 0.0, %v468
      %v471 = vsub.f32 0.0, %v469
      %v472 = vmul.f32 %v470, 1.442695
      %v473 = vpow.pop %v472
      %v474 = vmul.f32 %v471, 1.442695
      %v475 = vpow.pop %v474
      %v476 = vadd.f32 %v473, 1.0
      %v477 = vadd.f32 %v475, 1.0
      %v478 = vrcp.pop %v476
      %v479 = vmul.f32 1.0, %v478
      %v480 = vrcp.pop %v477
      %v481 = vmul.f32 1.0, %v480
      %v482 = vmul.f32 %v468, %v479
      %v483 = vmul.f32 %v469, %v481
      %v484 = vld [vmem:[%s3] sm:$0xff]
      %v485 = vld [vmem:[%s3 + $0x8] sm:$0xff]
      %v486 = vld [vmem:[%s3 + $0x10] sm:$0xff]
      %v487 = vld [vmem:[%s3 + $0x18] sm:$0xff]
      %v488 = vld [vmem:[%s3 + $0x20] sm:$0xff]
      %v489 = vld [vmem:[%s3 + $0x28] sm:$0xff]
      %v490 = vld [vmem:[%s3 + $0x30] sm:$0xff]
      %v491 = vld [vmem:[%s3 + $0x38] sm:$0xff]
      %v492 = vld [vmem:[%s3 + $0x40] sm:$0xff]
      %v493 = vld [vmem:[%s3 + $0x48] sm:$0xff]
      %v494 = vld [vmem:[%s3 + $0x50] sm:$0xff]
      %v495 = vld [vmem:[%s3 + $0x58] sm:$0xff]
      %v496 = vld [vmem:[%s3 + $0x60] sm:$0xff]
      %v497 = vld [vmem:[%s3 + $0x68] sm:$0xff]
      %v498 = vld [vmem:[%s3 + $0x70] sm:$0xff]
      %v499 = vld [vmem:[%s3 + $0x78] sm:$0xff]
      %v500 = vld [vmem:[%s3 + $0x80] sm:$0xff]
      %v501 = vld [vmem:[%s3 + $0x88] sm:$0xff]
      %v502 = vld [vmem:[%s3 + $0x90] sm:$0xff]
      %v503 = vld [vmem:[%s3 + $0x98] sm:$0xff]
      %v504 = vld [vmem:[%s3 + $0xa0] sm:$0xff]
      %v505 = vld [vmem:[%s3 + $0xa8] sm:$0xff]
      %v506 = vld [vmem:[%s3 + $0xb0] sm:$0xff]
      %v507 = vld [vmem:[%s3 + $0xb8] sm:$0xff]
      %v508 = vld [vmem:[%s3 + $0xc0] sm:$0xff]
      %v509 = vld [vmem:[%s3 + $0xc8] sm:$0xff]
      %v510 = vld [vmem:[%s3 + $0xd0] sm:$0xff]
      %v511 = vld [vmem:[%s3 + $0xd8] sm:$0xff]
      %v512 = vld [vmem:[%s3 + $0xe0] sm:$0xff]
      %v513 = vld [vmem:[%s3 + $0xe8] sm:$0xff]
      %v514 = vld [vmem:[%s3 + $0xf0] sm:$0xff]
      %v515 = vld [vmem:[%s3 + $0xf8] sm:$0xff]
      %516 = vmatprep.subr.mxu0 0.0
      %517 = vmatpush1.msra.mxu0 %v499
      %518 = vmatprep.subr.mxu0 0.0
      %519 = vmatpush1.msra.mxu0 %v498
      %520 = vmatprep.subr.mxu0 0.0
      %521 = vmatpush1.msra.mxu0 %v497
      %522 = vmatprep.subr.mxu0 0.0
      %523 = vmatpush1.msra.mxu0 %v496
      %524 = vmatprep.subr.mxu0 0.0
      %525 = vmatpush1.msra.mxu0 %v495
      %526 = vmatprep.subr.mxu0 0.0
      %527 = vmatpush1.msra.mxu0 %v494
      %528 = vmatprep.subr.mxu0 0.0
      %529 = vmatpush1.msra.mxu0 %v493
      %530 = vmatprep.subr.mxu0 0.0
      %531 = vmatpush1.msra.mxu0 %v492
      %532 = vmatprep.subr.mxu0 0.0
      %533 = vmatpush1.msra.mxu0 %v491
      %534 = vmatprep.subr.mxu0 0.0
      %535 = vmatpush1.msra.mxu0 %v490
      %536 = vmatprep.subr.mxu0 0.0
      %537 = vmatpush1.msra.mxu0 %v489
      %538 = vmatprep.subr.mxu0 0.0
      %539 = vmatpush1.msra.mxu0 %v488
      %540 = vmatprep.subr.mxu0 0.0
      %541 = vmatpush1.msra.mxu0 %v487
      %542 = vmatprep.subr.mxu0 0.0
      %543 = vmatpush1.msra.mxu0 %v486
      %544 = vmatprep.subr.mxu0 0.0
      %545 = vmatpush1.msra.mxu0 %v485
      %546 = vmatprep.subr.mxu0 0.0
      %547 = vmatpush1.msra.mxu0 %v484
      %548 = vmatprep.subr.mxu0 0.0
      %549 = vmatpush2.msra.mxu0 %v515
      %550 = vmatprep.subr.mxu0 0.0
      %551 = vmatpush2.msra.mxu0 %v514
      %552 = vmatprep.subr.mxu0 0.0
      %553 = vmatpush2.msra.mxu0 %v513
      %554 = vmatprep.subr.mxu0 0.0
      %555 = vmatpush2.msra.mxu0 %v512
      %556 = vmatprep.subr.mxu0 0.0
      %557 = vmatpush2.msra.mxu0 %v511
      %558 = vmatprep.subr.mxu0 0.0
      %559 = vmatpush2.msra.mxu0 %v510
      %560 = vmatprep.subr.mxu0 0.0
      %561 = vmatpush2.msra.mxu0 %v509
      %562 = vmatprep.subr.mxu0 0.0
      %563 = vmatpush2.msra.mxu0 %v508
      %564 = vmatprep.subr.mxu0 0.0
      %565 = vmatpush2.msra.mxu0 %v507
      %566 = vmatprep.subr.mxu0 0.0
      %567 = vmatpush2.msra.mxu0 %v506
      %568 = vmatprep.subr.mxu0 0.0
      %569 = vmatpush2.msra.mxu0 %v505
      %570 = vmatprep.subr.mxu0 0.0
      %571 = vmatpush2.msra.mxu0 %v504
      %572 = vmatprep.subr.mxu0 0.0
      %573 = vmatpush2.msra.mxu0 %v503
      %574 = vmatprep.subr.mxu0 0.0
      %575 = vmatpush2.msra.mxu0 %v502
      %576 = vmatprep.subr.mxu0 0.0
      %577 = vmatpush2.msra.mxu0 %v501
      %578 = vmatprep.subr.mxu0 0.0
      %579 = vmatpush2.msra.mxu0 %v500
      %580 = vmatprep.mubr.f32.mxu0 %v483
      %581 = vmatmul.mubr.f32.gmra.mxu0 %v482
      %v582 = vpop.f32.mrf.mxu0
      %v583 = vadd.f32 0.0, %v582
      %v584 = vpop.f32.mrf.mxu0
      %585 = vdwg.mxu0
      %587 = vrot.lane.b32.xlu0 %v583, 120
      %v588 = vpop.permute.xlu0 %587
      %590 = vxpose.xlu0.b32.start [1/16] %v588, 128
      %591 = vxpose.xlu0.b32.cont [2/16] 0.0, 128
      %592 = vxpose.xlu0.b32.cont [3/16] 0.0, 128
      %593 = vxpose.xlu0.b32.cont [4/16] 0.0, 128
      %594 = vxpose.xlu0.b32.cont [5/16] 0.0, 128
      %595 = vxpose.xlu0.b32.cont [6/16] 0.0, 128
      %596 = vxpose.xlu0.b32.cont [7/16] 0.0, 128
      %597 = vxpose.xlu0.b32.cont [8/16] 0.0, 128
      %598 = vxpose.xlu0.b32.cont [9/16] 0.0, 128
      %599 = vxpose.xlu0.b32.cont [10/16] 0.0, 128
      %600 = vxpose.xlu0.b32.cont [11/16] 0.0, 128
      %601 = vxpose.xlu0.b32.cont [12/16] 0.0, 128
      %602 = vxpose.xlu0.b32.cont [13/16] 0.0, 128
      %603 = vxpose.xlu0.b32.cont [14/16] 0.0, 128
      %604 = vxpose.xlu0.b32.cont [15/16] 0.0, 128
      %605 = vxpose.xlu0.b32.end [16/16] 0.0, 128
      %v606 = vpop.trf.xlu0
      %v607 = vpop.trf.xlu0
      %v608 = vpop.trf.xlu0
      %v609 = vpop.trf.xlu0
      %v610 = vpop.trf.xlu0
      %v611 = vpop.trf.xlu0
      %v612 = vpop.trf.xlu0
      %v613 = vpop.trf.xlu0
      %v614 = vpop.trf.xlu0
      %v615 = vpop.trf.xlu0
      %v616 = vpop.trf.xlu0
      %v617 = vpop.trf.xlu0
      %v618 = vpop.trf.xlu0
      %v619 = vpop.trf.xlu0
      %v620 = vpop.trf.xlu0
      %v621 = vpop.trf.xlu0
      %622 = vrot.lane.b32.xlu0 %v583, 104
      %v623 = vpop.permute.xlu0 %622
      %625 = vxpose.xlu0.b32.start [1/16] %v623, 128
      %626 = vxpose.xlu0.b32.cont [2/16] 0.0, 128
      %627 = vxpose.xlu0.b32.cont [3/16] 0.0, 128
      %628 = vxpose.xlu0.b32.cont [4/16] 0.0, 128
      %629 = vxpose.xlu0.b32.cont [5/16] 0.0, 128
      %630 = vxpose.xlu0.b32.cont [6/16] 0.0, 128
      %631 = vxpose.xlu0.b32.cont [7/16] 0.0, 128
      %632 = vxpose.xlu0.b32.cont [8/16] 0.0, 128
      %633 = vxpose.xlu0.b32.cont [9/16] 0.0, 128
      %634 = vxpose.xlu0.b32.cont [10/16] 0.0, 128
      %635 = vxpose.xlu0.b32.cont [11/16] 0.0, 128
      %636 = vxpose.xlu0.b32.cont [12/16] 0.0, 128
      %637 = vxpose.xlu0.b32.cont [13/16] 0.0, 128
      %638 = vxpose.xlu0.b32.cont [14/16] 0.0, 128
      %639 = vxpose.xlu0.b32.cont [15/16] 0.0, 128
      %640 = vxpose.xlu0.b32.end [16/16] 0.0, 128
      %v641 = vpop.trf.xlu0
      %v642 = vpop.trf.xlu0
      %v643 = vpop.trf.xlu0
      %v644 = vpop.trf.xlu0
      %v645 = vpop.trf.xlu0
      %v646 = vpop.trf.xlu0
      %v647 = vpop.trf.xlu0
      %v648 = vpop.trf.xlu0
      %v649 = vpop.trf.xlu0
      %v650 = vpop.trf.xlu0
      %v651 = vpop.trf.xlu0
      %v652 = vpop.trf.xlu0
      %v653 = vpop.trf.xlu0
      %v654 = vpop.trf.xlu0
      %v655 = vpop.trf.xlu0
      %v656 = vpop.trf.xlu0
      %v657 = vld [vmem:[%s4] sm:$0xff]
      %v658 = vld [vmem:[%s4 + $0x8] sm:$0xff]
      %v659 = vld [vmem:[%s5] sm:$0x3]
      %v661 = vlaneseq
      %v662 = vshrl.u32 %v661, 7
      %v663 = vsub.s32 0, %v662
      %v664 = vrot.slane %v659, %v663
      %v665 = vlaneseq
      %v666 = vshrl.u32 %v665, 7
      %v667 = vsub.s32 1, %v666
      %v668 = vrot.slane %v659, %v667
      %vm671 = vcmask 64512
      %v672 = vsel %vm671, %v583, 0
      %674 = vmatprep.subr.mxu0 0.0
      %675 = vmatpush1.msra.mxu0 0.0
      %676 = vmatprep.subr.mxu0 0.0
      %677 = vmatpush1.msra.mxu0 0.0
      %678 = vmatprep.subr.mxu0 0.0
      %679 = vmatpush1.msra.mxu0 0.0
      %680 = vmatprep.subr.mxu0 0.0
      %681 = vmatpush1.msra.mxu0 0.0
      %682 = vmatprep.subr.mxu0 0.0
      %683 = vmatpush1.msra.mxu0 0.0
      %684 = vmatprep.subr.mxu0 0.0
      %685 = vmatpush1.msra.mxu0 0.0
      %686 = vmatprep.subr.mxu0 0.0
      %687 = vmatpush1.msra.mxu0 0.0
      %688 = vmatprep.subr.mxu0 0.0
      %689 = vmatpush1.msra.mxu0 0.0
      %690 = vmatprep.subr.mxu0 0.0
      %691 = vmatpush1.msra.mxu0 0.0
      %692 = vmatprep.subr.mxu0 0.0
      %693 = vmatpush1.msra.mxu0 0.0
      %694 = vmatprep.subr.mxu0 0.0
      %695 = vmatpush1.msra.mxu0 0.0
      %696 = vmatprep.subr.mxu0 0.0
      %697 = vmatpush1.msra.mxu0 0.0
      %698 = vmatprep.subr.mxu0 0.0
      %699 = vmatpush1.msra.mxu0 0.0
      %700 = vmatprep.subr.mxu0 0.0
      %701 = vmatpush1.msra.mxu0 0.0
      %702 = vmatprep.subr.mxu0 0.0
      %703 = vmatpush1.msra.mxu0 0.0
      %704 = vmatprep.subr.mxu0 %v658
      %705 = vmatpush1.msra.mxu0 %v657
      %706 = vmatprep.subr.mxu0 0.0
      %707 = vmatpush2.msra.mxu0 0.0
      %708 = vmatprep.subr.mxu0 0.0
      %709 = vmatpush2.msra.mxu0 0.0
      %710 = vmatprep.subr.mxu0 0.0
      %711 = vmatpush2.msra.mxu0 0.0
      %712 = vmatprep.subr.mxu0 0.0
      %713 = vmatpush2.msra.mxu0 0.0
      %714 = vmatprep.subr.mxu0 0.0
      %715 = vmatpush2.msra.mxu0 0.0
      %716 = vmatprep.subr.mxu0 0.0
      %717 = vmatpush2.msra.mxu0 0.0
      %718 = vmatprep.subr.mxu0 0.0
      %719 = vmatpush2.msra.mxu0 0.0
      %720 = vmatprep.subr.mxu0 0.0
      %721 = vmatpush2.msra.mxu0 0.0
      %722 = vmatprep.subr.mxu0 0.0
      %723 = vmatpush2.msra.mxu0 0.0
      %724 = vmatprep.subr.mxu0 0.0
      %725 = vmatpush2.msra.mxu0 0.0
      %726 = vmatprep.subr.mxu0 0.0
      %727 = vmatpush2.msra.mxu0 0.0
      %728 = vmatprep.subr.mxu0 0.0
      %729 = vmatpush2.msra.mxu0 0.0
      %730 = vmatprep.subr.mxu0 0.0
      %731 = vmatpush2.msra.mxu0 0.0
      %732 = vmatprep.subr.mxu0 0.0
      %733 = vmatpush2.msra.mxu0 0.0
      %734 = vmatprep.subr.mxu0 0.0
      %735 = vmatpush2.msra.mxu0 0.0
      %736 = vmatprep.subr.mxu0 0.0
      %737 = vmatpush2.msra.mxu0 0.0
      %738 = vmatprep.mubr.f32.mxu0 0.0
      %739 = vmatmul.mubr.f32.gmra.mxu0 %v672
      %v740 = vpop.f32.mrf.mxu0
      %v741 = vadd.f32 %v664, %v740
      %v742 = vpop.f32.mrf.mxu0
      %v743 = vadd.f32 %v668, %v742
      %744 = vdwg.mxu0
      %vm745 = vcmp.gt.f32.partialorder %v741, 20.0
      %vm746 = vcmp.gt.f32.partialorder %v743, 20.0
      %v747 = vmin.f32 %v741, 20.0
      %v748 = vmin.f32 %v743, 20.0
      %v749 = vmul.f32 %v747, 1.442695
      %v750 = vpow.pop %v749
      %v751 = vmul.f32 %v748, 1.442695
      %v752 = vpow.pop %v751
      %v753 = vadd.f32 %v750, 1.0
      %v754 = vadd.f32 %v752, 1.0
      %v755 = vlog2.pop %v753
      %v756 = vmul.f32 %v755, 0.6931472
      %v757 = vlog2.pop %v754
      %v758 = vmul.f32 %v757, 0.6931472
      %v759 = vsel %vm745, %v741, %v756
      %v760 = vsel %vm746, %v743, %v758
      %v761 = vmul.f32 %v759, %v482
      %v762 = vmul.f32 %v760, %v483
      %v763 = vld [vmem:[%s6] sm:$0xff]
      %v764 = vld [vmem:[%s6 + $0x8] sm:$0xff]
      %v765 = vld [vmem:[%s6 + $0x10] sm:$0xff]
      %v766 = vld [vmem:[%s6 + $0x18] sm:$0xff]
      %v767 = vmul.f32 %v763, 1.442695
      %v768 = vpow.pop %v767
      %v769 = vmul.f32 %v764, 1.442695
      %v770 = vpow.pop %v769
      %v771 = vmul.f32 %v765, 1.442695
      %v772 = vpow.pop %v771
      %v773 = vmul.f32 %v766, 1.442695
      %v774 = vpow.pop %v773
      %v775 = vsub.f32 0.0, %v768
      %v776 = vsub.f32 0.0, %v770
      %v777 = vsub.f32 0.0, %v772
      %v778 = vsub.f32 0.0, %v774
      %v779 = vlaneseq
      %v780 = vshrl.u32 %v779, 7
      %v781 = vlaneseq
      %v782 = vand.u32 %v781, 127
      %vm783 = vcmp.eq.s32.totalorder %v780, 0
      %v784 = vsel %vm783, 1, 0
      %v785 = vcvt.s32.f32 %v784
      %vm786 = vcmp.eq.s32.totalorder %v782, 0
      %v787 = vsel %vm786, 1, 0
      %v788 = vcvt.s32.f32 %v787
      %v789 = vmul.f32 %v759, %v785
      %v790 = vmul.f32 %v760, %v785
      %v791 = vrot.slane %v789, 4
      %v792 = vadd.f32 %v789, %v791
      %v793 = vrot.slane %v792, 2
      %v794 = vadd.f32 %v792, %v793
      %v795 = vrot.slane %v794, 1
      %v796 = vadd.f32 %v794, %v795
      %v797 = vrot.slane %v790, 4
      %v798 = vadd.f32 %v790, %v797
      %v799 = vrot.slane %v798, 2
      %v800 = vadd.f32 %v798, %v799
      %v801 = vrot.slane %v800, 1
      %v802 = vadd.f32 %v800, %v801
      %v803 = vmul.f32 %v761, %v785
      %v804 = vmul.f32 %v762, %v785
      %v805 = vrot.slane %v803, 4
      %v806 = vadd.f32 %v803, %v805
      %v807 = vrot.slane %v806, 2
      %v808 = vadd.f32 %v806, %v807
      %v809 = vrot.slane %v808, 1
      %v810 = vadd.f32 %v808, %v809
      %v811 = vrot.slane %v804, 4
      %v812 = vadd.f32 %v804, %v811
      %v813 = vrot.slane %v812, 2
      %v814 = vadd.f32 %v812, %v813
      %v815 = vrot.slane %v814, 1
      %v816 = vadd.f32 %v814, %v815
      %v817 = vmul.f32 %v606, %v788
      %v818 = vmul.f32 %v607, %v788
      %v819 = vsel %vm671, %v817, 0.0
      %820 = vadd.xlane.f32.xlu0 %v819
      %v821 = vpop.xlane.xlu0 %820
      %v822 = vsel %vm671, %v818, 0.0
      %823 = vadd.xlane.f32.xlu0 %v822
      %v824 = vpop.xlane.xlu0 %823
      %v825 = vmul.f32 %v641, %v788
      %v826 = vmul.f32 %v642, %v788
      %v827 = vsel %vm671, %v825, 0.0
      %828 = vadd.xlane.f32.xlu0 %v827
      %v829 = vpop.xlane.xlu0 %828
      %v830 = vsel %vm671, %v826, 0.0
      %831 = vadd.xlane.f32.xlu0 %v830
      %v832 = vpop.xlane.xlu0 %831
      %v833 = vmul.f32 %v796, %v775
      %v834 = vmul.f32 %v802, %v776
      %v835 = vmul.f32 %v796, %v777
      %v836 = vmul.f32 %v802, %v778
      %v837 = vmul.f32 %v833, 1.442695
      %v838 = vpow.pop %v837
      %v839 = vmul.f32 %v834, 1.442695
      %v840 = vpow.pop %v839
      %v841 = vmul.f32 %v835, 1.442695
      %v842 = vpow.pop %v841
      %v843 = vmul.f32 %v836, 1.442695
      %v844 = vpow.pop %v843
      %v845 = vmul.f32 %v838, 0.0
      %v846 = vmul.f32 %v840, 0.0
      %v847 = vmul.f32 %v842, 0.0
      %v848 = vmul.f32 %v844, 0.0
      %v849 = vmul.f32 %v821, %v810
      %v850 = vmul.f32 %v821, %v816
      %v851 = vmul.f32 %v824, %v810
      %v852 = vmul.f32 %v824, %v816
      %v853 = vadd.f32 %v845, %v849
      %v854 = vadd.f32 %v846, %v850
      %v855 = vadd.f32 %v847, %v851
      %v856 = vadd.f32 %v848, %v852
      %v857 = vmul.f32 %v829, %v853
      %v858 = vmul.f32 %v829, %v854
      %v859 = vmul.f32 %v832, %v855
      %v860 = vmul.f32 %v832, %v856
      %v861 = vadd.f32 %v857, %v859
      %v862 = vrot.slane %v861, 4
      %v863 = vadd.f32 %v861, %v862
      %v864 = vrot.slane %v863, 2
      %v865 = vadd.f32 %v863, %v864
      %v866 = vrot.slane %v865, 1
      %v867 = vadd.f32 %v865, %v866
      %v868 = vadd.f32 %v858, %v860
      %v869 = vrot.slane %v868, 4
      %v870 = vadd.f32 %v868, %v869
      %v871 = vrot.slane %v870, 2
      %v872 = vadd.f32 %v870, %v871
      %v873 = vrot.slane %v872, 1
      %v874 = vadd.f32 %v872, %v873
      %v875 = vmul.f32 %v785, %v867
      %v876 = vmul.f32 %v785, %v874
      %v877 = vadd.f32 %v875, 0.0
      %v878 = vadd.f32 %v876, 0.0
      %vm879 = vcmp.eq.s32.totalorder %v780, 1
      %v880 = vsel %vm879, 1, 0
      %v881 = vcvt.s32.f32 %v880
      %vm882 = vcmp.eq.s32.totalorder %v782, 1
      %v883 = vsel %vm882, 1, 0
      %v884 = vcvt.s32.f32 %v883
      %v885 = vmul.f32 %v759, %v881
      %v886 = vmul.f32 %v760, %v881
      %v887 = vrot.slane %v885, 4
      %v888 = vadd.f32 %v885, %v887
      %v889 = vrot.slane %v888, 2
      %v890 = vadd.f32 %v888, %v889
      %v891 = vrot.slane %v890, 1
      %v892 = vadd.f32 %v890, %v891
      %v893 = vrot.slane %v886, 4
      %v894 = vadd.f32 %v886, %v893
      %v895 = vrot.slane %v894, 2
      %v896 = vadd.f32 %v894, %v895
      %v897 = vrot.slane %v896, 1
      %v898 = vadd.f32 %v896, %v897
      %v899 = vmul.f32 %v761, %v881
      %v900 = vmul.f32 %v762, %v881
      %v901 = vrot.slane %v899, 4
      %v902 = vadd.f32 %v899, %v901
      %v903 = vrot.slane %v902, 2
      %v904 = vadd.f32 %v902, %v903
      %v905 = vrot.slane %v904, 1
      %v906 = vadd.f32 %v904, %v905
      %v907 = vrot.slane %v900, 4
      %v908 = vadd.f32 %v900, %v907
      %v909 = vrot.slane %v908, 2
      %v910 = vadd.f32 %v908, %v909
      %v911 = vrot.slane %v910, 1
      %v912 = vadd.f32 %v910, %v911
      %v913 = vmul.f32 %v606, %v884
      %v914 = vmul.f32 %v607, %v884
      %v915 = vsel %vm671, %v913, 0.0
      %916 = vadd.xlane.f32.xlu0 %v915
      %v917 = vpop.xlane.xlu0 %916
      %v918 = vsel %vm671, %v914, 0.0
      %919 = vadd.xlane.f32.xlu0 %v918
      %v920 = vpop.xlane.xlu0 %919
      %v921 = vmul.f32 %v641, %v884
      %v922 = vmul.f32 %v642, %v884
      %v923 = vsel %vm671, %v921, 0.0
      %924 = vadd.xlane.f32.xlu0 %v923
      %v925 = vpop.xlane.xlu0 %924
      %v926 = vsel %vm671, %v922, 0.0
      %927 = vadd.xlane.f32.xlu0 %v926
      %v928 = vpop.xlane.xlu0 %927
      %v929 = vmul.f32 %v892, %v775
      %v930 = vmul.f32 %v898, %v776
      %v931 = vmul.f32 %v892, %v777
      %v932 = vmul.f32 %v898, %v778
      %v933 = vmul.f32 %v929, 1.442695
      %v934 = vpow.pop %v933
      %v935 = vmul.f32 %v930, 1.442695
      %v936 = vpow.pop %v935
      %v937 = vmul.f32 %v931, 1.442695
      %v938 = vpow.pop %v937
      %v939 = vmul.f32 %v932, 1.442695
      %v940 = vpow.pop %v939
      %v941 = vmul.f32 %v934, %v853
      %v942 = vmul.f32 %v936, %v854
      %v943 = vmul.f32 %v938, %v855
      %v944 = vmul.f32 %v940, %v856
      %v945 = vmul.f32 %v917, %v906
      %v946 = vmul.f32 %v917, %v912
      %v947 = vmul.f32 %v920, %v906
      %v948 = vmul.f32 %v920, %v912
      %v949 = vadd.f32 %v941, %v945
      %v950 = vadd.f32 %v942, %v946
      %v951 = vadd.f32 %v943, %v947
      %v952 = vadd.f32 %v944, %v948
      %v953 = vmul.f32 %v925, %v949
      %v954 = vmul.f32 %v925, %v950
      %v955 = vmul.f32 %v928, %v951
      %v956 = vmul.f32 %v928, %v952
      %v957 = vadd.f32 %v953, %v955
      %v958 = vrot.slane %v957, 4
      %v959 = vadd.f32 %v957, %v958
      %v960 = vrot.slane %v959, 2
      %v961 = vadd.f32 %v959, %v960
      %v962 = vrot.slane %v961, 1
      %v963 = vadd.f32 %v961, %v962
      %v964 = vadd.f32 %v954, %v956
      %v965 = vrot.slane %v964, 4
      %v966 = vadd.f32 %v964, %v965
      %v967 = vrot.slane %v966, 2
      %v968 = vadd.f32 %v966, %v967
      %v969 = vrot.slane %v968, 1
      %v970 = vadd.f32 %v968, %v969
      %v971 = vmul.f32 %v881, %v963
      %v972 = vmul.f32 %v881, %v970
      %v973 = vadd.f32 %v877, %v971
      %v974 = vadd.f32 %v878, %v972
      %vm975 = vcmp.eq.s32.totalorder %v780, 2
      %v976 = vsel %vm975, 1, 0
      %v977 = vcvt.s32.f32 %v976
      %vm978 = vcmp.eq.s32.totalorder %v782, 2
      %v979 = vsel %vm978, 1, 0
      %v980 = vcvt.s32.f32 %v979
      %v981 = vmul.f32 %v759, %v977
      %v982 = vmul.f32 %v760, %v977
      %v983 = vrot.slane %v981, 4
      %v984 = vadd.f32 %v981, %v983
      %v985 = vrot.slane %v984, 2
      %v986 = vadd.f32 %v984, %v985
      %v987 = vrot.slane %v986, 1
      %v988 = vadd.f32 %v986, %v987
      %v989 = vrot.slane %v982, 4
      %v990 = vadd.f32 %v982, %v989
      %v991 = vrot.slane %v990, 2
      %v992 = vadd.f32 %v990, %v991
      %v993 = vrot.slane %v992, 1
      %v994 = vadd.f32 %v992, %v993
      %v995 = vmul.f32 %v761, %v977
      %v996 = vmul.f32 %v762, %v977
      %v997 = vrot.slane %v995, 4
      %v998 = vadd.f32 %v995, %v997
      %v999 = vrot.slane %v998, 2
      %v1000 = vadd.f32 %v998, %v999
      %v1001 = vrot.slane %v1000, 1
      %v1002 = vadd.f32 %v1000, %v1001
      %v1003 = vrot.slane %v996, 4
      %v1004 = vadd.f32 %v996, %v1003
      %v1005 = vrot.slane %v1004, 2
      %v1006 = vadd.f32 %v1004, %v1005
      %v1007 = vrot.slane %v1006, 1
      %v1008 = vadd.f32 %v1006, %v1007
      %v1009 = vmul.f32 %v606, %v980
      %v1010 = vmul.f32 %v607, %v980
      %v1011 = vsel %vm671, %v1009, 0.0
      %1012 = vadd.xlane.f32.xlu0 %v1011
      %v1013 = vpop.xlane.xlu0 %1012
      %v1014 = vsel %vm671, %v1010, 0.0
      %1015 = vadd.xlane.f32.xlu0 %v1014
      %v1016 = vpop.xlane.xlu0 %1015
      %v1017 = vmul.f32 %v641, %v980
      %v1018 = vmul.f32 %v642, %v980
      %v1019 = vsel %vm671, %v1017, 0.0
      %1020 = vadd.xlane.f32.xlu0 %v1019
      %v1021 = vpop.xlane.xlu0 %1020
      %v1022 = vsel %vm671, %v1018, 0.0
      %1023 = vadd.xlane.f32.xlu0 %v1022
      %v1024 = vpop.xlane.xlu0 %1023
      %v1025 = vmul.f32 %v988, %v775
      %v1026 = vmul.f32 %v994, %v776
      %v1027 = vmul.f32 %v988, %v777
      %v1028 = vmul.f32 %v994, %v778
      %v1029 = vmul.f32 %v1025, 1.442695
      %v1030 = vpow.pop %v1029
      %v1031 = vmul.f32 %v1026, 1.442695
      %v1032 = vpow.pop %v1031
      %v1033 = vmul.f32 %v1027, 1.442695
      %v1034 = vpow.pop %v1033
      %v1035 = vmul.f32 %v1028, 1.442695
      %v1036 = vpow.pop %v1035
      %v1037 = vmul.f32 %v1030, %v949
      %v1038 = vmul.f32 %v1032, %v950
      %v1039 = vmul.f32 %v1034, %v951
      %v1040 = vmul.f32 %v1036, %v952
      %v1041 = vmul.f32 %v1013, %v1002
      %v1042 = vmul.f32 %v1013, %v1008
      %v1043 = vmul.f32 %v1016, %v1002
      %v1044 = vmul.f32 %v1016, %v1008
      %v1045 = vadd.f32 %v1037, %v1041
      %v1046 = vadd.f32 %v1038, %v1042
      %v1047 = vadd.f32 %v1039, %v1043
      %v1048 = vadd.f32 %v1040, %v1044
      %v1049 = vmul.f32 %v1021, %v1045
      %v1050 = vmul.f32 %v1021, %v1046
      %v1051 = vmul.f32 %v1024, %v1047
      %v1052 = vmul.f32 %v1024, %v1048
      %v1053 = vadd.f32 %v1049, %v1051
      %v1054 = vrot.slane %v1053, 4
      %v1055 = vadd.f32 %v1053, %v1054
      %v1056 = vrot.slane %v1055, 2
      %v1057 = vadd.f32 %v1055, %v1056
      %v1058 = vrot.slane %v1057, 1
      %v1059 = vadd.f32 %v1057, %v1058
      %v1060 = vadd.f32 %v1050, %v1052
      %v1061 = vrot.slane %v1060, 4
      %v1062 = vadd.f32 %v1060, %v1061
      %v1063 = vrot.slane %v1062, 2
      %v1064 = vadd.f32 %v1062, %v1063
      %v1065 = vrot.slane %v1064, 1
      %v1066 = vadd.f32 %v1064, %v1065
      %v1067 = vmul.f32 %v977, %v1059
      %v1068 = vmul.f32 %v977, %v1066
      %v1069 = vadd.f32 %v973, %v1067
      %v1070 = vadd.f32 %v974, %v1068
      %vm1071 = vcmp.eq.s32.totalorder %v780, 3
      %v1072 = vsel %vm1071, 1, 0
      %v1073 = vcvt.s32.f32 %v1072
      %vm1074 = vcmp.eq.s32.totalorder %v782, 3
      %v1075 = vsel %vm1074, 1, 0
      %v1076 = vcvt.s32.f32 %v1075
      %v1077 = vmul.f32 %v759, %v1073
      %v1078 = vmul.f32 %v760, %v1073
      %v1079 = vrot.slane %v1077, 4
      %v1080 = vadd.f32 %v1077, %v1079
      %v1081 = vrot.slane %v1080, 2
      %v1082 = vadd.f32 %v1080, %v1081
      %v1083 = vrot.slane %v1082, 1
      %v1084 = vadd.f32 %v1082, %v1083
      %v1085 = vrot.slane %v1078, 4
      %v1086 = vadd.f32 %v1078, %v1085
      %v1087 = vrot.slane %v1086, 2
      %v1088 = vadd.f32 %v1086, %v1087
      %v1089 = vrot.slane %v1088, 1
      %v1090 = vadd.f32 %v1088, %v1089
      %v1091 = vmul.f32 %v761, %v1073
      %v1092 = vmul.f32 %v762, %v1073
      %v1093 = vrot.slane %v1091, 4
      %v1094 = vadd.f32 %v1091, %v1093
      %v1095 = vrot.slane %v1094, 2
      %v1096 = vadd.f32 %v1094, %v1095
      %v1097 = vrot.slane %v1096, 1
      %v1098 = vadd.f32 %v1096, %v1097
      %v1099 = vrot.slane %v1092, 4
      %v1100 = vadd.f32 %v1092, %v1099
      %v1101 = vrot.slane %v1100, 2
      %v1102 = vadd.f32 %v1100, %v1101
      %v1103 = vrot.slane %v1102, 1
      %v1104 = vadd.f32 %v1102, %v1103
      %v1105 = vmul.f32 %v606, %v1076
      %v1106 = vmul.f32 %v607, %v1076
      %v1107 = vsel %vm671, %v1105, 0.0
      %1108 = vadd.xlane.f32.xlu0 %v1107
      %v1109 = vpop.xlane.xlu0 %1108
      %v1110 = vsel %vm671, %v1106, 0.0
      %1111 = vadd.xlane.f32.xlu0 %v1110
      %v1112 = vpop.xlane.xlu0 %1111
      %v1113 = vmul.f32 %v641, %v1076
      %v1114 = vmul.f32 %v642, %v1076
      %v1115 = vsel %vm671, %v1113, 0.0
      %1116 = vadd.xlane.f32.xlu0 %v1115
      %v1117 = vpop.xlane.xlu0 %1116
      %v1118 = vsel %vm671, %v1114, 0.0
      %1119 = vadd.xlane.f32.xlu0 %v1118
      %v1120 = vpop.xlane.xlu0 %1119
      %v1121 = vmul.f32 %v1084, %v775
      %v1122 = vmul.f32 %v1090, %v776
      %v1123 = vmul.f32 %v1084, %v777
      %v1124 = vmul.f32 %v1090, %v778
      %v1125 = vmul.f32 %v1121, 1.442695
      %v1126 = vpow.pop %v1125
      %v1127 = vmul.f32 %v1122, 1.442695
      %v1128 = vpow.pop %v1127
      %v1129 = vmul.f32 %v1123, 1.442695
      %v1130 = vpow.pop %v1129
      %v1131 = vmul.f32 %v1124, 1.442695
      %v1132 = vpow.pop %v1131
      %v1133 = vmul.f32 %v1126, %v1045
      %v1134 = vmul.f32 %v1128, %v1046
      %v1135 = vmul.f32 %v1130, %v1047
      %v1136 = vmul.f32 %v1132, %v1048
      %v1137 = vmul.f32 %v1109, %v1098
      %v1138 = vmul.f32 %v1109, %v1104
      %v1139 = vmul.f32 %v1112, %v1098
      %v1140 = vmul.f32 %v1112, %v1104
      %v1141 = vadd.f32 %v1133, %v1137
      %v1142 = vadd.f32 %v1134, %v1138
      %v1143 = vadd.f32 %v1135, %v1139
      %v1144 = vadd.f32 %v1136, %v1140
      %v1145 = vmul.f32 %v1117, %v1141
      %v1146 = vmul.f32 %v1117, %v1142
      %v1147 = vmul.f32 %v1120, %v1143
      %v1148 = vmul.f32 %v1120, %v1144
      %v1149 = vadd.f32 %v1145, %v1147
      %v1150 = vrot.slane %v1149, 4
      %v1151 = vadd.f32 %v1149, %v1150
      %v1152 = vrot.slane %v1151, 2
      %v1153 = vadd.f32 %v1151, %v1152
      %v1154 = vrot.slane %v1153, 1
      %v1155 = vadd.f32 %v1153, %v1154
      %v1156 = vadd.f32 %v1146, %v1148
      %v1157 = vrot.slane %v1156, 4
      %v1158 = vadd.f32 %v1156, %v1157
      %v1159 = vrot.slane %v1158, 2
      %v1160 = vadd.f32 %v1158, %v1159
      %v1161 = vrot.slane %v1160, 1
      %v1162 = vadd.f32 %v1160, %v1161
      %v1163 = vmul.f32 %v1073, %v1155
      %v1164 = vmul.f32 %v1073, %v1162
      %v1165 = vadd.f32 %v1069, %v1163
      %v1166 = vadd.f32 %v1070, %v1164
      %vm1167 = vcmp.eq.s32.totalorder %v780, 4
      %v1168 = vsel %vm1167, 1, 0
      %v1169 = vcvt.s32.f32 %v1168
      %vm1170 = vcmp.eq.s32.totalorder %v782, 4
      %v1171 = vsel %vm1170, 1, 0
      %v1172 = vcvt.s32.f32 %v1171
      %v1173 = vmul.f32 %v759, %v1169
      %v1174 = vmul.f32 %v760, %v1169
      %v1175 = vrot.slane %v1173, 4
      %v1176 = vadd.f32 %v1173, %v1175
      %v1177 = vrot.slane %v1176, 2
      %v1178 = vadd.f32 %v1176, %v1177
      %v1179 = vrot.slane %v1178, 1
      %v1180 = vadd.f32 %v1178, %v1179
      %v1181 = vrot.slane %v1174, 4
      %v1182 = vadd.f32 %v1174, %v1181
      %v1183 = vrot.slane %v1182, 2
      %v1184 = vadd.f32 %v1182, %v1183
      %v1185 = vrot.slane %v1184, 1
      %v1186 = vadd.f32 %v1184, %v1185
      %v1187 = vmul.f32 %v761, %v1169
      %v1188 = vmul.f32 %v762, %v1169
      %v1189 = vrot.slane %v1187, 4
      %v1190 = vadd.f32 %v1187, %v1189
      %v1191 = vrot.slane %v1190, 2
      %v1192 = vadd.f32 %v1190, %v1191
      %v1193 = vrot.slane %v1192, 1
      %v1194 = vadd.f32 %v1192, %v1193
      %v1195 = vrot.slane %v1188, 4
      %v1196 = vadd.f32 %v1188, %v1195
      %v1197 = vrot.slane %v1196, 2
      %v1198 = vadd.f32 %v1196, %v1197
      %v1199 = vrot.slane %v1198, 1
      %v1200 = vadd.f32 %v1198, %v1199
      %v1201 = vmul.f32 %v606, %v1172
      %v1202 = vmul.f32 %v607, %v1172
      %v1203 = vsel %vm671, %v1201, 0.0
      %1204 = vadd.xlane.f32.xlu0 %v1203
      %v1205 = vpop.xlane.xlu0 %1204
      %v1206 = vsel %vm671, %v1202, 0.0
      %1207 = vadd.xlane.f32.xlu0 %v1206
      %v1208 = vpop.xlane.xlu0 %1207
      %v1209 = vmul.f32 %v641, %v1172
      %v1210 = vmul.f32 %v642, %v1172
      %v1211 = vsel %vm671, %v1209, 0.0
      %1212 = vadd.xlane.f32.xlu0 %v1211
      %v1213 = vpop.xlane.xlu0 %1212
      %v1214 = vsel %vm671, %v1210, 0.0
      %1215 = vadd.xlane.f32.xlu0 %v1214
      %v1216 = vpop.xlane.xlu0 %1215
      %v1217 = vmul.f32 %v1180, %v775
      %v1218 = vmul.f32 %v1186, %v776
      %v1219 = vmul.f32 %v1180, %v777
      %v1220 = vmul.f32 %v1186, %v778
      %v1221 = vmul.f32 %v1217, 1.442695
      %v1222 = vpow.pop %v1221
      %v1223 = vmul.f32 %v1218, 1.442695
      %v1224 = vpow.pop %v1223
      %v1225 = vmul.f32 %v1219, 1.442695
      %v1226 = vpow.pop %v1225
      %v1227 = vmul.f32 %v1220, 1.442695
      %v1228 = vpow.pop %v1227
      %v1229 = vmul.f32 %v1222, %v1141
      %v1230 = vmul.f32 %v1224, %v1142
      %v1231 = vmul.f32 %v1226, %v1143
      %v1232 = vmul.f32 %v1228, %v1144
      %v1233 = vmul.f32 %v1205, %v1194
      %v1234 = vmul.f32 %v1205, %v1200
      %v1235 = vmul.f32 %v1208, %v1194
      %v1236 = vmul.f32 %v1208, %v1200
      %v1237 = vadd.f32 %v1229, %v1233
      %v1238 = vadd.f32 %v1230, %v1234
      %v1239 = vadd.f32 %v1231, %v1235
      %v1240 = vadd.f32 %v1232, %v1236
      %v1241 = vmul.f32 %v1213, %v1237
      %v1242 = vmul.f32 %v1213, %v1238
      %v1243 = vmul.f32 %v1216, %v1239
      %v1244 = vmul.f32 %v1216, %v1240
      %v1245 = vadd.f32 %v1241, %v1243
      %v1246 = vrot.slane %v1245, 4
      %v1247 = vadd.f32 %v1245, %v1246
      %v1248 = vrot.slane %v1247, 2
      %v1249 = vadd.f32 %v1247, %v1248
      %v1250 = vrot.slane %v1249, 1
      %v1251 = vadd.f32 %v1249, %v1250
      %v1252 = vadd.f32 %v1242, %v1244
      %v1253 = vrot.slane %v1252, 4
      %v1254 = vadd.f32 %v1252, %v1253
      %v1255 = vrot.slane %v1254, 2
      %v1256 = vadd.f32 %v1254, %v1255
      %v1257 = vrot.slane %v1256, 1
      %v1258 = vadd.f32 %v1256, %v1257
      %v1259 = vmul.f32 %v1169, %v1251
      %v1260 = vmul.f32 %v1169, %v1258
      %v1261 = vadd.f32 %v1165, %v1259
      %v1262 = vadd.f32 %v1166, %v1260
      %vm1263 = vcmp.eq.s32.totalorder %v780, 5
      %v1264 = vsel %vm1263, 1, 0
      %v1265 = vcvt.s32.f32 %v1264
      %vm1266 = vcmp.eq.s32.totalorder %v782, 5
      %v1267 = vsel %vm1266, 1, 0
      %v1268 = vcvt.s32.f32 %v1267
      %v1269 = vmul.f32 %v759, %v1265
      %v1270 = vmul.f32 %v760, %v1265
      %v1271 = vrot.slane %v1269, 4
      %v1272 = vadd.f32 %v1269, %v1271
      %v1273 = vrot.slane %v1272, 2
      %v1274 = vadd.f32 %v1272, %v1273
      %v1275 = vrot.slane %v1274, 1
      %v1276 = vadd.f32 %v1274, %v1275
      %v1277 = vrot.slane %v1270, 4
      %v1278 = vadd.f32 %v1270, %v1277
      %v1279 = vrot.slane %v1278, 2
      %v1280 = vadd.f32 %v1278, %v1279
      %v1281 = vrot.slane %v1280, 1
      %v1282 = vadd.f32 %v1280, %v1281
      %v1283 = vmul.f32 %v761, %v1265
      %v1284 = vmul.f32 %v762, %v1265
      %v1285 = vrot.slane %v1283, 4
      %v1286 = vadd.f32 %v1283, %v1285
      %v1287 = vrot.slane %v1286, 2
      %v1288 = vadd.f32 %v1286, %v1287
      %v1289 = vrot.slane %v1288, 1
      %v1290 = vadd.f32 %v1288, %v1289
      %v1291 = vrot.slane %v1284, 4
      %v1292 = vadd.f32 %v1284, %v1291
      %v1293 = vrot.slane %v1292, 2
      %v1294 = vadd.f32 %v1292, %v1293
      %v1295 = vrot.slane %v1294, 1
      %v1296 = vadd.f32 %v1294, %v1295
      %v1297 = vmul.f32 %v606, %v1268
      %v1298 = vmul.f32 %v607, %v1268
      %v1299 = vsel %vm671, %v1297, 0.0
      %1300 = vadd.xlane.f32.xlu0 %v1299
      %v1301 = vpop.xlane.xlu0 %1300
      %v1302 = vsel %vm671, %v1298, 0.0
      %1303 = vadd.xlane.f32.xlu0 %v1302
      %v1304 = vpop.xlane.xlu0 %1303
      %v1305 = vmul.f32 %v641, %v1268
      %v1306 = vmul.f32 %v642, %v1268
      %v1307 = vsel %vm671, %v1305, 0.0
      %1308 = vadd.xlane.f32.xlu0 %v1307
      %v1309 = vpop.xlane.xlu0 %1308
      %v1310 = vsel %vm671, %v1306, 0.0
      %1311 = vadd.xlane.f32.xlu0 %v1310
      %v1312 = vpop.xlane.xlu0 %1311
      %v1313 = vmul.f32 %v1276, %v775
      %v1314 = vmul.f32 %v1282, %v776
      %v1315 = vmul.f32 %v1276, %v777
      %v1316 = vmul.f32 %v1282, %v778
      %v1317 = vmul.f32 %v1313, 1.442695
      %v1318 = vpow.pop %v1317
      %v1319 = vmul.f32 %v1314, 1.442695
      %v1320 = vpow.pop %v1319
      %v1321 = vmul.f32 %v1315, 1.442695
      %v1322 = vpow.pop %v1321
      %v1323 = vmul.f32 %v1316, 1.442695
      %v1324 = vpow.pop %v1323
      %v1325 = vmul.f32 %v1318, %v1237
      %v1326 = vmul.f32 %v1320, %v1238
      %v1327 = vmul.f32 %v1322, %v1239
      %v1328 = vmul.f32 %v1324, %v1240
      %v1329 = vmul.f32 %v1301, %v1290
      %v1330 = vmul.f32 %v1301, %v1296
      %v1331 = vmul.f32 %v1304, %v1290
      %v1332 = vmul.f32 %v1304, %v1296
      %v1333 = vadd.f32 %v1325, %v1329
      %v1334 = vadd.f32 %v1326, %v1330
      %v1335 = vadd.f32 %v1327, %v1331
      %v1336 = vadd.f32 %v1328, %v1332
      %v1337 = vmul.f32 %v1309, %v1333
      %v1338 = vmul.f32 %v1309, %v1334
      %v1339 = vmul.f32 %v1312, %v1335
      %v1340 = vmul.f32 %v1312, %v1336
      %v1341 = vadd.f32 %v1337, %v1339
      %v1342 = vrot.slane %v1341, 4
      %v1343 = vadd.f32 %v1341, %v1342
      %v1344 = vrot.slane %v1343, 2
      %v1345 = vadd.f32 %v1343, %v1344
      %v1346 = vrot.slane %v1345, 1
      %v1347 = vadd.f32 %v1345, %v1346
      %v1348 = vadd.f32 %v1338, %v1340
      %v1349 = vrot.slane %v1348, 4
      %v1350 = vadd.f32 %v1348, %v1349
      %v1351 = vrot.slane %v1350, 2
      %v1352 = vadd.f32 %v1350, %v1351
      %v1353 = vrot.slane %v1352, 1
      %v1354 = vadd.f32 %v1352, %v1353
      %v1355 = vmul.f32 %v1265, %v1347
      %v1356 = vmul.f32 %v1265, %v1354
      %v1357 = vadd.f32 %v1261, %v1355
      %v1358 = vadd.f32 %v1262, %v1356
      %vm1359 = vcmp.eq.s32.totalorder %v780, 6
      %v1360 = vsel %vm1359, 1, 0
      %v1361 = vcvt.s32.f32 %v1360
      %vm1362 = vcmp.eq.s32.totalorder %v782, 6
      %v1363 = vsel %vm1362, 1, 0
      %v1364 = vcvt.s32.f32 %v1363
      %v1365 = vmul.f32 %v759, %v1361
      %v1366 = vmul.f32 %v760, %v1361
      %v1367 = vrot.slane %v1365, 4
      %v1368 = vadd.f32 %v1365, %v1367
      %v1369 = vrot.slane %v1368, 2
      %v1370 = vadd.f32 %v1368, %v1369
      %v1371 = vrot.slane %v1370, 1
      %v1372 = vadd.f32 %v1370, %v1371
      %v1373 = vrot.slane %v1366, 4
      %v1374 = vadd.f32 %v1366, %v1373
      %v1375 = vrot.slane %v1374, 2
      %v1376 = vadd.f32 %v1374, %v1375
      %v1377 = vrot.slane %v1376, 1
      %v1378 = vadd.f32 %v1376, %v1377
      %v1379 = vmul.f32 %v761, %v1361
      %v1380 = vmul.f32 %v762, %v1361
      %v1381 = vrot.slane %v1379, 4
      %v1382 = vadd.f32 %v1379, %v1381
      %v1383 = vrot.slane %v1382, 2
      %v1384 = vadd.f32 %v1382, %v1383
      %v1385 = vrot.slane %v1384, 1
      %v1386 = vadd.f32 %v1384, %v1385
      %v1387 = vrot.slane %v1380, 4
      %v1388 = vadd.f32 %v1380, %v1387
      %v1389 = vrot.slane %v1388, 2
      %v1390 = vadd.f32 %v1388, %v1389
      %v1391 = vrot.slane %v1390, 1
      %v1392 = vadd.f32 %v1390, %v1391
      %v1393 = vmul.f32 %v606, %v1364
      %v1394 = vmul.f32 %v607, %v1364
      %v1395 = vsel %vm671, %v1393, 0.0
      %1396 = vadd.xlane.f32.xlu0 %v1395
      %v1397 = vpop.xlane.xlu0 %1396
      %v1398 = vsel %vm671, %v1394, 0.0
      %1399 = vadd.xlane.f32.xlu0 %v1398
      %v1400 = vpop.xlane.xlu0 %1399
      %v1401 = vmul.f32 %v641, %v1364
      %v1402 = vmul.f32 %v642, %v1364
      %v1403 = vsel %vm671, %v1401, 0.0
      %1404 = vadd.xlane.f32.xlu0 %v1403
      %v1405 = vpop.xlane.xlu0 %1404
      %v1406 = vsel %vm671, %v1402, 0.0
      %1407 = vadd.xlane.f32.xlu0 %v1406
      %v1408 = vpop.xlane.xlu0 %1407
      %v1409 = vmul.f32 %v1372, %v775
      %v1410 = vmul.f32 %v1378, %v776
      %v1411 = vmul.f32 %v1372, %v777
      %v1412 = vmul.f32 %v1378, %v778
      %v1413 = vmul.f32 %v1409, 1.442695
      %v1414 = vpow.pop %v1413
      %v1415 = vmul.f32 %v1410, 1.442695
      %v1416 = vpow.pop %v1415
      %v1417 = vmul.f32 %v1411, 1.442695
      %v1418 = vpow.pop %v1417
      %v1419 = vmul.f32 %v1412, 1.442695
      %v1420 = vpow.pop %v1419
      %v1421 = vmul.f32 %v1414, %v1333
      %v1422 = vmul.f32 %v1416, %v1334
      %v1423 = vmul.f32 %v1418, %v1335
      %v1424 = vmul.f32 %v1420, %v1336
      %v1425 = vmul.f32 %v1397, %v1386
      %v1426 = vmul.f32 %v1397, %v1392
      %v1427 = vmul.f32 %v1400, %v1386
      %v1428 = vmul.f32 %v1400, %v1392
      %v1429 = vadd.f32 %v1421, %v1425
      %v1430 = vadd.f32 %v1422, %v1426
      %v1431 = vadd.f32 %v1423, %v1427
      %v1432 = vadd.f32 %v1424, %v1428
      %v1433 = vmul.f32 %v1405, %v1429
      %v1434 = vmul.f32 %v1405, %v1430
      %v1435 = vmul.f32 %v1408, %v1431
      %v1436 = vmul.f32 %v1408, %v1432
      %v1437 = vadd.f32 %v1433, %v1435
      %v1438 = vrot.slane %v1437, 4
      %v1439 = vadd.f32 %v1437, %v1438
      %v1440 = vrot.slane %v1439, 2
      %v1441 = vadd.f32 %v1439, %v1440
      %v1442 = vrot.slane %v1441, 1
      %v1443 = vadd.f32 %v1441, %v1442
      %v1444 = vadd.f32 %v1434, %v1436
      %v1445 = vrot.slane %v1444, 4
      %v1446 = vadd.f32 %v1444, %v1445
      %v1447 = vrot.slane %v1446, 2
      %v1448 = vadd.f32 %v1446, %v1447
      %v1449 = vrot.slane %v1448, 1
      %v1450 = vadd.f32 %v1448, %v1449
      %v1451 = vmul.f32 %v1361, %v1443
      %v1452 = vmul.f32 %v1361, %v1450
      %v1453 = vadd.f32 %v1357, %v1451
      %v1454 = vadd.f32 %v1358, %v1452
      %vm1455 = vcmp.eq.s32.totalorder %v780, 7
      %v1456 = vsel %vm1455, 1, 0
      %v1457 = vcvt.s32.f32 %v1456
      %vm1458 = vcmp.eq.s32.totalorder %v782, 7
      %v1459 = vsel %vm1458, 1, 0
      %v1460 = vcvt.s32.f32 %v1459
      %v1461 = vmul.f32 %v759, %v1457
      %v1462 = vmul.f32 %v760, %v1457
      %v1463 = vrot.slane %v1461, 4
      %v1464 = vadd.f32 %v1461, %v1463
      %v1465 = vrot.slane %v1464, 2
      %v1466 = vadd.f32 %v1464, %v1465
      %v1467 = vrot.slane %v1466, 1
      %v1468 = vadd.f32 %v1466, %v1467
      %v1469 = vrot.slane %v1462, 4
      %v1470 = vadd.f32 %v1462, %v1469
      %v1471 = vrot.slane %v1470, 2
      %v1472 = vadd.f32 %v1470, %v1471
      %v1473 = vrot.slane %v1472, 1
      %v1474 = vadd.f32 %v1472, %v1473
      %v1475 = vmul.f32 %v761, %v1457
      %v1476 = vmul.f32 %v762, %v1457
      %v1477 = vrot.slane %v1475, 4
      %v1478 = vadd.f32 %v1475, %v1477
      %v1479 = vrot.slane %v1478, 2
      %v1480 = vadd.f32 %v1478, %v1479
      %v1481 = vrot.slane %v1480, 1
      %v1482 = vadd.f32 %v1480, %v1481
      %v1483 = vrot.slane %v1476, 4
      %v1484 = vadd.f32 %v1476, %v1483
      %v1485 = vrot.slane %v1484, 2
      %v1486 = vadd.f32 %v1484, %v1485
      %v1487 = vrot.slane %v1486, 1
      %v1488 = vadd.f32 %v1486, %v1487
      %v1489 = vmul.f32 %v606, %v1460
      %v1490 = vmul.f32 %v607, %v1460
      %v1491 = vsel %vm671, %v1489, 0.0
      %1492 = vadd.xlane.f32.xlu0 %v1491
      %v1493 = vpop.xlane.xlu0 %1492
      %v1494 = vsel %vm671, %v1490, 0.0
      %1495 = vadd.xlane.f32.xlu0 %v1494
      %v1496 = vpop.xlane.xlu0 %1495
      %v1497 = vmul.f32 %v641, %v1460
      %v1498 = vmul.f32 %v642, %v1460
      %v1499 = vsel %vm671, %v1497, 0.0
      %1500 = vadd.xlane.f32.xlu0 %v1499
      %v1501 = vpop.xlane.xlu0 %1500
      %v1502 = vsel %vm671, %v1498, 0.0
      %1503 = vadd.xlane.f32.xlu0 %v1502
      %v1504 = vpop.xlane.xlu0 %1503
      %v1505 = vmul.f32 %v1468, %v775
      %v1506 = vmul.f32 %v1474, %v776
      %v1507 = vmul.f32 %v1468, %v777
      %v1508 = vmul.f32 %v1474, %v778
      %v1509 = vmul.f32 %v1505, 1.442695
      %v1510 = vpow.pop %v1509
      %v1511 = vmul.f32 %v1506, 1.442695
      %v1512 = vpow.pop %v1511
      %v1513 = vmul.f32 %v1507, 1.442695
      %v1514 = vpow.pop %v1513
      %v1515 = vmul.f32 %v1508, 1.442695
      %v1516 = vpow.pop %v1515
      %v1517 = vmul.f32 %v1510, %v1429
      %v1518 = vmul.f32 %v1512, %v1430
      %v1519 = vmul.f32 %v1514, %v1431
      %v1520 = vmul.f32 %v1516, %v1432
      %v1521 = vmul.f32 %v1493, %v1482
      %v1522 = vmul.f32 %v1493, %v1488
      %v1523 = vmul.f32 %v1496, %v1482
      %v1524 = vmul.f32 %v1496, %v1488
      %v1525 = vadd.f32 %v1517, %v1521
      %v1526 = vadd.f32 %v1518, %v1522
      %v1527 = vadd.f32 %v1519, %v1523
      %v1528 = vadd.f32 %v1520, %v1524
      %v1529 = vmul.f32 %v1501, %v1525
      %v1530 = vmul.f32 %v1501, %v1526
      %v1531 = vmul.f32 %v1504, %v1527
      %v1532 = vmul.f32 %v1504, %v1528
      %v1533 = vadd.f32 %v1529, %v1531
      %v1534 = vrot.slane %v1533, 4
      %v1535 = vadd.f32 %v1533, %v1534
      %v1536 = vrot.slane %v1535, 2
      %v1537 = vadd.f32 %v1535, %v1536
      %v1538 = vrot.slane %v1537, 1
      %v1539 = vadd.f32 %v1537, %v1538
      %v1540 = vadd.f32 %v1530, %v1532
      %v1541 = vrot.slane %v1540, 4
      %v1542 = vadd.f32 %v1540, %v1541
      %v1543 = vrot.slane %v1542, 2
      %v1544 = vadd.f32 %v1542, %v1543
      %v1545 = vrot.slane %v1544, 1
      %v1546 = vadd.f32 %v1544, %v1545
      %v1547 = vmul.f32 %v1457, %v1539
      %v1548 = vmul.f32 %v1457, %v1546
      %v1549 = vadd.f32 %v1453, %v1547
      %v1550 = vadd.f32 %v1454, %v1548
      %v1551 = vld [vmem:[%s7] sm:$0x3]
      %v1553 = vlaneseq
      %v1554 = vshrl.u32 %v1553, 7
      %v1555 = vsub.s32 0, %v1554
      %v1556 = vrot.slane %v1551, %v1555
      %v1557 = vlaneseq
      %v1558 = vshrl.u32 %v1557, 7
      %v1559 = vsub.s32 1, %v1558
      %v1560 = vrot.slane %v1551, %v1559
      %v1563 = vmul.f32 %v482, %v1556
      %v1564 = vmul.f32 %v483, %v1560
      %v1565 = vadd.f32 %v1549, %v1563
      %v1566 = vadd.f32 %v1550, %v1564
      %v1567 = vsub.f32 0.0, %v333
      %v1568 = vsub.f32 0.0, %v334
      %v1569 = vmul.f32 %v1567, 1.442695
      %v1570 = vpow.pop %v1569
      %v1571 = vmul.f32 %v1568, 1.442695
      %v1572 = vpow.pop %v1571
      %v1573 = vadd.f32 %v1570, 1.0
      %v1574 = vadd.f32 %v1572, 1.0
      %v1575 = vrcp.pop %v1573
      %v1576 = vmul.f32 1.0, %v1575
      %v1577 = vrcp.pop %v1574
      %v1578 = vmul.f32 1.0, %v1577
      %v1579 = vmul.f32 %v333, %v1576
      %v1580 = vmul.f32 %v334, %v1578
      %v1581 = vmul.f32 %v1565, %v1579
      %v1582 = vmul.f32 %v1566, %v1580
      %v1583 = vld [vmem:[%s8] sm:$0xff]
      %v1584 = vld [vmem:[%s8 + $0x8] sm:$0xff]
      %v1585 = vld [vmem:[%s8 + $0x10] sm:$0xff]
      %v1586 = vld [vmem:[%s8 + $0x18] sm:$0xff]
      %v1587 = vld [vmem:[%s8 + $0x20] sm:$0xff]
      %v1588 = vld [vmem:[%s8 + $0x28] sm:$0xff]
      %v1589 = vld [vmem:[%s8 + $0x30] sm:$0xff]
      %v1590 = vld [vmem:[%s8 + $0x38] sm:$0xff]
      %v1591 = vld [vmem:[%s8 + $0x40] sm:$0xff]
      %v1592 = vld [vmem:[%s8 + $0x48] sm:$0xff]
      %v1593 = vld [vmem:[%s8 + $0x50] sm:$0xff]
      %v1594 = vld [vmem:[%s8 + $0x58] sm:$0xff]
      %v1595 = vld [vmem:[%s8 + $0x60] sm:$0xff]
      %v1596 = vld [vmem:[%s8 + $0x68] sm:$0xff]
      %v1597 = vld [vmem:[%s8 + $0x70] sm:$0xff]
      %v1598 = vld [vmem:[%s8 + $0x78] sm:$0xff]
      %v1599 = vld [vmem:[%s8 + $0x80] sm:$0xff]
      %v1600 = vld [vmem:[%s8 + $0x88] sm:$0xff]
      %v1601 = vld [vmem:[%s8 + $0x90] sm:$0xff]
      %v1602 = vld [vmem:[%s8 + $0x98] sm:$0xff]
      %v1603 = vld [vmem:[%s8 + $0xa0] sm:$0xff]
      %v1604 = vld [vmem:[%s8 + $0xa8] sm:$0xff]
      %v1605 = vld [vmem:[%s8 + $0xb0] sm:$0xff]
      %v1606 = vld [vmem:[%s8 + $0xb8] sm:$0xff]
      %v1607 = vld [vmem:[%s8 + $0xc0] sm:$0xff]
      %v1608 = vld [vmem:[%s8 + $0xc8] sm:$0xff]
      %v1609 = vld [vmem:[%s8 + $0xd0] sm:$0xff]
      %v1610 = vld [vmem:[%s8 + $0xd8] sm:$0xff]
      %v1611 = vld [vmem:[%s8 + $0xe0] sm:$0xff]
      %v1612 = vld [vmem:[%s8 + $0xe8] sm:$0xff]
      %v1613 = vld [vmem:[%s8 + $0xf0] sm:$0xff]
      %v1614 = vld [vmem:[%s8 + $0xf8] sm:$0xff]
      %1615 = vmatprep.subr.mxu0 0.0
      %1616 = vmatpush1.msra.mxu0 %v1598
      %1617 = vmatprep.subr.mxu0 0.0
      %1618 = vmatpush1.msra.mxu0 %v1597
      %1619 = vmatprep.subr.mxu0 0.0
      %1620 = vmatpush1.msra.mxu0 %v1596
      %1621 = vmatprep.subr.mxu0 0.0
      %1622 = vmatpush1.msra.mxu0 %v1595
      %1623 = vmatprep.subr.mxu0 0.0
      %1624 = vmatpush1.msra.mxu0 %v1594
      %1625 = vmatprep.subr.mxu0 0.0
      %1626 = vmatpush1.msra.mxu0 %v1593
      %1627 = vmatprep.subr.mxu0 0.0
      %1628 = vmatpush1.msra.mxu0 %v1592
      %1629 = vmatprep.subr.mxu0 0.0
      %1630 = vmatpush1.msra.mxu0 %v1591
      %1631 = vmatprep.subr.mxu0 0.0
      %1632 = vmatpush1.msra.mxu0 %v1590
      %1633 = vmatprep.subr.mxu0 0.0
      %1634 = vmatpush1.msra.mxu0 %v1589
      %1635 = vmatprep.subr.mxu0 0.0
      %1636 = vmatpush1.msra.mxu0 %v1588
      %1637 = vmatprep.subr.mxu0 0.0
      %1638 = vmatpush1.msra.mxu0 %v1587
      %1639 = vmatprep.subr.mxu0 0.0
      %1640 = vmatpush1.msra.mxu0 %v1586
      %1641 = vmatprep.subr.mxu0 0.0
      %1642 = vmatpush1.msra.mxu0 %v1585
      %1643 = vmatprep.subr.mxu0 0.0
      %1644 = vmatpush1.msra.mxu0 %v1584
      %1645 = vmatprep.subr.mxu0 0.0
      %1646 = vmatpush1.msra.mxu0 %v1583
      %1647 = vmatprep.subr.mxu0 0.0
      %1648 = vmatpush2.msra.mxu0 %v1614
      %1649 = vmatprep.subr.mxu0 0.0
      %1650 = vmatpush2.msra.mxu0 %v1613
      %1651 = vmatprep.subr.mxu0 0.0
      %1652 = vmatpush2.msra.mxu0 %v1612
      %1653 = vmatprep.subr.mxu0 0.0
      %1654 = vmatpush2.msra.mxu0 %v1611
      %1655 = vmatprep.subr.mxu0 0.0
      %1656 = vmatpush2.msra.mxu0 %v1610
      %1657 = vmatprep.subr.mxu0 0.0
      %1658 = vmatpush2.msra.mxu0 %v1609
      %1659 = vmatprep.subr.mxu0 0.0
      %1660 = vmatpush2.msra.mxu0 %v1608
      %1661 = vmatprep.subr.mxu0 0.0
      %1662 = vmatpush2.msra.mxu0 %v1607
      %1663 = vmatprep.subr.mxu0 0.0
      %1664 = vmatpush2.msra.mxu0 %v1606
      %1665 = vmatprep.subr.mxu0 0.0
      %1666 = vmatpush2.msra.mxu0 %v1605
      %1667 = vmatprep.subr.mxu0 0.0
      %1668 = vmatpush2.msra.mxu0 %v1604
      %1669 = vmatprep.subr.mxu0 0.0
      %1670 = vmatpush2.msra.mxu0 %v1603
      %1671 = vmatprep.subr.mxu0 0.0
      %1672 = vmatpush2.msra.mxu0 %v1602
      %1673 = vmatprep.subr.mxu0 0.0
      %1674 = vmatpush2.msra.mxu0 %v1601
      %1675 = vmatprep.subr.mxu0 0.0
      %1676 = vmatpush2.msra.mxu0 %v1600
      %1677 = vmatprep.subr.mxu0 0.0
      %1678 = vmatpush2.msra.mxu0 %v1599
      %1679 = vmatprep.mubr.f32.mxu0 %v1582
      %1680 = vmatmul.mubr.f32.gmra.mxu0 %v1581
      %v1681 = vpop.f32.mrf.mxu0
      %v1682 = vadd.f32 0.0, %v1681
      %v1683 = vpop.f32.mrf.mxu0
      %1684 = vdwg.mxu0
      %1685 = vst [vmem:[%s330] sm:$0xff] %v1682
      %p1686 = scmp.lt.s32.totalorder %s20, 1
      %s1687 = scalar_select %p1686, %s20, 1
      %s1688 = smul.addr %s1687, 8
      %s1689 = scalar_lea.vmem %s9, %s1688
      // Predicated region
      $region57: #{mamba_block_forward.4} parent=55 // pred_check
        %p1690 = pneg %p232
      $region58: #{mamba_block_forward.4} parent=55 // pred_check_branch
        %1692 = sbr.rel (%p1690) target = $region60
      $region59: #{mamba_block_forward.4} parent=55 // pred_region
        _
      $region60: #{mamba_block_forward.4} parent=55 // pred_fallthru
        _
    $region56: #{mamba_block_forward.4} parent=5 // pred_fallthru
      _
    %p1693 = scmp.le.s32.totalorder 2, %s15
    // Predicated region
    $region61: #{mamba_block_forward.4} parent=5 // pred_check
      %p1694 = pneg %p1693
    $region62: #{mamba_block_forward.4} parent=5 // pred_check_branch
      %1696 = sbr.rel (%p1694) target = $region64
    $region63: #{mamba_block_forward.4} parent=5 // pred_region
      %s1697 = ssub.s32 %s15, 2
      // Predicated region
      $region65: #{mamba_block_forward.4} parent=63 // pred_check
        %p1698 = pneg %p238
      $region66: #{mamba_block_forward.4} parent=63 // pred_check_branch
        %1700 = sbr.rel (%p1698) target = $region68
      $region67: #{mamba_block_forward.4} parent=63 // pred_region
        %p1701 = scmp.lt.s32.totalorder %s21, 1
        %s1702 = scalar_select %p1701, %s21, 1
        %s1703 = smul.addr %s1702, 8
        %s1704 = scalar_lea.vmem %s9, %s1703
      $region68: #{mamba_block_forward.4} parent=63 // pred_fallthru
        _
    $region64: #{mamba_block_forward.4} parent=5 // pred_fallthru
      _
  $region6: #{mamba_block_forward.4} parent=0 // loop_footer
    %s19 = sadd.s32 1, %s15
  $region7: #{mamba_block_forward.4} parent=0 // loop_footer_branch
    %14 = sbr.rel target = $region3
  $region8: #{mamba_block_forward.4} parent=0 // loop_exit
    _

</llo_original>
